<compile_context>
chip_gen: v5e
topology: v5e:2x2
jax: 0.10.0
libtpu: 0.0.40
codegen_flags: <defaults>
</compile_context>

<pallas_src>
import functools

import jax
import jax.numpy as jnp
import numpy as np
from jax import lax
from jax.experimental import pallas as pl
from jax.experimental.pallas import tpu as pltpu

KSIZE = 5
PAD = KSIZE // 2           # per-stage conv halo
NSTAGES = 5
HALO = 16                  # fused halo, rounded up from NSTAGES*PAD=10 to 8-multiple
LPAD = 8                   # aligned left pad of the zero-halo conv-input scratch
BN_EPS = 1e-5
LANE = 128


def _round_up(x, m):
    return (x + m - 1) // m * m


# ----------------------------- fused kernel ----------------------------------
def _postnet_kernel(stage_cfg, t_real, t_tile, c_pad,
                    len_ref,        # scalar prefetch (SMEM): (N,) int32 lengths
                    x_hbm,          # ANY/HBM: (N, Tp + 2*HALO, c_pad) bf16
                    w_ref,          # (NS, K, c_pad, c_pad) bf16 (resident)
                    b_ref,          # (NS, 1, c_pad) f32
                    scale_ref,      # (NS, 1, c_pad) f32  (folded BN scale)
                    shift_ref,      # (NS, 1, c_pad) f32  (folded BN shift)
                    o_ref,          # (1, t_tile, c_pad) output block
                    slab_ref,       # VMEM (S, c_pad) bf16    -- DMA landing buffer
                    zpad_ref,       # VMEM (S+2*LPAD, c_pad) bf16 -- zero-halo conv in
                    x_ref,          # VMEM (S, c_pad) f32     -- stage input / residual
                    dma_sem):       # DMA semaphore (1,)
    n = pl.program_id(0)
    t = pl.program_id(1)
    s_rows = t_tile + 2 * HALO

    # Fetch the overlapping slab [t*tT, t*tT + S) of the pre-padded input.
    row0 = pl.multiple_of(t * t_tile, 8)
    cp = pltpu.make_async_copy(x_hbm.at[n, pl.ds(row0, s_rows), :],
                               slab_ref, dma_sem.at[0])
    cp.start()

    # Masks built in-kernel from the SMEM length scalar (no mask DMA).
    abs_row = (t * t_tile - HALO) + lax.broadcasted_iota(jnp.int32, (s_rows, 1), 0)
    in_seq = (abs_row >= 0) & (abs_row < t_real)                  # real sequence rows
    keep = (in_seq & (abs_row < len_ref[n])).astype(jnp.float32)  # == spec_mask
    in_seq_f = in_seq.astype(jnp.float32)

    # Zero the (8-row aligned) halo regions of the persistent scratch once/tile.
    zpad_ref[0:LPAD, :] = jnp.zeros((LPAD, c_pad), zpad_ref.dtype)
    zpad_ref[LPAD + s_rows:LPAD + s_rows + LPAD, :] = jnp.zeros(
        (LPAD, c_pad), zpad_ref.dtype)

    cp.wait()
    # x0 = spec * spec_mask  (f32 working copy for BN/tanh + residual path)
    x_ref[...] = slab_ref[...].astype(jnp.float32) * keep

    for s, (apply_bn, residual) in enumerate(stage_cfg):
        xv = x_ref[...]                                          # (S, c_pad) f32
        if apply_bn:
            z = jnp.tanh(xv * scale_ref[s] + shift_ref[s])       # eval-mode BN + Tanh
        else:
            z = xv
        # Rows outside [0, T) act as Conv1d zero padding; write bf16 conv input
        # into the zero-halo scratch at an aligned offset (no per-stage pad copy).
        zpad_ref[LPAD:LPAD + s_rows, :] = (z * in_seq_f).astype(zpad_ref.dtype)

        # 5 tap matmuls, bf16 x bf16 -> f32 accumulate, back to back.
        acc = jnp.dot(zpad_ref[LPAD - PAD:LPAD - PAD + s_rows, :], w_ref[s, 0],
                      preferred_element_type=jnp.float32)
        for k in range(1, KSIZE):
            off = LPAD - PAD + k
            acc += jnp.dot(zpad_ref[off:off + s_rows, :], w_ref[s, k],
                           preferred_element_type=jnp.float32)

        y = acc + b_ref[s]
        if residual:
            y = y + xv                                           # residual on raw input
        x_ref[...] = y * keep                                    # x = y * spec_mask

    # Only the center rows are exact after 5 stages of halo shrinkage.
    o_ref[0] = x_ref[HALO:HALO + t_tile, :].astype(o_ref.dtype)


# ------------------------------- wrapper --------------------------------------
def conv_post_processor(spec, lengths, packed, *, t_tile=None):
    """spec: (N, T, dec_out) float; lengths: (N,) int; -> (N, T, post_out)."""
    N, T, dec_out = spec.shape
    c_pad = packed["c_pad"]
    post_out = packed["post_out"]
    stage_cfg = packed["stage_cfg"]

    if t_tile is None:
        t_tile = min(512, _round_up(T, 8))      # sublane-multiple T tile
    t_tile = _round_up(t_tile, 8)
    n_t = pl.cdiv(T, t_tile)
    t_pad = n_t * t_tile
    s_rows = t_tile + 2 * HALO

    # Channels-last, channel-padded to a lane multiple, time-padded by the fused
    # halo on both sides; bf16 in HBM halves the input DMA.
    x = jnp.zeros((N, t_pad + 2 * HALO, c_pad), jnp.bfloat16)
    x = x.at[:, HALO:HALO + T, :dec_out].set(spec.astype(jnp.bfloat16))

    kernel = functools.partial(_postnet_kernel, stage_cfg, T, t_tile, c_pad)

    # VMEM budget: double-buffered params + output block + scratch (+ headroom).
    out_bytes = np.dtype(spec.dtype).itemsize
    vmem_est = (2 * (packed["w"].size * 2 + 3 * NSTAGES * c_pad * 4)   # params
                + 2 * t_tile * c_pad * out_bytes                       # out block
                + s_rows * c_pad * 2                                   # DMA slab
                + (s_rows + 2 * LPAD) * c_pad * 2                      # zero-halo z
                + s_rows * c_pad * 4)                                  # stage input
    vmem_limit = int(min(64 << 20, max(32 << 20, vmem_est * 1.25 + (8 << 20))))

    out = pl.pallas_call(
        kernel,
        out_shape=jax.ShapeDtypeStruct((N, t_pad, c_pad), spec.dtype),
        grid_spec=pltpu.PrefetchScalarGridSpec(
            num_scalar_prefetch=1,                       # lengths -> SMEM
            grid=(N, n_t),
            in_specs=[
                pl.BlockSpec(memory_space=pl.ANY),       # x stays in HBM (manual DMA)
                pl.BlockSpec((NSTAGES, KSIZE, c_pad, c_pad),
                             lambda n, t, lens: (0, 0, 0, 0)),
                pl.BlockSpec((NSTAGES, 1, c_pad), lambda n, t, lens: (0, 0, 0)),
                pl.BlockSpec((NSTAGES, 1, c_pad), lambda n, t, lens: (0, 0, 0)),
                pl.BlockSpec((NSTAGES, 1, c_pad), lambda n, t, lens: (0, 0, 0)),
            ],
            out_specs=pl.BlockSpec((1, t_tile, c_pad),
                                   lambda n, t, lens: (n, t, 0)),
            scratch_shapes=[
                pltpu.VMEM((s_rows, c_pad), jnp.bfloat16),             # DMA slab
                pltpu.VMEM((s_rows + 2 * LPAD, c_pad), jnp.bfloat16),  # zero-halo z
                pltpu.VMEM((s_rows, c_pad), jnp.float32),              # stage input
                pltpu.SemaphoreType.DMA((1,)),
            ]),
        compiler_params=pltpu.CompilerParams(
            dimension_semantics=("parallel", "parallel"),
            vmem_limit_bytes=vmem_limit),
    )(jnp.asarray(lengths, jnp.int32), x, packed["w"], packed["b"],
      packed["scale"], packed["shift"])

    return out[:, :T, :post_out]


# ------------------------- parameter construction -----------------------------
def make_params(key, hidden_size, dec_out_size, post_out_size):
    """Deterministic synthetic eval-mode parameters with the module's shapes."""
    dims = [(dec_out_size, hidden_size, False),
            (hidden_size, hidden_size, True),
            (hidden_size, hidden_size, True),
            (hidden_size, hidden_size, True),
            (hidden_size, post_out_size, True)]
    stages = []
    for (c_in, c_out, has_bn) in dims:
        key, kw, kb, kg, kbe, km, kv = jax.random.split(key, 7)
        # torch Conv1d weight is (C_out, C_in, K); transpose to (K, C_in, C_out)
        w_torch = 0.1 * jax.random.normal(kw, (c_out, c_in, KSIZE), jnp.float32)
        w = jnp.transpose(w_torch, (2, 1, 0))
        b = 0.05 * jax.random.normal(kb, (c_out,), jnp.float32)
        if has_bn:
            gamma = 1.0 + 0.1 * jax.random.normal(kg, (c_in,), jnp.float32)
            beta = 0.1 * jax.random.normal(kbe, (c_in,), jnp.float32)
            mean = 0.1 * jax.random.normal(km, (c_in,), jnp.float32)
            var = 1.0 + 0.1 * jax.random.uniform(kv, (c_in,), jnp.float32)
            scale = gamma / jnp.sqrt(var + BN_EPS)
            shift = beta - mean * scale
        else:
            scale = jnp.ones((c_in,), jnp.float32)
            shift = jnp.zeros((c_in,), jnp.float32)
        stages.append(dict(w=w, b=b, scale=scale, shift=shift,
                           apply_bn=has_bn, residual=(c_in == c_out)))
    return stages


def pack_params(stages, post_out_size):
    """Zero-pad channels to a lane multiple and stack stages for the fused kernel."""
    c_max = max(max(st["w"].shape[1], st["w"].shape[2]) for st in stages)
    c_pad = _round_up(c_max, LANE)
    w_all = np.zeros((NSTAGES, KSIZE, c_pad, c_pad), np.float32)
    b_all = np.zeros((NSTAGES, 1, c_pad), np.float32)
    scale_all = np.ones((NSTAGES, 1, c_pad), np.float32)
    shift_all = np.zeros((NSTAGES, 1, c_pad), np.float32)
    cfg = []
    for s, st in enumerate(stages):
        _, c_in, c_out = st["w"].shape
        w_all[s, :, :c_in, :c_out] = np.asarray(st["w"])
        b_all[s, 0, :c_out] = np.asarray(st["b"])
        scale_all[s, 0, :c_in] = np.asarray(st["scale"])
        shift_all[s, 0, :c_in] = np.asarray(st["shift"])
        cfg.append((bool(st["apply_bn"]), bool(st["residual"])))
    return dict(w=jnp.asarray(w_all, jnp.bfloat16),
                b=jnp.asarray(b_all, jnp.float32),
                scale=jnp.asarray(scale_all, jnp.float32),
                shift=jnp.asarray(shift_all, jnp.float32),
                c_pad=c_pad, post_out=post_out_size, stage_cfg=tuple(cfg))


# --------------------------- pure-JAX reference --------------------------------
def ref_post_processor(spec, lengths, stages):
    """Reference with the same bf16 matmul-input rounding policy as the kernel
    (accumulation, bias, BN/tanh, residual and masking in f32)."""
    _, T, _ = spec.shape
    mask = (jnp.arange(T)[None, :] < lengths[:, None]).astype(jnp.float32)[:, :, None]
    x = spec.astype(jnp.bfloat16).astype(jnp.float32) * mask
    for st in stages:
        if st["apply_bn"]:
            z = jnp.tanh(x * st["scale"][None, None, :] + st["shift"][None, None, :])
        else:
            z = x
        zq = z.astype(jnp.bfloat16).astype(jnp.float32)
        wq = st["w"].astype(jnp.bfloat16).astype(jnp.float32)
        zp = jnp.pad(zq, ((0, 0), (PAD, PAD), (0, 0)))
        y = sum(jnp.einsum("ntc,cd->ntd", zp[:, k:k + T], wq[k])
                for k in range(KSIZE)) + st["b"][None, None, :]
        if st["residual"]:
            y = y + x
        x = y * mask
    return x


if __name__ == "__main__":
    # Toy shapes (production is T~600-1200, hidden=dec_out=512, post_out=80).
    N, T = 2, 16
    dec_out_size, hidden_size, post_out_size = 16, 32, 24

    key = jax.random.PRNGKey(0)
    k_spec, k_par = jax.random.split(key)

    spec = jax.random.normal(k_spec, (N, T, dec_out_size), jnp.float32)
    lengths = jnp.array([16, 12], jnp.int32)

    stages = make_params(k_par, hidden_size, dec_out_size, post_out_size)
    packed = pack_params(stages, post_out_size)

    ref = jax.block_until_ready(ref_post_processor(spec, lengths, stages))

    # t_tile=8 exercises the multi-tile halo path; t_tile=16 the single-tile path.
    for tt in (8, 16):
        out = conv_post_processor(spec, lengths, packed, t_tile=tt)
        out = jax.block_until_ready(out)
        assert out.shape == (N, T, post_out_size)
        np.testing.assert_allclose(np.asarray(out), np.asarray(ref),
                                   rtol=5e-3, atol=5e-3)

    print("KERNEL_OK")
</pallas_src>

<mosaic_0001>
module attributes {stable_mosaic.version = 11 : i64} {
  func.func @_postnet_kernel(%arg0: i32, %arg1: i32, %arg2: memref<2xi32, #tpu.memory_space<smem>>, %arg3: memref<2x48x128xbf16, #tpu.memory_space<any>>, %arg4: memref<5x5x128x128xbf16, #tpu.memory_space<vmem>>, %arg5: memref<5x1x128xf32, #tpu.memory_space<vmem>>, %arg6: memref<5x1x128xf32, #tpu.memory_space<vmem>>, %arg7: memref<5x1x128xf32, #tpu.memory_space<vmem>>, %arg8: memref<1x8x128xf32, #tpu.memory_space<vmem>>, %arg9: memref<40x128xbf16, #tpu.memory_space<vmem>>, %arg10: memref<56x128xbf16, #tpu.memory_space<vmem>>, %arg11: memref<40x128xf32, #tpu.memory_space<vmem>>, %arg12: memref<1x!tpu.dma_semaphore, #tpu.memory_space<semaphore_mem>>) attributes {dimension_semantics = [#tpu.dimension_semantics<parallel>, #tpu.dimension_semantics<parallel>], iteration_bounds = array<i64: 2, 2>, scalar_prefetch = 1 : i64, scratch_operands = 4 : i64, tpu.core_type = #tpu.core_type<tc>, window_params = [{}, {pipeline_mode = #tpu.pipeline_mode<synchronous>, transform_indices = @transform_1, window_bounds = array<i64: 5, 5, 128, 128>}, {pipeline_mode = #tpu.pipeline_mode<synchronous>, transform_indices = @transform_2, window_bounds = array<i64: 5, 1, 128>}, {pipeline_mode = #tpu.pipeline_mode<synchronous>, transform_indices = @transform_3, window_bounds = array<i64: 5, 1, 128>}, {pipeline_mode = #tpu.pipeline_mode<synchronous>, transform_indices = @transform_4, window_bounds = array<i64: 5, 1, 128>}, {transform_indices = @transform_5, window_bounds = array<i64: 1, 8, 128>}]} {
    %c8_i32 = arith.constant 8 : i32
    %0 = arith.muli %arg1, %c8_i32 : i32
    %1 = tpu.assume_multiple %0, 8 : i32
    %c0_i32 = arith.constant 0 : i32
    %c0_i32_0 = arith.constant 0 : i32
    %2 = tpu.memref_slice %arg3[%arg0, %1, %c0_i32_0] : memref<2x48x128xbf16, #tpu.memory_space<any>> -> memref<1x40x128xbf16, #tpu.memory_space<any>>
    %3 = tpu.memref_squeeze %2 : memref<1x40x128xbf16, #tpu.memory_space<any>> -> memref<40x128xbf16, #tpu.memory_space<any>>
    %4 = tpu.memref_slice %arg12[%c0_i32] : memref<1x!tpu.dma_semaphore, #tpu.memory_space<semaphore_mem>> -> memref<1x!tpu.dma_semaphore, #tpu.memory_space<semaphore_mem>>
    %5 = tpu.memref_squeeze %4 : memref<1x!tpu.dma_semaphore, #tpu.memory_space<semaphore_mem>> -> memref<!tpu.dma_semaphore, #tpu.memory_space<semaphore_mem>>
    tpu.enqueue_dma source(%3 : memref<40x128xbf16, #tpu.memory_space<any>>) target(%arg9 : memref<40x128xbf16, #tpu.memory_space<vmem>>) target_semaphore(%5 : memref<!tpu.dma_semaphore, #tpu.memory_space<semaphore_mem>>)
    %c8_i32_1 = arith.constant 8 : i32
    %6 = arith.muli %arg1, %c8_i32_1 : i32
    %c16_i32 = arith.constant 16 : i32
    %7 = arith.subi %6, %c16_i32 : i32
    %8 = tpu.iota {dimensions = array<i32: 0>} : vector<40x1xi32>
    %9 = vector.broadcast %7 : i32 to vector<40x1xi32>
    %10 = arith.addi %9, %8 : vector<40x1xi32>
    %c0_i32_2 = arith.constant 0 : i32
    %11 = vector.broadcast %c0_i32_2 : i32 to vector<40x1xi32>
    %12 = arith.cmpi sge, %10, %11 : vector<40x1xi32>
    %c16_i32_3 = arith.constant 16 : i32
    %13 = vector.broadcast %c16_i32_3 : i32 to vector<40x1xi32>
    %14 = arith.cmpi slt, %10, %13 : vector<40x1xi32>
    %15 = arith.andi %12, %14 : vector<40x1xi1>
    %16 = arith.index_cast %arg0 : i32 to index
    %17 = memref.load %arg2[%16] : memref<2xi32, #tpu.memory_space<smem>>
    %18 = vector.broadcast %17 : i32 to vector<40x1xi32>
    %19 = arith.cmpi slt, %10, %18 : vector<40x1xi32>
    %20 = arith.andi %15, %19 : vector<40x1xi1>
    %21 = arith.extui %20 : vector<40x1xi1> to vector<40x1xi32>
    %22 = arith.sitofp %21 : vector<40x1xi32> to vector<40x1xf32>
    %23 = arith.extui %15 : vector<40x1xi1> to vector<40x1xi32>
    %24 = arith.sitofp %23 : vector<40x1xi32> to vector<40x1xf32>
    %cst = arith.constant 0.000000e+00 : bf16
    %25 = vector.broadcast %cst : bf16 to vector<8x128xbf16>
    %c0 = arith.constant 0 : index
    %c0_4 = arith.constant 0 : index
    %26 = vector.load %arg10[%c0, %c0_4] : memref<56x128xbf16, #tpu.memory_space<vmem>>, vector<8x128xbf16>
    tpu.vector_store %arg10[%c0, %c0_4], %25 {strides = array<i32>} : memref<56x128xbf16, #tpu.memory_space<vmem>>, vector<8x128xbf16>,
    %cst_5 = arith.constant 0.000000e+00 : bf16
    %27 = vector.broadcast %cst_5 : bf16 to vector<8x128xbf16>
    %c48 = arith.constant 48 : index
    %c0_6 = arith.constant 0 : index
    %28 = vector.load %arg10[%c48, %c0_6] : memref<56x128xbf16, #tpu.memory_space<vmem>>, vector<8x128xbf16>
    tpu.vector_store %arg10[%c48, %c0_6], %27 {strides = array<i32>} : memref<56x128xbf16, #tpu.memory_space<vmem>>, vector<8x128xbf16>,
    %c0_i32_7 = arith.constant 0 : i32
    %c0_i32_8 = arith.constant 0 : i32
    %29 = tpu.memref_slice %arg3[%arg0, %1, %c0_i32_8] : memref<2x48x128xbf16, #tpu.memory_space<any>> -> memref<1x40x128xbf16, #tpu.memory_space<any>>
    %30 = tpu.memref_squeeze %29 : memref<1x40x128xbf16, #tpu.memory_space<any>> -> memref<40x128xbf16, #tpu.memory_space<any>>
    %31 = tpu.memref_slice %arg12[%c0_i32_7] : memref<1x!tpu.dma_semaphore, #tpu.memory_space<semaphore_mem>> -> memref<1x!tpu.dma_semaphore, #tpu.memory_space<semaphore_mem>>
    %32 = tpu.memref_squeeze %31 : memref<1x!tpu.dma_semaphore, #tpu.memory_space<semaphore_mem>> -> memref<!tpu.dma_semaphore, #tpu.memory_space<semaphore_mem>>
    tpu.wait_dma2 semaphore(%32 : memref<!tpu.dma_semaphore, #tpu.memory_space<semaphore_mem>>) src(%30 : memref<40x128xbf16, #tpu.memory_space<any>>) dst(%arg9 : memref<40x128xbf16, #tpu.memory_space<vmem>>)
    %c0_9 = arith.constant 0 : index
    %c0_10 = arith.constant 0 : index
    %33 = vector.load %arg9[%c0_9, %c0_10] : memref<40x128xbf16, #tpu.memory_space<vmem>>, vector<40x128xbf16>
    %34 = arith.extf %33 : vector<40x128xbf16> to vector<40x128xf32>
    %35 = vector.broadcast %22 : vector<40x1xf32> to vector<40x128xf32>
    %36 = arith.mulf %34, %35 : vector<40x128xf32>
    %c0_11 = arith.constant 0 : index
    %c0_12 = arith.constant 0 : index
    %37 = vector.load %arg11[%c0_11, %c0_12] : memref<40x128xf32, #tpu.memory_space<vmem>>, vector<40x128xf32>
    tpu.vector_store %arg11[%c0_11, %c0_12], %36 {strides = array<i32>} : memref<40x128xf32, #tpu.memory_space<vmem>>, vector<40x128xf32>,
    %c0_13 = arith.constant 0 : index
    %c0_14 = arith.constant 0 : index
    %38 = vector.load %arg11[%c0_13, %c0_14] : memref<40x128xf32, #tpu.memory_space<vmem>>, vector<40x128xf32>
    %39 = vector.broadcast %24 : vector<40x1xf32> to vector<40x128xf32>
    %40 = arith.mulf %38, %39 : vector<40x128xf32>
    %41 = arith.truncf %40 : vector<40x128xf32> to vector<40x128xbf16>
    %c8 = arith.constant 8 : index
    %c0_15 = arith.constant 0 : index
    %42 = vector.load %arg10[%c8, %c0_15] : memref<56x128xbf16, #tpu.memory_space<vmem>>, vector<40x128xbf16>
    tpu.vector_store %arg10[%c8, %c0_15], %41 {strides = array<i32>} : memref<56x128xbf16, #tpu.memory_space<vmem>>, vector<40x128xbf16>,
    %c6 = arith.constant 6 : index
    %c0_16 = arith.constant 0 : index
    %43 = vector.load %arg10[%c6, %c0_16] : memref<56x128xbf16, #tpu.memory_space<vmem>>, vector<40x128xbf16>
    %c0_17 = arith.constant 0 : index
    %c0_18 = arith.constant 0 : index
    %c0_19 = arith.constant 0 : index
    %c0_20 = arith.constant 0 : index
    %44 = vector.load %arg4[%c0_17, %c0_18, %c0_19, %c0_20] : memref<5x5x128x128xbf16, #tpu.memory_space<vmem>>, vector<1x1x128x128xbf16>
    %45 = vector.shape_cast %44 : vector<1x1x128x128xbf16> to vector<128x128xbf16>
    %cst_21 = arith.constant dense<0.000000e+00> : vector<40x128xf32>
    %46 = tpu.matmul %43, %45, %cst_21 {dimension_numbers = #tpu.dot_dimension_numbers<[1], [0], [0], [1], [0, 0, 1, 1], [], []>} : vector<40x128xbf16>, vector<128x128xbf16>, vector<40x128xf32> -> vector<40x128xf32>
    %c7 = arith.constant 7 : index
    %c0_22 = arith.constant 0 : index
    %47 = vector.load %arg10[%c7, %c0_22] : memref<56x128xbf16, #tpu.memory_space<vmem>>, vector<40x128xbf16>
    %c0_23 = arith.constant 0 : index
    %c1 = arith.constant 1 : index
    %c0_24 = arith.constant 0 : index
    %c0_25 = arith.constant 0 : index
    %48 = vector.load %arg4[%c0_23, %c1, %c0_24, %c0_25] : memref<5x5x128x128xbf16, #tpu.memory_space<vmem>>, vector<1x1x128x128xbf16>
    %49 = vector.shape_cast %48 : vector<1x1x128x128xbf16> to vector<128x128xbf16>
    %cst_26 = arith.constant dense<0.000000e+00> : vector<40x128xf32>
    %50 = tpu.matmul %47, %49, %cst_26 {dimension_numbers = #tpu.dot_dimension_numbers<[1], [0], [0], [1], [0, 0, 1, 1], [], []>} : vector<40x128xbf16>, vector<128x128xbf16>, vector<40x128xf32> -> vector<40x128xf32>
    %51 = arith.addf %46, %50 : vector<40x128xf32>
    %c8_27 = arith.constant 8 : index
    %c0_28 = arith.constant 0 : index
    %52 = vector.load %arg10[%c8_27, %c0_28] : memref<56x128xbf16, #tpu.memory_space<vmem>>, vector<40x128xbf16>
    %c0_29 = arith.constant 0 : index
    %c2 = arith.constant 2 : index
    %c0_30 = arith.constant 0 : index
    %c0_31 = arith.constant 0 : index
    %53 = vector.load %arg4[%c0_29, %c2, %c0_30, %c0_31] : memref<5x5x128x128xbf16, #tpu.memory_space<vmem>>, vector<1x1x128x128xbf16>
    %54 = vector.shape_cast %53 : vector<1x1x128x128xbf16> to vector<128x128xbf16>
    %cst_32 = arith.constant dense<0.000000e+00> : vector<40x128xf32>
    %55 = tpu.matmul %52, %54, %cst_32 {dimension_numbers = #tpu.dot_dimension_numbers<[1], [0], [0], [1], [0, 0, 1, 1], [], []>} : vector<40x128xbf16>, vector<128x128xbf16>, vector<40x128xf32> -> vector<40x128xf32>
    %56 = arith.addf %51, %55 : vector<40x128xf32>
    %c9 = arith.constant 9 : index
    %c0_33 = arith.constant 0 : index
    %57 = vector.load %arg10[%c9, %c0_33] : memref<56x128xbf16, #tpu.memory_space<vmem>>, vector<40x128xbf16>
    %c0_34 = arith.constant 0 : index
    %c3 = arith.constant 3 : index
    %c0_35 = arith.constant 0 : index
    %c0_36 = arith.constant 0 : index
    %58 = vector.load %arg4[%c0_34, %c3, %c0_35, %c0_36] : memref<5x5x128x128xbf16, #tpu.memory_space<vmem>>, vector<1x1x128x128xbf16>
    %59 = vector.shape_cast %58 : vector<1x1x128x128xbf16> to vector<128x128xbf16>
    %cst_37 = arith.constant dense<0.000000e+00> : vector<40x128xf32>
    %60 = tpu.matmul %57, %59, %cst_37 {dimension_numbers = #tpu.dot_dimension_numbers<[1], [0], [0], [1], [0, 0, 1, 1], [], []>} : vector<40x128xbf16>, vector<128x128xbf16>, vector<40x128xf32> -> vector<40x128xf32>
    %61 = arith.addf %56, %60 : vector<40x128xf32>
    %c10 = arith.constant 10 : index
    %c0_38 = arith.constant 0 : index
    %62 = vector.load %arg10[%c10, %c0_38] : memref<56x128xbf16, #tpu.memory_space<vmem>>, vector<40x128xbf16>
    %c0_39 = arith.constant 0 : index
    %c4 = arith.constant 4 : index
    %c0_40 = arith.constant 0 : index
    %c0_41 = arith.constant 0 : index
    %63 = vector.load %arg4[%c0_39, %c4, %c0_40, %c0_41] : memref<5x5x128x128xbf16, #tpu.memory_space<vmem>>, vector<1x1x128x128xbf16>
    %64 = vector.shape_cast %63 : vector<1x1x128x128xbf16> to vector<128x128xbf16>
    %cst_42 = arith.constant dense<0.000000e+00> : vector<40x128xf32>
    %65 = tpu.matmul %62, %64, %cst_42 {dimension_numbers = #tpu.dot_dimension_numbers<[1], [0], [0], [1], [0, 0, 1, 1], [], []>} : vector<40x128xbf16>, vector<128x128xbf16>, vector<40x128xf32> -> vector<40x128xf32>
    %66 = arith.addf %61, %65 : vector<40x128xf32>
    %c0_43 = arith.constant 0 : index
    %c0_44 = arith.constant 0 : index
    %c0_45 = arith.constant 0 : index
    %67 = vector.load %arg5[%c0_43, %c0_44, %c0_45] : memref<5x1x128xf32, #tpu.memory_space<vmem>>, vector<1x1x128xf32>
    %68 = vector.shape_cast %67 : vector<1x1x128xf32> to vector<1x128xf32>
    %69 = vector.broadcast %68 : vector<1x128xf32> to vector<40x128xf32>
    %70 = arith.addf %66, %69 : vector<40x128xf32>
    %71 = vector.broadcast %22 : vector<40x1xf32> to vector<40x128xf32>
    %72 = arith.mulf %70, %71 : vector<40x128xf32>
    %c0_46 = arith.constant 0 : index
    %c0_47 = arith.constant 0 : index
    %73 = vector.load %arg11[%c0_46, %c0_47] : memref<40x128xf32, #tpu.memory_space<vmem>>, vector<40x128xf32>
    tpu.vector_store %arg11[%c0_46, %c0_47], %72 {strides = array<i32>} : memref<40x128xf32, #tpu.memory_space<vmem>>, vector<40x128xf32>,
    %c0_48 = arith.constant 0 : index
    %c0_49 = arith.constant 0 : index
    %74 = vector.load %arg11[%c0_48, %c0_49] : memref<40x128xf32, #tpu.memory_space<vmem>>, vector<40x128xf32>
    %c1_50 = arith.constant 1 : index
    %c0_51 = arith.constant 0 : index
    %c0_52 = arith.constant 0 : index
    %75 = vector.load %arg6[%c1_50, %c0_51, %c0_52] : memref<5x1x128xf32, #tpu.memory_space<vmem>>, vector<1x1x128xf32>
    %76 = vector.shape_cast %75 : vector<1x1x128xf32> to vector<1x128xf32>
    %77 = vector.broadcast %76 : vector<1x128xf32> to vector<40x128xf32>
    %78 = arith.mulf %74, %77 : vector<40x128xf32>
    %c1_53 = arith.constant 1 : index
    %c0_54 = arith.constant 0 : index
    %c0_55 = arith.constant 0 : index
    %79 = vector.load %arg7[%c1_53, %c0_54, %c0_55] : memref<5x1x128xf32, #tpu.memory_space<vmem>>, vector<1x1x128xf32>
    %80 = vector.shape_cast %79 : vector<1x1x128xf32> to vector<1x128xf32>
    %81 = vector.broadcast %80 : vector<1x128xf32> to vector<40x128xf32>
    %82 = arith.addf %78, %81 : vector<40x128xf32>
    %83 = math.tanh %82 : vector<40x128xf32>
    %84 = vector.broadcast %24 : vector<40x1xf32> to vector<40x128xf32>
    %85 = arith.mulf %83, %84 : vector<40x128xf32>
    %86 = arith.truncf %85 : vector<40x128xf32> to vector<40x128xbf16>
    %c8_56 = arith.constant 8 : index
    %c0_57 = arith.constant 0 : index
    %87 = vector.load %arg10[%c8_56, %c0_57] : memref<56x128xbf16, #tpu.memory_space<vmem>>, vector<40x128xbf16>
    tpu.vector_store %arg10[%c8_56, %c0_57], %86 {strides = array<i32>} : memref<56x128xbf16, #tpu.memory_space<vmem>>, vector<40x128xbf16>,
    %c6_58 = arith.constant 6 : index
    %c0_59 = arith.constant 0 : index
    %88 = vector.load %arg10[%c6_58, %c0_59] : memref<56x128xbf16, #tpu.memory_space<vmem>>, vector<40x128xbf16>
    %c1_60 = arith.constant 1 : index
    %c0_61 = arith.constant 0 : index
    %c0_62 = arith.constant 0 : index
    %c0_63 = arith.constant 0 : index
    %89 = vector.load %arg4[%c1_60, %c0_61, %c0_62, %c0_63] : memref<5x5x128x128xbf16, #tpu.memory_space<vmem>>, vector<1x1x128x128xbf16>
    %90 = vector.shape_cast %89 : vector<1x1x128x128xbf16> to vector<128x128xbf16>
    %cst_64 = arith.constant dense<0.000000e+00> : vector<40x128xf32>
    %91 = tpu.matmul %88, %90, %cst_64 {dimension_numbers = #tpu.dot_dimension_numbers<[1], [0], [0], [1], [0, 0, 1, 1], [], []>} : vector<40x128xbf16>, vector<128x128xbf16>, vector<40x128xf32> -> vector<40x128xf32>
    %c7_65 = arith.constant 7 : index
    %c0_66 = arith.constant 0 : index
    %92 = vector.load %arg10[%c7_65, %c0_66] : memref<56x128xbf16, #tpu.memory_space<vmem>>, vector<40x128xbf16>
    %c1_67 = arith.constant 1 : index
    %c1_68 = arith.constant 1 : index
    %c0_69 = arith.constant 0 : index
    %c0_70 = arith.constant 0 : index
    %93 = vector.load %arg4[%c1_67, %c1_68, %c0_69, %c0_70] : memref<5x5x128x128xbf16, #tpu.memory_space<vmem>>, vector<1x1x128x128xbf16>
    %94 = vector.shape_cast %93 : vector<1x1x128x128xbf16> to vector<128x128xbf16>
    %cst_71 = arith.constant dense<0.000000e+00> : vector<40x128xf32>
    %95 = tpu.matmul %92, %94, %cst_71 {dimension_numbers = #tpu.dot_dimension_numbers<[1], [0], [0], [1], [0, 0, 1, 1], [], []>} : vector<40x128xbf16>, vector<128x128xbf16>, vector<40x128xf32> -> vector<40x128xf32>
    %96 = arith.addf %91, %95 : vector<40x128xf32>
    %c8_72 = arith.constant 8 : index
    %c0_73 = arith.constant 0 : index
    %97 = vector.load %arg10[%c8_72, %c0_73] : memref<56x128xbf16, #tpu.memory_space<vmem>>, vector<40x128xbf16>
    %c1_74 = arith.constant 1 : index
    %c2_75 = arith.constant 2 : index
    %c0_76 = arith.constant 0 : index
    %c0_77 = arith.constant 0 : index
    %98 = vector.load %arg4[%c1_74, %c2_75, %c0_76, %c0_77] : memref<5x5x128x128xbf16, #tpu.memory_space<vmem>>, vector<1x1x128x128xbf16>
    %99 = vector.shape_cast %98 : vector<1x1x128x128xbf16> to vector<128x128xbf16>
    %cst_78 = arith.constant dense<0.000000e+00> : vector<40x128xf32>
    %100 = tpu.matmul %97, %99, %cst_78 {dimension_numbers = #tpu.dot_dimension_numbers<[1], [0], [0], [1], [0, 0, 1, 1], [], []>} : vector<40x128xbf16>, vector<128x128xbf16>, vector<40x128xf32> -> vector<40x128xf32>
    %101 = arith.addf %96, %100 : vector<40x128xf32>
    %c9_79 = arith.constant 9 : index
    %c0_80 = arith.constant 0 : index
    %102 = vector.load %arg10[%c9_79, %c0_80] : memref<56x128xbf16, #tpu.memory_space<vmem>>, vector<40x128xbf16>
    %c1_81 = arith.constant 1 : index
    %c3_82 = arith.constant 3 : index
    %c0_83 = arith.constant 0 : index
    %c0_84 = arith.constant 0 : index
    %103 = vector.load %arg4[%c1_81, %c3_82, %c0_83, %c0_84] : memref<5x5x128x128xbf16, #tpu.memory_space<vmem>>, vector<1x1x128x128xbf16>
    %104 = vector.shape_cast %103 : vector<1x1x128x128xbf16> to vector<128x128xbf16>
    %cst_85 = arith.constant dense<0.000000e+00> : vector<40x128xf32>
    %105 = tpu.matmul %102, %104, %cst_85 {dimension_numbers = #tpu.dot_dimension_numbers<[1], [0], [0], [1], [0, 0, 1, 1], [], []>} : vector<40x128xbf16>, vector<128x128xbf16>, vector<40x128xf32> -> vector<40x128xf32>
    %106 = arith.addf %101, %105 : vector<40x128xf32>
    %c10_86 = arith.constant 10 : index
    %c0_87 = arith.constant 0 : index
    %107 = vector.load %arg10[%c10_86, %c0_87] : memref<56x128xbf16, #tpu.memory_space<vmem>>, vector<40x128xbf16>
    %c1_88 = arith.constant 1 : index
    %c4_89 = arith.constant 4 : index
    %c0_90 = arith.constant 0 : index
    %c0_91 = arith.constant 0 : index
    %108 = vector.load %arg4[%c1_88, %c4_89, %c0_90, %c0_91] : memref<5x5x128x128xbf16, #tpu.memory_space<vmem>>, vector<1x1x128x128xbf16>
    %109 = vector.shape_cast %108 : vector<1x1x128x128xbf16> to vector<128x128xbf16>
    %cst_92 = arith.constant dense<0.000000e+00> : vector<40x128xf32>
    %110 = tpu.matmul %107, %109, %cst_92 {dimension_numbers = #tpu.dot_dimension_numbers<[1], [0], [0], [1], [0, 0, 1, 1], [], []>} : vector<40x128xbf16>, vector<128x128xbf16>, vector<40x128xf32> -> vector<40x128xf32>
    %111 = arith.addf %106, %110 : vector<40x128xf32>
    %c1_93 = arith.constant 1 : index
    %c0_94 = arith.constant 0 : index
    %c0_95 = arith.constant 0 : index
    %112 = vector.load %arg5[%c1_93, %c0_94, %c0_95] : memref<5x1x128xf32, #tpu.memory_space<vmem>>, vector<1x1x128xf32>
    %113 = vector.shape_cast %112 : vector<1x1x128xf32> to vector<1x128xf32>
    %114 = vector.broadcast %113 : vector<1x128xf32> to vector<40x128xf32>
    %115 = arith.addf %111, %114 : vector<40x128xf32>
    %116 = arith.addf %115, %74 : vector<40x128xf32>
    %117 = vector.broadcast %22 : vector<40x1xf32> to vector<40x128xf32>
    %118 = arith.mulf %116, %117 : vector<40x128xf32>
    %c0_96 = arith.constant 0 : index
    %c0_97 = arith.constant 0 : index
    %119 = vector.load %arg11[%c0_96, %c0_97] : memref<40x128xf32, #tpu.memory_space<vmem>>, vector<40x128xf32>
    tpu.vector_store %arg11[%c0_96, %c0_97], %118 {strides = array<i32>} : memref<40x128xf32, #tpu.memory_space<vmem>>, vector<40x128xf32>,
    %c0_98 = arith.constant 0 : index
    %c0_99 = arith.constant 0 : index
    %120 = vector.load %arg11[%c0_98, %c0_99] : memref<40x128xf32, #tpu.memory_space<vmem>>, vector<40x128xf32>
    %c2_100 = arith.constant 2 : index
    %c0_101 = arith.constant 0 : index
    %c0_102 = arith.constant 0 : index
    %121 = vector.load %arg6[%c2_100, %c0_101, %c0_102] : memref<5x1x128xf32, #tpu.memory_space<vmem>>, vector<1x1x128xf32>
    %122 = vector.shape_cast %121 : vector<1x1x128xf32> to vector<1x128xf32>
    %123 = vector.broadcast %122 : vector<1x128xf32> to vector<40x128xf32>
    %124 = arith.mulf %120, %123 : vector<40x128xf32>
    %c2_103 = arith.constant 2 : index
    %c0_104 = arith.constant 0 : index
    %c0_105 = arith.constant 0 : index
    %125 = vector.load %arg7[%c2_103, %c0_104, %c0_105] : memref<5x1x128xf32, #tpu.memory_space<vmem>>, vector<1x1x128xf32>
    %126 = vector.shape_cast %125 : vector<1x1x128xf32> to vector<1x128xf32>
    %127 = vector.broadcast %126 : vector<1x128xf32> to vector<40x128xf32>
    %128 = arith.addf %124, %127 : vector<40x128xf32>
    %129 = math.tanh %128 : vector<40x128xf32>
    %130 = vector.broadcast %24 : vector<40x1xf32> to vector<40x128xf32>
    %131 = arith.mulf %129, %130 : vector<40x128xf32>
    %132 = arith.truncf %131 : vector<40x128xf32> to vector<40x128xbf16>
    %c8_106 = arith.constant 8 : index
    %c0_107 = arith.constant 0 : index
    %133 = vector.load %arg10[%c8_106, %c0_107] : memref<56x128xbf16, #tpu.memory_space<vmem>>, vector<40x128xbf16>
    tpu.vector_store %arg10[%c8_106, %c0_107], %132 {strides = array<i32>} : memref<56x128xbf16, #tpu.memory_space<vmem>>, vector<40x128xbf16>,
    %c6_108 = arith.constant 6 : index
    %c0_109 = arith.constant 0 : index
    %134 = vector.load %arg10[%c6_108, %c0_109] : memref<56x128xbf16, #tpu.memory_space<vmem>>, vector<40x128xbf16>
    %c2_110 = arith.constant 2 : index
    %c0_111 = arith.constant 0 : index
    %c0_112 = arith.constant 0 : index
    %c0_113 = arith.constant 0 : index
    %135 = vector.load %arg4[%c2_110, %c0_111, %c0_112, %c0_113] : memref<5x5x128x128xbf16, #tpu.memory_space<vmem>>, vector<1x1x128x128xbf16>
    %136 = vector.shape_cast %135 : vector<1x1x128x128xbf16> to vector<128x128xbf16>
    %cst_114 = arith.constant dense<0.000000e+00> : vector<40x128xf32>
    %137 = tpu.matmul %134, %136, %cst_114 {dimension_numbers = #tpu.dot_dimension_numbers<[1], [0], [0], [1], [0, 0, 1, 1], [], []>} : vector<40x128xbf16>, vector<128x128xbf16>, vector<40x128xf32> -> vector<40x128xf32>
    %c7_115 = arith.constant 7 : index
    %c0_116 = arith.constant 0 : index
    %138 = vector.load %arg10[%c7_115, %c0_116] : memref<56x128xbf16, #tpu.memory_space<vmem>>, vector<40x128xbf16>
    %c2_117 = arith.constant 2 : index
    %c1_118 = arith.constant 1 : index
    %c0_119 = arith.constant 0 : index
    %c0_120 = arith.constant 0 : index
    %139 = vector.load %arg4[%c2_117, %c1_118, %c0_119, %c0_120] : memref<5x5x128x128xbf16, #tpu.memory_space<vmem>>, vector<1x1x128x128xbf16>
    %140 = vector.shape_cast %139 : vector<1x1x128x128xbf16> to vector<128x128xbf16>
    %cst_121 = arith.constant dense<0.000000e+00> : vector<40x128xf32>
    %141 = tpu.matmul %138, %140, %cst_121 {dimension_numbers = #tpu.dot_dimension_numbers<[1], [0], [0], [1], [0, 0, 1, 1], [], []>} : vector<40x128xbf16>, vector<128x128xbf16>, vector<40x128xf32> -> vector<40x128xf32>
    %142 = arith.addf %137, %141 : vector<40x128xf32>
    %c8_122 = arith.constant 8 : index
    %c0_123 = arith.constant 0 : index
    %143 = vector.load %arg10[%c8_122, %c0_123] : memref<56x128xbf16, #tpu.memory_space<vmem>>, vector<40x128xbf16>
    %c2_124 = arith.constant 2 : index
    %c2_125 = arith.constant 2 : index
    %c0_126 = arith.constant 0 : index
    %c0_127 = arith.constant 0 : index
    %144 = vector.load %arg4[%c2_124, %c2_125, %c0_126, %c0_127] : memref<5x5x128x128xbf16, #tpu.memory_space<vmem>>, vector<1x1x128x128xbf16>
    %145 = vector.shape_cast %144 : vector<1x1x128x128xbf16> to vector<128x128xbf16>
    %cst_128 = arith.constant dense<0.000000e+00> : vector<40x128xf32>
    %146 = tpu.matmul %143, %145, %cst_128 {dimension_numbers = #tpu.dot_dimension_numbers<[1], [0], [0], [1], [0, 0, 1, 1], [], []>} : vector<40x128xbf16>, vector<128x128xbf16>, vector<40x128xf32> -> vector<40x128xf32>
    %147 = arith.addf %142, %146 : vector<40x128xf32>
    %c9_129 = arith.constant 9 : index
    %c0_130 = arith.constant 0 : index
    %148 = vector.load %arg10[%c9_129, %c0_130] : memref<56x128xbf16, #tpu.memory_space<vmem>>, vector<40x128xbf16>
    %c2_131 = arith.constant 2 : index
    %c3_132 = arith.constant 3 : index
    %c0_133 = arith.constant 0 : index
    %c0_134 = arith.constant 0 : index
    %149 = vector.load %arg4[%c2_131, %c3_132, %c0_133, %c0_134] : memref<5x5x128x128xbf16, #tpu.memory_space<vmem>>, vector<1x1x128x128xbf16>
    %150 = vector.shape_cast %149 : vector<1x1x128x128xbf16> to vector<128x128xbf16>
    %cst_135 = arith.constant dense<0.000000e+00> : vector<40x128xf32>
    %151 = tpu.matmul %148, %150, %cst_135 {dimension_numbers = #tpu.dot_dimension_numbers<[1], [0], [0], [1], [0, 0, 1, 1], [], []>} : vector<40x128xbf16>, vector<128x128xbf16>, vector<40x128xf32> -> vector<40x128xf32>
    %152 = arith.addf %147, %151 : vector<40x128xf32>
    %c10_136 = arith.constant 10 : index
    %c0_137 = arith.constant 0 : index
    %153 = vector.load %arg10[%c10_136, %c0_137] : memref<56x128xbf16, #tpu.memory_space<vmem>>, vector<40x128xbf16>
    %c2_138 = arith.constant 2 : index
    %c4_139 = arith.constant 4 : index
    %c0_140 = arith.constant 0 : index
    %c0_141 = arith.constant 0 : index
    %154 = vector.load %arg4[%c2_138, %c4_139, %c0_140, %c0_141] : memref<5x5x128x128xbf16, #tpu.memory_space<vmem>>, vector<1x1x128x128xbf16>
    %155 = vector.shape_cast %154 : vector<1x1x128x128xbf16> to vector<128x128xbf16>
    %cst_142 = arith.constant dense<0.000000e+00> : vector<40x128xf32>
    %156 = tpu.matmul %153, %155, %cst_142 {dimension_numbers = #tpu.dot_dimension_numbers<[1], [0], [0], [1], [0, 0, 1, 1], [], []>} : vector<40x128xbf16>, vector<128x128xbf16>, vector<40x128xf32> -> vector<40x128xf32>
    %157 = arith.addf %152, %156 : vector<40x128xf32>
    %c2_143 = arith.constant 2 : index
    %c0_144 = arith.constant 0 : index
    %c0_145 = arith.constant 0 : index
    %158 = vector.load %arg5[%c2_143, %c0_144, %c0_145] : memref<5x1x128xf32, #tpu.memory_space<vmem>>, vector<1x1x128xf32>
    %159 = vector.shape_cast %158 : vector<1x1x128xf32> to vector<1x128xf32>
    %160 = vector.broadcast %159 : vector<1x128xf32> to vector<40x128xf32>
    %161 = arith.addf %157, %160 : vector<40x128xf32>
    %162 = arith.addf %161, %120 : vector<40x128xf32>
    %163 = vector.broadcast %22 : vector<40x1xf32> to vector<40x128xf32>
    %164 = arith.mulf %162, %163 : vector<40x128xf32>
    %c0_146 = arith.constant 0 : index
    %c0_147 = arith.constant 0 : index
    %165 = vector.load %arg11[%c0_146, %c0_147] : memref<40x128xf32, #tpu.memory_space<vmem>>, vector<40x128xf32>
    tpu.vector_store %arg11[%c0_146, %c0_147], %164 {strides = array<i32>} : memref<40x128xf32, #tpu.memory_space<vmem>>, vector<40x128xf32>,
    %c0_148 = arith.constant 0 : index
    %c0_149 = arith.constant 0 : index
    %166 = vector.load %arg11[%c0_148, %c0_149] : memref<40x128xf32, #tpu.memory_space<vmem>>, vector<40x128xf32>
    %c3_150 = arith.constant 3 : index
    %c0_151 = arith.constant 0 : index
    %c0_152 = arith.constant 0 : index
    %167 = vector.load %arg6[%c3_150, %c0_151, %c0_152] : memref<5x1x128xf32, #tpu.memory_space<vmem>>, vector<1x1x128xf32>
    %168 = vector.shape_cast %167 : vector<1x1x128xf32> to vector<1x128xf32>
    %169 = vector.broadcast %168 : vector<1x128xf32> to vector<40x128xf32>
    %170 = arith.mulf %166, %169 : vector<40x128xf32>
    %c3_153 = arith.constant 3 : index
    %c0_154 = arith.constant 0 : index
    %c0_155 = arith.constant 0 : index
    %171 = vector.load %arg7[%c3_153, %c0_154, %c0_155] : memref<5x1x128xf32, #tpu.memory_space<vmem>>, vector<1x1x128xf32>
    %172 = vector.shape_cast %171 : vector<1x1x128xf32> to vector<1x128xf32>
    %173 = vector.broadcast %172 : vector<1x128xf32> to vector<40x128xf32>
    %174 = arith.addf %170, %173 : vector<40x128xf32>
    %175 = math.tanh %174 : vector<40x128xf32>
    %176 = vector.broadcast %24 : vector<40x1xf32> to vector<40x128xf32>
    %177 = arith.mulf %175, %176 : vector<40x128xf32>
    %178 = arith.truncf %177 : vector<40x128xf32> to vector<40x128xbf16>
    %c8_156 = arith.constant 8 : index
    %c0_157 = arith.constant 0 : index
    %179 = vector.load %arg10[%c8_156, %c0_157] : memref<56x128xbf16, #tpu.memory_space<vmem>>, vector<40x128xbf16>
    tpu.vector_store %arg10[%c8_156, %c0_157], %178 {strides = array<i32>} : memref<56x128xbf16, #tpu.memory_space<vmem>>, vector<40x128xbf16>,
    %c6_158 = arith.constant 6 : index
    %c0_159 = arith.constant 0 : index
    %180 = vector.load %arg10[%c6_158, %c0_159] : memref<56x128xbf16, #tpu.memory_space<vmem>>, vector<40x128xbf16>
    %c3_160 = arith.constant 3 : index
    %c0_161 = arith.constant 0 : index
    %c0_162 = arith.constant 0 : index
    %c0_163 = arith.constant 0 : index
    %181 = vector.load %arg4[%c3_160, %c0_161, %c0_162, %c0_163] : memref<5x5x128x128xbf16, #tpu.memory_space<vmem>>, vector<1x1x128x128xbf16>
    %182 = vector.shape_cast %181 : vector<1x1x128x128xbf16> to vector<128x128xbf16>
    %cst_164 = arith.constant dense<0.000000e+00> : vector<40x128xf32>
    %183 = tpu.matmul %180, %182, %cst_164 {dimension_numbers = #tpu.dot_dimension_numbers<[1], [0], [0], [1], [0, 0, 1, 1], [], []>} : vector<40x128xbf16>, vector<128x128xbf16>, vector<40x128xf32> -> vector<40x128xf32>
    %c7_165 = arith.constant 7 : index
    %c0_166 = arith.constant 0 : index
    %184 = vector.load %arg10[%c7_165, %c0_166] : memref<56x128xbf16, #tpu.memory_space<vmem>>, vector<40x128xbf16>
    %c3_167 = arith.constant 3 : index
    %c1_168 = arith.constant 1 : index
    %c0_169 = arith.constant 0 : index
    %c0_170 = arith.constant 0 : index
    %185 = vector.load %arg4[%c3_167, %c1_168, %c0_169, %c0_170] : memref<5x5x128x128xbf16, #tpu.memory_space<vmem>>, vector<1x1x128x128xbf16>
    %186 = vector.shape_cast %185 : vector<1x1x128x128xbf16> to vector<128x128xbf16>
    %cst_171 = arith.constant dense<0.000000e+00> : vector<40x128xf32>
    %187 = tpu.matmul %184, %186, %cst_171 {dimension_numbers = #tpu.dot_dimension_numbers<[1], [0], [0], [1], [0, 0, 1, 1], [], []>} : vector<40x128xbf16>, vector<128x128xbf16>, vector<40x128xf32> -> vector<40x128xf32>
    %188 = arith.addf %183, %187 : vector<40x128xf32>
    %c8_172 = arith.constant 8 : index
    %c0_173 = arith.constant 0 : index
    %189 = vector.load %arg10[%c8_172, %c0_173] : memref<56x128xbf16, #tpu.memory_space<vmem>>, vector<40x128xbf16>
    %c3_174 = arith.constant 3 : index
    %c2_175 = arith.constant 2 : index
    %c0_176 = arith.constant 0 : index
    %c0_177 = arith.constant 0 : index
    %190 = vector.load %arg4[%c3_174, %c2_175, %c0_176, %c0_177] : memref<5x5x128x128xbf16, #tpu.memory_space<vmem>>, vector<1x1x128x128xbf16>
    %191 = vector.shape_cast %190 : vector<1x1x128x128xbf16> to vector<128x128xbf16>
    %cst_178 = arith.constant dense<0.000000e+00> : vector<40x128xf32>
    %192 = tpu.matmul %189, %191, %cst_178 {dimension_numbers = #tpu.dot_dimension_numbers<[1], [0], [0], [1], [0, 0, 1, 1], [], []>} : vector<40x128xbf16>, vector<128x128xbf16>, vector<40x128xf32> -> vector<40x128xf32>
    %193 = arith.addf %188, %192 : vector<40x128xf32>
    %c9_179 = arith.constant 9 : index
    %c0_180 = arith.constant 0 : index
    %194 = vector.load %arg10[%c9_179, %c0_180] : memref<56x128xbf16, #tpu.memory_space<vmem>>, vector<40x128xbf16>
    %c3_181 = arith.constant 3 : index
    %c3_182 = arith.constant 3 : index
    %c0_183 = arith.constant 0 : index
    %c0_184 = arith.constant 0 : index
    %195 = vector.load %arg4[%c3_181, %c3_182, %c0_183, %c0_184] : memref<5x5x128x128xbf16, #tpu.memory_space<vmem>>, vector<1x1x128x128xbf16>
    %196 = vector.shape_cast %195 : vector<1x1x128x128xbf16> to vector<128x128xbf16>
    %cst_185 = arith.constant dense<0.000000e+00> : vector<40x128xf32>
    %197 = tpu.matmul %194, %196, %cst_185 {dimension_numbers = #tpu.dot_dimension_numbers<[1], [0], [0], [1], [0, 0, 1, 1], [], []>} : vector<40x128xbf16>, vector<128x128xbf16>, vector<40x128xf32> -> vector<40x128xf32>
    %198 = arith.addf %193, %197 : vector<40x128xf32>
    %c10_186 = arith.constant 10 : index
    %c0_187 = arith.constant 0 : index
    %199 = vector.load %arg10[%c10_186, %c0_187] : memref<56x128xbf16, #tpu.memory_space<vmem>>, vector<40x128xbf16>
    %c3_188 = arith.constant 3 : index
    %c4_189 = arith.constant 4 : index
    %c0_190 = arith.constant 0 : index
    %c0_191 = arith.constant 0 : index
    %200 = vector.load %arg4[%c3_188, %c4_189, %c0_190, %c0_191] : memref<5x5x128x128xbf16, #tpu.memory_space<vmem>>, vector<1x1x128x128xbf16>
    %201 = vector.shape_cast %200 : vector<1x1x128x128xbf16> to vector<128x128xbf16>
    %cst_192 = arith.constant dense<0.000000e+00> : vector<40x128xf32>
    %202 = tpu.matmul %199, %201, %cst_192 {dimension_numbers = #tpu.dot_dimension_numbers<[1], [0], [0], [1], [0, 0, 1, 1], [], []>} : vector<40x128xbf16>, vector<128x128xbf16>, vector<40x128xf32> -> vector<40x128xf32>
    %203 = arith.addf %198, %202 : vector<40x128xf32>
    %c3_193 = arith.constant 3 : index
    %c0_194 = arith.constant 0 : index
    %c0_195 = arith.constant 0 : index
    %204 = vector.load %arg5[%c3_193, %c0_194, %c0_195] : memref<5x1x128xf32, #tpu.memory_space<vmem>>, vector<1x1x128xf32>
    %205 = vector.shape_cast %204 : vector<1x1x128xf32> to vector<1x128xf32>
    %206 = vector.broadcast %205 : vector<1x128xf32> to vector<40x128xf32>
    %207 = arith.addf %203, %206 : vector<40x128xf32>
    %208 = arith.addf %207, %166 : vector<40x128xf32>
    %209 = vector.broadcast %22 : vector<40x1xf32> to vector<40x128xf32>
    %210 = arith.mulf %208, %209 : vector<40x128xf32>
    %c0_196 = arith.constant 0 : index
    %c0_197 = arith.constant 0 : index
    %211 = vector.load %arg11[%c0_196, %c0_197] : memref<40x128xf32, #tpu.memory_space<vmem>>, vector<40x128xf32>
    tpu.vector_store %arg11[%c0_196, %c0_197], %210 {strides = array<i32>} : memref<40x128xf32, #tpu.memory_space<vmem>>, vector<40x128xf32>,
    %c0_198 = arith.constant 0 : index
    %c0_199 = arith.constant 0 : index
    %212 = vector.load %arg11[%c0_198, %c0_199] : memref<40x128xf32, #tpu.memory_space<vmem>>, vector<40x128xf32>
    %c4_200 = arith.constant 4 : index
    %c0_201 = arith.constant 0 : index
    %c0_202 = arith.constant 0 : index
    %213 = vector.load %arg6[%c4_200, %c0_201, %c0_202] : memref<5x1x128xf32, #tpu.memory_space<vmem>>, vector<1x1x128xf32>
    %214 = vector.shape_cast %213 : vector<1x1x128xf32> to vector<1x128xf32>
    %215 = vector.broadcast %214 : vector<1x128xf32> to vector<40x128xf32>
    %216 = arith.mulf %212, %215 : vector<40x128xf32>
    %c4_203 = arith.constant 4 : index
    %c0_204 = arith.constant 0 : index
    %c0_205 = arith.constant 0 : index
    %217 = vector.load %arg7[%c4_203, %c0_204, %c0_205] : memref<5x1x128xf32, #tpu.memory_space<vmem>>, vector<1x1x128xf32>
    %218 = vector.shape_cast %217 : vector<1x1x128xf32> to vector<1x128xf32>
    %219 = vector.broadcast %218 : vector<1x128xf32> to vector<40x128xf32>
    %220 = arith.addf %216, %219 : vector<40x128xf32>
    %221 = math.tanh %220 : vector<40x128xf32>
    %222 = vector.broadcast %24 : vector<40x1xf32> to vector<40x128xf32>
    %223 = arith.mulf %221, %222 : vector<40x128xf32>
    %224 = arith.truncf %223 : vector<40x128xf32> to vector<40x128xbf16>
    %c8_206 = arith.constant 8 : index
    %c0_207 = arith.constant 0 : index
    %225 = vector.load %arg10[%c8_206, %c0_207] : memref<56x128xbf16, #tpu.memory_space<vmem>>, vector<40x128xbf16>
    tpu.vector_store %arg10[%c8_206, %c0_207], %224 {strides = array<i32>} : memref<56x128xbf16, #tpu.memory_space<vmem>>, vector<40x128xbf16>,
    %c6_208 = arith.constant 6 : index
    %c0_209 = arith.constant 0 : index
    %226 = vector.load %arg10[%c6_208, %c0_209] : memref<56x128xbf16, #tpu.memory_space<vmem>>, vector<40x128xbf16>
    %c4_210 = arith.constant 4 : index
    %c0_211 = arith.constant 0 : index
    %c0_212 = arith.constant 0 : index
    %c0_213 = arith.constant 0 : index
    %227 = vector.load %arg4[%c4_210, %c0_211, %c0_212, %c0_213] : memref<5x5x128x128xbf16, #tpu.memory_space<vmem>>, vector<1x1x128x128xbf16>
    %228 = vector.shape_cast %227 : vector<1x1x128x128xbf16> to vector<128x128xbf16>
    %cst_214 = arith.constant dense<0.000000e+00> : vector<40x128xf32>
    %229 = tpu.matmul %226, %228, %cst_214 {dimension_numbers = #tpu.dot_dimension_numbers<[1], [0], [0], [1], [0, 0, 1, 1], [], []>} : vector<40x128xbf16>, vector<128x128xbf16>, vector<40x128xf32> -> vector<40x128xf32>
    %c7_215 = arith.constant 7 : index
    %c0_216 = arith.constant 0 : index
    %230 = vector.load %arg10[%c7_215, %c0_216] : memref<56x128xbf16, #tpu.memory_space<vmem>>, vector<40x128xbf16>
    %c4_217 = arith.constant 4 : index
    %c1_218 = arith.constant 1 : index
    %c0_219 = arith.constant 0 : index
    %c0_220 = arith.constant 0 : index
    %231 = vector.load %arg4[%c4_217, %c1_218, %c0_219, %c0_220] : memref<5x5x128x128xbf16, #tpu.memory_space<vmem>>, vector<1x1x128x128xbf16>
    %232 = vector.shape_cast %231 : vector<1x1x128x128xbf16> to vector<128x128xbf16>
    %cst_221 = arith.constant dense<0.000000e+00> : vector<40x128xf32>
    %233 = tpu.matmul %230, %232, %cst_221 {dimension_numbers = #tpu.dot_dimension_numbers<[1], [0], [0], [1], [0, 0, 1, 1], [], []>} : vector<40x128xbf16>, vector<128x128xbf16>, vector<40x128xf32> -> vector<40x128xf32>
    %234 = arith.addf %229, %233 : vector<40x128xf32>
    %c8_222 = arith.constant 8 : index
    %c0_223 = arith.constant 0 : index
    %235 = vector.load %arg10[%c8_222, %c0_223] : memref<56x128xbf16, #tpu.memory_space<vmem>>, vector<40x128xbf16>
    %c4_224 = arith.constant 4 : index
    %c2_225 = arith.constant 2 : index
    %c0_226 = arith.constant 0 : index
    %c0_227 = arith.constant 0 : index
    %236 = vector.load %arg4[%c4_224, %c2_225, %c0_226, %c0_227] : memref<5x5x128x128xbf16, #tpu.memory_space<vmem>>, vector<1x1x128x128xbf16>
    %237 = vector.shape_cast %236 : vector<1x1x128x128xbf16> to vector<128x128xbf16>
    %cst_228 = arith.constant dense<0.000000e+00> : vector<40x128xf32>
    %238 = tpu.matmul %235, %237, %cst_228 {dimension_numbers = #tpu.dot_dimension_numbers<[1], [0], [0], [1], [0, 0, 1, 1], [], []>} : vector<40x128xbf16>, vector<128x128xbf16>, vector<40x128xf32> -> vector<40x128xf32>
    %239 = arith.addf %234, %238 : vector<40x128xf32>
    %c9_229 = arith.constant 9 : index
    %c0_230 = arith.constant 0 : index
    %240 = vector.load %arg10[%c9_229, %c0_230] : memref<56x128xbf16, #tpu.memory_space<vmem>>, vector<40x128xbf16>
    %c4_231 = arith.constant 4 : index
    %c3_232 = arith.constant 3 : index
    %c0_233 = arith.constant 0 : index
    %c0_234 = arith.constant 0 : index
    %241 = vector.load %arg4[%c4_231, %c3_232, %c0_233, %c0_234] : memref<5x5x128x128xbf16, #tpu.memory_space<vmem>>, vector<1x1x128x128xbf16>
    %242 = vector.shape_cast %241 : vector<1x1x128x128xbf16> to vector<128x128xbf16>
    %cst_235 = arith.constant dense<0.000000e+00> : vector<40x128xf32>
    %243 = tpu.matmul %240, %242, %cst_235 {dimension_numbers = #tpu.dot_dimension_numbers<[1], [0], [0], [1], [0, 0, 1, 1], [], []>} : vector<40x128xbf16>, vector<128x128xbf16>, vector<40x128xf32> -> vector<40x128xf32>
    %244 = arith.addf %239, %243 : vector<40x128xf32>
    %c10_236 = arith.constant 10 : index
    %c0_237 = arith.constant 0 : index
    %245 = vector.load %arg10[%c10_236, %c0_237] : memref<56x128xbf16, #tpu.memory_space<vmem>>, vector<40x128xbf16>
    %c4_238 = arith.constant 4 : index
    %c4_239 = arith.constant 4 : index
    %c0_240 = arith.constant 0 : index
    %c0_241 = arith.constant 0 : index
    %246 = vector.load %arg4[%c4_238, %c4_239, %c0_240, %c0_241] : memref<5x5x128x128xbf16, #tpu.memory_space<vmem>>, vector<1x1x128x128xbf16>
    %247 = vector.shape_cast %246 : vector<1x1x128x128xbf16> to vector<128x128xbf16>
    %cst_242 = arith.constant dense<0.000000e+00> : vector<40x128xf32>
    %248 = tpu.matmul %245, %247, %cst_242 {dimension_numbers = #tpu.dot_dimension_numbers<[1], [0], [0], [1], [0, 0, 1, 1], [], []>} : vector<40x128xbf16>, vector<128x128xbf16>, vector<40x128xf32> -> vector<40x128xf32>
    %249 = arith.addf %244, %248 : vector<40x128xf32>
    %c4_243 = arith.constant 4 : index
    %c0_244 = arith.constant 0 : index
    %c0_245 = arith.constant 0 : index
    %250 = vector.load %arg5[%c4_243, %c0_244, %c0_245] : memref<5x1x128xf32, #tpu.memory_space<vmem>>, vector<1x1x128xf32>
    %251 = vector.shape_cast %250 : vector<1x1x128xf32> to vector<1x128xf32>
    %252 = vector.broadcast %251 : vector<1x128xf32> to vector<40x128xf32>
    %253 = arith.addf %249, %252 : vector<40x128xf32>
    %254 = vector.broadcast %22 : vector<40x1xf32> to vector<40x128xf32>
    %255 = arith.mulf %253, %254 : vector<40x128xf32>
    %c0_246 = arith.constant 0 : index
    %c0_247 = arith.constant 0 : index
    %256 = vector.load %arg11[%c0_246, %c0_247] : memref<40x128xf32, #tpu.memory_space<vmem>>, vector<40x128xf32>
    tpu.vector_store %arg11[%c0_246, %c0_247], %255 {strides = array<i32>} : memref<40x128xf32, #tpu.memory_space<vmem>>, vector<40x128xf32>,
    %c16 = arith.constant 16 : index
    %c0_248 = arith.constant 0 : index
    %257 = vector.load %arg11[%c16, %c0_248] : memref<40x128xf32, #tpu.memory_space<vmem>>, vector<8x128xf32>
    %c0_249 = arith.constant 0 : index
    %c0_250 = arith.constant 0 : index
    %c0_251 = arith.constant 0 : index
    %258 = vector.load %arg8[%c0_249, %c0_250, %c0_251] : memref<1x8x128xf32, #tpu.memory_space<vmem>>, vector<1x8x128xf32>
    %259 = vector.shape_cast %258 : vector<1x8x128xf32> to vector<8x128xf32>
    %260 = vector.shape_cast %257 : vector<8x128xf32> to vector<1x8x128xf32>
    tpu.vector_store %arg8[%c0_249, %c0_250, %c0_251], %260 {strides = array<i32>} : memref<1x8x128xf32, #tpu.memory_space<vmem>>, vector<1x8x128xf32>,
    return
  }
  func.func @transform_1(%arg0: i32, %arg1: i32, %arg2: memref<2xi32, #tpu.memory_space<smem>>) -> (i32, i32, i32, i32) {
    %c0_i32 = arith.constant 0 : i32
    %c0_i32_0 = arith.constant 0 : i32
    %c0_i32_1 = arith.constant 0 : i32
    %c0_i32_2 = arith.constant 0 : i32
    %c0_i32_3 = arith.constant 0 : i32
    return %c0_i32, %c0_i32_0, %c0_i32_1, %c0_i32_2 : i32, i32, i32, i32
  }
  func.func @transform_2(%arg0: i32, %arg1: i32, %arg2: memref<2xi32, #tpu.memory_space<smem>>) -> (i32, i32, i32) {
    %c0_i32 = arith.constant 0 : i32
    %c0_i32_0 = arith.constant 0 : i32
    %c0_i32_1 = arith.constant 0 : i32
    %c0_i32_2 = arith.constant 0 : i32
    return %c0_i32, %c0_i32_0, %c0_i32_1 : i32, i32, i32
  }
  func.func @transform_3(%arg0: i32, %arg1: i32, %arg2: memref<2xi32, #tpu.memory_space<smem>>) -> (i32, i32, i32) {
    %c0_i32 = arith.constant 0 : i32
    %c0_i32_0 = arith.constant 0 : i32
    %c0_i32_1 = arith.constant 0 : i32
    %c0_i32_2 = arith.constant 0 : i32
    return %c0_i32, %c0_i32_0, %c0_i32_1 : i32, i32, i32
  }
  func.func @transform_4(%arg0: i32, %arg1: i32, %arg2: memref<2xi32, #tpu.memory_space<smem>>) -> (i32, i32, i32) {
    %c0_i32 = arith.constant 0 : i32
    %c0_i32_0 = arith.constant 0 : i32
    %c0_i32_1 = arith.constant 0 : i32
    %c0_i32_2 = arith.constant 0 : i32
    return %c0_i32, %c0_i32_0, %c0_i32_1 : i32, i32, i32
  }
  func.func @transform_5(%arg0: i32, %arg1: i32, %arg2: memref<2xi32, #tpu.memory_space<smem>>) -> (i32, i32, i32) {
    %c0_i32 = arith.constant 0 : i32
    %c0_i32_0 = arith.constant 0 : i32
    return %arg0, %arg1, %c0_i32 : i32, i32, i32
  }
}

</mosaic_0001>

<llo_original>
// kernel: tpu_custom_call.1
$region0: #{tpu_custom_call.1}
  #allocation0 [shape = 'u32[]', space=smem, size = 0x4, offset = 0x4, fixed_abs, tag = 'smem constant byte address 0x4 - core index']
  #allocation1 [shape = 'u32[72,128]{1,0:T(1,128)}', space=vmem, size = 0x9000, scoped, tag = 'internal scratch']
  #allocation2 [shape = 'bf16[40,128]{1,0:T(8,128)(2,1)}', space=vmem, size = 0x2800, scoped, tag = 'scratch operand']
  #allocation3 [shape = 'bf16[56,128]{1,0:T(8,128)(2,1)}', space=vmem, size = 0x3800, scoped, tag = 'scratch operand']
  #allocation4 [shape = 'f32[40,128]{1,0:T(8,128)}', space=vmem, size = 0x5000, scoped, tag = 'scratch operand']
  #allocation5 [shape = 's32[1]{0}', space=sflag, size = 0x4, scoped, tag = 'scratch operand']
  #allocation6 [shape = 's32[1]{0}', space=sflag, size = 0x4, scoped, tag = 'scoped memory for tpu_custom_call.1']
  #allocation7 [shape = 'u8[512]{0}', space=smem, size = 0x200, scoped, tag = 'prefetched SMEM operand 0']
  #allocation17 [shape = 's32[]', space=sflag, size = 0x4, offset = 0, fixed_abs, tag = 'sflag constant byte address 0x0 - dummy sync flag']
  #allocation18 [shape = 's32[]', space=sflag, size = 0x4, offset = 0, fixed_abs, tag = 'sflag constant byte address 0x0 - dummy sync flag']
  #allocation19 [shape = 'u32[]', space=smem, size = 0x4, offset = 0x44, fixed_abs, tag = 'smem constant byte address 0x44 - assertion arg 0']
  #allocation20 [shape = 'u32[]', space=smem, size = 0x4, offset = 0x48, fixed_abs, tag = 'smem constant byte address 0x48 - assertion arg 1']
  %s0 = inlined_call_operand.hbm [shape: s32[2], index: 0, kind: input, shape index: {}]
  %s1 = inlined_call_operand.hbm [shape: bf16[2,48,128], index: 1, kind: input, shape index: {}]
  %s2 = inlined_call_operand.hbm [shape: bf16[5,5,128,128], index: 2, kind: input, shape index: {}]
  %s3 = inlined_call_operand.hbm [shape: f32[5,1,128], index: 3, kind: input, shape index: {}]
  %s4 = inlined_call_operand.hbm [shape: f32[5,1,128], index: 4, kind: input, shape index: {}]
  %s5 = inlined_call_operand.hbm [shape: f32[5,1,128], index: 5, kind: input, shape index: {}]
  %s6 = inlined_call_operand.hbm [shape: f32[2,16,128], index: 6, kind: output, shape index: {}]
  %s7 = sld [smem:[#allocation0]]
  $region69: #{tpu_custom_call.1} parent=0
    _
  %s9 = ssub.s32 1, %s7
  %s10 = scalar_select 0, %s9, %s7
  %s12 = sshll.u32 %s0, 4
  %s13 = int_to_ptr.hbm [resolvable:$true] %s12
  %15 = dma.hbm_to_smem %s13, 16, [#allocation7], [#allocation6]
  %17 = dma.done [#allocation6], 16
  %18 = sfence
  $region1: #{tpu_custom_call.1} parent=0
    #allocation8 [shape = 'u8[819200]{0}', space=vmem, size = 0xc8000, scoped, tag = 'input window, operand 2, single buffered']
    #allocation9 [shape = 's32[2]{0}', space=sflag, size = 0x8, scoped, tag = 'scoped memory for tpu_custom_call.1']
    #allocation10 [shape = 's32[2]{0}', space=sflag, size = 0x8, scoped, tag = 'scoped memory for tpu_custom_call.1']
    #allocation11 [shape = 'u8[2560]{0}', space=vmem, size = 0xc00, scoped, tag = 'input window, operand 3, single buffered']
    #allocation12 [shape = 's32[1]{0}', space=sflag, size = 0x4, scoped, tag = 'scoped memory for tpu_custom_call.1']
    #allocation13 [shape = 'u8[2560]{0}', space=vmem, size = 0xc00, scoped, tag = 'input window, operand 4, single buffered']
    #allocation14 [shape = 'u8[2560]{0}', space=vmem, size = 0xc00, scoped, tag = 'input window, operand 5, single buffered']
    #allocation15 [shape = 's32[1]{0}', space=sflag, size = 0x4, scoped, tag = 'scoped memory for tpu_custom_call.1']
    #allocation16 [shape = 'u8[8192]{0}', space=vmem, size = 0x2000, scoped, tag = 'output window, operand 0']
    %19 = vsyncpa [#allocation9], 0
    %20 = vsyncpa [#allocation12], 0
    %21 = vsyncpa [#allocation15], 0
    %22 = vsyncpa [#allocation10], 0
    %s23 = scalar_lea.sflag [#allocation10], 1
    %24 = vsyncpa %s23, 0
    loop: start=0, step=1, limit=6
    $region2: #{tpu_custom_call.1} parent=1 // loop_pre_header
      _
    $region3: #{tpu_custom_call.1} parent=1 // loop_header
      %s26 = sphi 0, %s30
      %p27 = scmp.ge.s32.totalorder %s26, 6
      %s33 = sphi 0, %s45
      %s34 = sphi 0, %s41
      %s35 = sphi 0, %s33
      %s36 = sphi 0, %s34
      %s37 = sphi 0, %s35
      %s38 = sphi 0, %s36
      %s46 = sphi 0, %s46
      %s48 = sphi 0, %s46
      %s49 = sphi 0, %s48
      %s63 = sphi 0, %s49
      %s67 = sphi 0, %s67
      %s69 = sphi 0, %s67
      %s70 = sphi 0, %s69
      %s84 = sphi 0, %s70
      %s88 = sphi 0, %s88
      %s90 = sphi 0, %s88
      %s91 = sphi 0, %s90
      %s105 = sphi 0, %s91
      %s109 = sphi 0, %s109
      %s111 = sphi 0, %s109
      %s112 = sphi 0, %s111
      %s126 = sphi 0, %s112
      %s134 = sphi 0, %s136
      %s137 = sphi 0, %s134
      %s138 = sphi 0, %s137
      %s154 = sphi 0, %s138
    $region4: #{tpu_custom_call.1} parent=1 // loop_header_branch
      %29 = sbr.rel (%p27) target = $region8
    $region5: #{tpu_custom_call.1} parent=1 // loop_body
      %s31 = ssub.s32 %s26, 1
      %s32 = ssub.s32 %s26, 2
      %s39 = sadd.s32 1, %s34
      %p40 = scmp.ge.s32.totalorder %s39, 2
      %s41 = scalar_select %p40, 0, %s39
      %s42 = sadd.s32 1, %s33
      %s43 = scalar_select %p40, %s42, %s33
      %p44 = scmp.ge.s32.totalorder %s43, 2
      %s45 = scalar_select %p44, 0, %s43
      %s47 = sadd.s32 %s46, 1
      %p50 = scmp.eq.s32.totalorder %s26, 3
      %p51 = scmp.ne.s32.totalorder %s46, %s48
      %p52 = scmp.eq.s32.totalorder %s26, 0
      %p53 = por %p51, %p52
      %p54 = scmp.ne.s32.totalorder %s46, %s48
      %p55 = scmp.eq.s32.totalorder %s31, 3
      %p56 = por %p54, %p55
      %p57 = scmp.ne.s32.totalorder %s48, %s49
      %p58 = scmp.eq.s32.totalorder %s31, 0
      %p59 = por %p57, %p58
      %p60 = scmp.ne.s32.totalorder %s48, %s49
      %p61 = scmp.eq.s32.totalorder %s32, 3
      %p62 = por %p60, %p61
      %p64 = scmp.ne.s32.totalorder %s49, %s63
      %p65 = scmp.eq.s32.totalorder %s32, 0
      %p66 = por %p64, %p65
      %s68 = sadd.s32 %s67, 1
      %p71 = scmp.eq.s32.totalorder %s26, 3
      %p72 = scmp.ne.s32.totalorder %s67, %s69
      %p73 = scmp.eq.s32.totalorder %s26, 0
      %p74 = por %p72, %p73
      %p75 = scmp.ne.s32.totalorder %s67, %s69
      %p76 = scmp.eq.s32.totalorder %s31, 3
      %p77 = por %p75, %p76
      %p78 = scmp.ne.s32.totalorder %s69, %s70
      %p79 = scmp.eq.s32.totalorder %s31, 0
      %p80 = por %p78, %p79
      %p81 = scmp.ne.s32.totalorder %s69, %s70
      %p82 = scmp.eq.s32.totalorder %s32, 3
      %p83 = por %p81, %p82
      %p85 = scmp.ne.s32.totalorder %s70, %s84
      %p86 = scmp.eq.s32.totalorder %s32, 0
      %p87 = por %p85, %p86
      %s89 = sadd.s32 %s88, 1
      %p92 = scmp.eq.s32.totalorder %s26, 3
      %p93 = scmp.ne.s32.totalorder %s88, %s90
      %p94 = scmp.eq.s32.totalorder %s26, 0
      %p95 = por %p93, %p94
      %p96 = scmp.ne.s32.totalorder %s88, %s90
      %p97 = scmp.eq.s32.totalorder %s31, 3
      %p98 = por %p96, %p97
      %p99 = scmp.ne.s32.totalorder %s90, %s91
      %p100 = scmp.eq.s32.totalorder %s31, 0
      %p101 = por %p99, %p100
      %p102 = scmp.ne.s32.totalorder %s90, %s91
      %p103 = scmp.eq.s32.totalorder %s32, 3
      %p104 = por %p102, %p103
      %p106 = scmp.ne.s32.totalorder %s91, %s105
      %p107 = scmp.eq.s32.totalorder %s32, 0
      %p108 = por %p106, %p107
      %s110 = sadd.s32 %s109, 1
      %p113 = scmp.eq.s32.totalorder %s26, 3
      %p114 = scmp.ne.s32.totalorder %s109, %s111
      %p115 = scmp.eq.s32.totalorder %s26, 0
      %p116 = por %p114, %p115
      %p117 = scmp.ne.s32.totalorder %s109, %s111
      %p118 = scmp.eq.s32.totalorder %s31, 3
      %p119 = por %p117, %p118
      %p120 = scmp.ne.s32.totalorder %s111, %s112
      %p121 = scmp.eq.s32.totalorder %s31, 0
      %p122 = por %p120, %p121
      %p123 = scmp.ne.s32.totalorder %s111, %s112
      %p124 = scmp.eq.s32.totalorder %s32, 3
      %p125 = por %p123, %p124
      %p127 = scmp.ne.s32.totalorder %s112, %s126
      %p128 = scmp.eq.s32.totalorder %s32, 0
      %p129 = por %p127, %p128
      %s130 = ssub.s32 %s33, %s45
      %s131 = ssub.s32 %s34, %s41
      %s132 = sor.u32 %s130, %s131
      %p133 = scmp.eq.s32.totalorder %s132, 0
      %s135 = sadd.s32 %s134, 1
      %s136 = scalar_select %p133, %s134, %s135
      %p139 = pneg %p133
      %p140 = scmp.eq.s32.totalorder %s26, 3
      %p141 = por %p139, %p140
      %p142 = scmp.ne.s32.totalorder %s134, %s137
      %p143 = scmp.eq.s32.totalorder %s26, 0
      %p144 = por %p142, %p143
      %p145 = scmp.ne.s32.totalorder %s134, %s137
      %p146 = scmp.eq.s32.totalorder %s31, 3
      %p147 = por %p145, %p146
      %p148 = scmp.ne.s32.totalorder %s137, %s138
      %p149 = scmp.eq.s32.totalorder %s31, 0
      %p150 = por %p148, %p149
      %p151 = scmp.ne.s32.totalorder %s137, %s138
      %p152 = scmp.eq.s32.totalorder %s32, 3
      %p153 = por %p151, %p152
      %p155 = scmp.ne.s32.totalorder %s138, %s154
      %p156 = scmp.eq.s32.totalorder %s32, 0
      %p157 = por %p155, %p156
      %p158 = scmp.le.s32.totalorder 1, %s26
      %p159 = scmp.lt.s32.totalorder %s26, 5
      %p160 = pnand %p158, %p159
      %p161 = pneg %p160
      // Predicated region
      $region9: #{tpu_custom_call.1} parent=5 // pred_check
        _
      $region10: #{tpu_custom_call.1} parent=5 // pred_check_branch
        %163 = sbr.rel (%p160) target = $region12
      $region11: #{tpu_custom_call.1} parent=5 // pred_region
        %s164 = ssub.s32 %s26, 1
        // Predicated region
        $region13: #{tpu_custom_call.1} parent=11 // pred_check
          %p165 = pneg %p59
        $region14: #{tpu_custom_call.1} parent=11 // pred_check_branch
          %167 = sbr.rel (%p165) target = $region16
        $region15: #{tpu_custom_call.1} parent=11 // pred_region
          %169 = vsyncadd [#allocation9], 0
          %s170 = sshll.u32 %s2, 4
          %s171 = int_to_ptr.hbm [resolvable:$true] %s170
          %s172 = sshll.u32 [#allocation8], 4
          %s173 = int_to_ptr.vmem [resolvable:$true] %s172
          %178 = dma.hbm_to_vmem [thread:$0]  %s171, 25600, %s173, [#allocation9], 64, 64, 4
        $region16: #{tpu_custom_call.1} parent=11 // pred_fallthru
          _
        // Predicated region
        $region17: #{tpu_custom_call.1} parent=11 // pred_check
          %p179 = pneg %p80
        $region18: #{tpu_custom_call.1} parent=11 // pred_check_branch
          %181 = sbr.rel (%p179) target = $region20
        $region19: #{tpu_custom_call.1} parent=11 // pred_region
          %183 = vsyncadd [#allocation12], 0
          %s184 = sshll.u32 %s3, 4
          %s185 = int_to_ptr.hbm [resolvable:$true] %s184
          %s186 = sshll.u32 [#allocation11], 4
          %s187 = int_to_ptr.vmem [resolvable:$true] %s186
          %192 = dma.hbm_to_vmem [thread:$0]  %s185, 80, %s187, [#allocation12], 16, 16, 1
        $region20: #{tpu_custom_call.1} parent=11 // pred_fallthru
          _
        // Predicated region
        $region21: #{tpu_custom_call.1} parent=11 // pred_check
          %p193 = pneg %p101
        $region22: #{tpu_custom_call.1} parent=11 // pred_check_branch
          %195 = sbr.rel (%p193) target = $region24
        $region23: #{tpu_custom_call.1} parent=11 // pred_region
          %197 = vsyncadd [#allocation12], 0
          %s198 = sshll.u32 %s4, 4
          %s199 = int_to_ptr.hbm [resolvable:$true] %s198
          %s200 = sshll.u32 [#allocation13], 4
          %s201 = int_to_ptr.vmem [resolvable:$true] %s200
          %206 = dma.hbm_to_vmem [thread:$0]  %s199, 80, %s201, [#allocation12], 16, 16, 1
        $region24: #{tpu_custom_call.1} parent=11 // pred_fallthru
          _
        // Predicated region
        $region25: #{tpu_custom_call.1} parent=11 // pred_check
          %p207 = pneg %p122
        $region26: #{tpu_custom_call.1} parent=11 // pred_check_branch
          %209 = sbr.rel (%p207) target = $region28
        $region27: #{tpu_custom_call.1} parent=11 // pred_region
          %211 = vsyncadd [#allocation15], 0
          %s212 = sshll.u32 %s5, 4
          %s213 = int_to_ptr.hbm [resolvable:$true] %s212
          %s214 = sshll.u32 [#allocation14], 4
          %s215 = int_to_ptr.vmem [resolvable:$true] %s214
          %220 = dma.hbm_to_vmem [thread:$0]  %s213, 80, %s215, [#allocation15], 16, 16, 1
        $region28: #{tpu_custom_call.1} parent=11 // pred_fallthru
          _
      $region12: #{tpu_custom_call.1} parent=5 // pred_fallthru
        _
      %p221 = scmp.lt.s32.totalorder %s26, 4
      // Predicated region
      $region29: #{tpu_custom_call.1} parent=5 // pred_check
        %p222 = pneg %p221
      $region30: #{tpu_custom_call.1} parent=5 // pred_check_branch
        %224 = sbr.rel (%p222) target = $region32
      $region31: #{tpu_custom_call.1} parent=5 // pred_region
        _
      $region32: #{tpu_custom_call.1} parent=5 // pred_fallthru
        _
      %p225 = scmp.le.s32.totalorder 1, %s26
      %p226 = scmp.lt.s32.totalorder %s26, 5
      %p227 = pnand %p225, %p226
      %p228 = pneg %p227
      // Predicated region
      $region33: #{tpu_custom_call.1} parent=5 // pred_check
        _
      $region34: #{tpu_custom_call.1} parent=5 // pred_check_branch
        %230 = sbr.rel (%p227) target = $region36
      $region35: #{tpu_custom_call.1} parent=5 // pred_region
        %s231 = ssub.s32 %s26, 1
        // Predicated region
        $region37: #{tpu_custom_call.1} parent=35 // pred_check
          %p232 = pneg %p59
        $region38: #{tpu_custom_call.1} parent=35 // pred_check_branch
          %234 = sbr.rel (%p232) target = $region40
        $region39: #{tpu_custom_call.1} parent=35 // pred_region
          %236 = dma.done [#allocation9], 25600
        $region40: #{tpu_custom_call.1} parent=35 // pred_fallthru
          _
        // Predicated region
        $region41: #{tpu_custom_call.1} parent=35 // pred_check
          %p237 = pneg %p80
        $region42: #{tpu_custom_call.1} parent=35 // pred_check_branch
          %239 = sbr.rel (%p237) target = $region44
        $region43: #{tpu_custom_call.1} parent=35 // pred_region
          %241 = dma.done [#allocation12], 80
        $region44: #{tpu_custom_call.1} parent=35 // pred_fallthru
          _
        // Predicated region
        $region45: #{tpu_custom_call.1} parent=35 // pred_check
          %p242 = pneg %p101
        $region46: #{tpu_custom_call.1} parent=35 // pred_check_branch
          %244 = sbr.rel (%p242) target = $region48
        $region47: #{tpu_custom_call.1} parent=35 // pred_region
          %246 = dma.done [#allocation12], 80
        $region48: #{tpu_custom_call.1} parent=35 // pred_fallthru
          _
        // Predicated region
        $region49: #{tpu_custom_call.1} parent=35 // pred_check
          %p247 = pneg %p122
        $region50: #{tpu_custom_call.1} parent=35 // pred_check_branch
          %249 = sbr.rel (%p247) target = $region52
        $region51: #{tpu_custom_call.1} parent=35 // pred_region
          %251 = dma.done [#allocation15], 80
        $region52: #{tpu_custom_call.1} parent=35 // pred_fallthru
          _
        %p252 = pneg %p59
        %p253 = pneg %p56
        %p254 = pneg %p80
        %p255 = pneg %p77
        %p256 = pneg %p101
        %p257 = pneg %p98
        %p258 = pneg %p122
        %p259 = pneg %p119
        %p260 = pneg %p150
        %p261 = pneg %p147
        %s262 = sand.u32 %s137, 1
        %s263 = scalar_lea.sflag [#allocation10], %s262
        %s264 = sand.u32 %s137, 1
        %s265 = smul.addr %s264, 8
        %s266 = scalar_lea.vmem [#allocation16], %s265
        %s268 = smul.u32 %s36, 8
        %s269 = sshra.s32 %s268, 3
        %s270 = sand.u32 %s268, 7
        %s271 = smul.u32 %s35, 6
        %s272 = sadd.s32 %s269, %s271
        %s273 = smul.addr %s272, 4
        %s274 = scalar_lea.hbm %s1, %s273
        // Predicated region
        $region53: #{tpu_custom_call.1} parent=35 // pred_check
          _
        $region54: #{tpu_custom_call.1} parent=35 // pred_check_branch
          %276 = sbr.rel target = $region56
        $region55: #{tpu_custom_call.1} parent=35 // pred_region
          %277 = sst [smem:[#allocation19]] [#allocation18]
          %278 = sst [smem:[#allocation20]] [#allocation17]
        $region56: #{tpu_custom_call.1} parent=35 // pred_fallthru
          _
        %280 = shalt.err (0)
        %s282 = sshll.u32 %s274, 4
        %s283 = int_to_ptr.hbm [resolvable:$true] %s282
        %s284 = sshll.u32 [#allocation2], 4
        %s285 = int_to_ptr.vmem [resolvable:$true] %s284
        %287 = dma.hbm_to_vmem [thread:$0]  %s283, 320, %s285, [#allocation5]
        %s288 = ssub.s32 %s268, 16
        %v289 = vlaneseq
        %v290 = vshrl.u32 %v289, 7
        %v291 = vadd.s32 %v290, 8
        %v292 = vadd.s32 %v290, 16
        %v293 = vadd.s32 %v290, 24
        %v294 = vadd.s32 %v290, 32
        %v295 = vstv %s288
        %v296 = vadd.s32 %v295, %v290
        %v297 = vadd.s32 %v295, %v291
        %v298 = vadd.s32 %v295, %v292
        %v299 = vadd.s32 %v295, %v293
        %v300 = vadd.s32 %v295, %v294
        %vm301 = vcmp.ge.s32.totalorder %v296, 0
        %vm302 = vcmp.ge.s32.totalorder %v297, 0
        %vm303 = vcmp.ge.s32.totalorder %v298, 0
        %vm304 = vcmp.ge.s32.totalorder %v299, 0
        %vm305 = vcmp.ge.s32.totalorder %v300, 0
        %vm306 = vcmp.lt.s32.totalorder %v296, 16
        %vm307 = vcmp.lt.s32.totalorder %v297, 16
        %vm308 = vcmp.lt.s32.totalorder %v298, 16
        %vm309 = vcmp.lt.s32.totalorder %v299, 16
        %vm310 = vcmp.lt.s32.totalorder %v300, 16
        %vm311 = vmand %vm301, %vm306
        %vm312 = vmand %vm302, %vm307
        %vm313 = vmand %vm303, %vm308
        %vm314 = vmand %vm304, %vm309
        %vm315 = vmand %vm305, %vm310
        %s316 = sld [smem:[#allocation7 + %s35]]
        %v317 = vstv %s316
        %vm318 = vcmp.lt.s32.totalorder %v296, %v317
        %vm319 = vcmp.lt.s32.totalorder %v297, %v317
        %vm320 = vcmp.lt.s32.totalorder %v298, %v317
        %vm321 = vcmp.lt.s32.totalorder %v299, %v317
        %vm322 = vcmp.lt.s32.totalorder %v300, %v317
        %vm323 = vmand %vm311, %vm318
        %vm324 = vmand %vm312, %vm319
        %vm325 = vmand %vm313, %vm320
        %vm326 = vmand %vm314, %vm321
        %vm327 = vmand %vm315, %vm322
        %v328 = vsel %vm323, 1, 0
        %v329 = vsel %vm324, 1, 0
        %v330 = vsel %vm325, 1, 0
        %v331 = vsel %vm326, 1, 0
        %v332 = vsel %vm327, 1, 0
        %v333 = vcvt.s32.f32 %v328
        %v334 = vcvt.s32.f32 %v329
        %v335 = vcvt.s32.f32 %v330
        %v336 = vcvt.s32.f32 %v331
        %v337 = vcvt.s32.f32 %v332
        %v338 = vsel %vm311, 1, 0
        %v339 = vsel %vm312, 1, 0
        %v340 = vsel %vm313, 1, 0
        %v341 = vsel %vm314, 1, 0
        %v342 = vsel %vm315, 1, 0
        %v343 = vcvt.s32.f32 %v338
        %v344 = vcvt.s32.f32 %v339
        %v345 = vcvt.s32.f32 %v340
        %v346 = vcvt.s32.f32 %v341
        %v347 = vcvt.s32.f32 %v342
        %348 = vst [vmem:[#allocation3] sm:$0xf] 0
        %349 = vst [vmem:[#allocation3 + $0x18] sm:$0xf] 0
        %s350 = smul.u32 4, 5
        %s351 = smul.u32 %s350, 1
        %s352 = sshll.u32 %s351, 4
        %353 = dma.done [#allocation5], %s352
        %v354 = vld [vmem:[#allocation2] sm:$0xf]
        %v355 = vld [vmem:[#allocation2 + $0x4] sm:$0xf]
        %v356 = vld [vmem:[#allocation2 + $0x8] sm:$0xf]
        %v357 = vld [vmem:[#allocation2 + $0xc] sm:$0xf]
        %v358 = vld [vmem:[#allocation2 + $0x10] sm:$0xf]
        %v359 = vunpack.c.l.bf16 %v354
        %v360 = vunpack.c.l.bf16 %v355
        %v361 = vunpack.c.l.bf16 %v356
        %v362 = vunpack.c.l.bf16 %v357
        %v363 = vunpack.c.l.bf16 %v358
        %v364 = vmul.f32 %v359, %v333
        %v365 = vmul.f32 %v360, %v334
        %v366 = vmul.f32 %v361, %v335
        %v367 = vmul.f32 %v362, %v336
        %v368 = vmul.f32 %v363, %v337
        %369 = vst [vmem:[#allocation4] sm:$0xff] %v364
        %370 = vst [vmem:[#allocation4 + $0x8] sm:$0xff] %v365
        %371 = vst [vmem:[#allocation4 + $0x10] sm:$0xff] %v366
        %372 = vst [vmem:[#allocation4 + $0x18] sm:$0xff] %v367
        %373 = vst [vmem:[#allocation4 + $0x20] sm:$0xff] %v368
        %v374 = vld [vmem:[#allocation4] sm:$0xff]
        %v375 = vld [vmem:[#allocation4 + $0x8] sm:$0xff]
        %v376 = vld [vmem:[#allocation4 + $0x10] sm:$0xff]
        %v377 = vld [vmem:[#allocation4 + $0x18] sm:$0xff]
        %v378 = vld [vmem:[#allocation4 + $0x20] sm:$0xff]
        %v379 = vmul.f32 %v374, %v343
        %v380 = vmul.f32 %v375, %v344
        %v381 = vmul.f32 %v376, %v345
        %v382 = vmul.f32 %v377, %v346
        %v383 = vmul.f32 %v378, %v347
        %v384 = vpack.c.bf16 %v379, %v379
        %v385 = vpack.c.bf16 %v380, %v380
        %v386 = vpack.c.bf16 %v381, %v381
        %v387 = vpack.c.bf16 %v382, %v382
        %v388 = vpack.c.bf16 %v383, %v383
        %389 = vst [vmem:[#allocation3 + $0x4] sm:$0xf] %v384
        %390 = vst [vmem:[#allocation3 + $0x8] sm:$0xf] %v385
        %391 = vst [vmem:[#allocation3 + $0xc] sm:$0xf] %v386
        %392 = vst [vmem:[#allocation3 + $0x10] sm:$0xf] %v387
        %393 = vst [vmem:[#allocation3 + $0x14] sm:$0xf] %v388
        %v394 = vld [vmem:[#allocation3] sm:$0x8]
        %v395 = vld [vmem:[#allocation3 + $0x4] sm:$0xf]
        %v396 = vld [vmem:[#allocation3 + $0x8] sm:$0xf]
        %v397 = vld [vmem:[#allocation3 + $0xc] sm:$0xf]
        %v398 = vld [vmem:[#allocation3 + $0x10] sm:$0xf]
        %v399 = vld [vmem:[#allocation3 + $0x14] sm:$0x7]
        %v400 = vld [vmem:[#allocation8] sm:$0xf]
        %v401 = vld [vmem:[#allocation8 + $0x4] sm:$0xf]
        %v402 = vld [vmem:[#allocation8 + $0x8] sm:$0xf]
        %v403 = vld [vmem:[#allocation8 + $0xc] sm:$0xf]
        %v404 = vld [vmem:[#allocation8 + $0x10] sm:$0xf]
        %v405 = vld [vmem:[#allocation8 + $0x14] sm:$0xf]
        %v406 = vld [vmem:[#allocation8 + $0x18] sm:$0xf]
        %v407 = vld [vmem:[#allocation8 + $0x1c] sm:$0xf]
        %v408 = vld [vmem:[#allocation8 + $0x20] sm:$0xf]
        %v409 = vld [vmem:[#allocation8 + $0x24] sm:$0xf]
        %v410 = vld [vmem:[#allocation8 + $0x28] sm:$0xf]
        %v411 = vld [vmem:[#allocation8 + $0x2c] sm:$0xf]
        %v412 = vld [vmem:[#allocation8 + $0x30] sm:$0xf]
        %v413 = vld [vmem:[#allocation8 + $0x34] sm:$0xf]
        %v414 = vld [vmem:[#allocation8 + $0x38] sm:$0xf]
        %v415 = vld [vmem:[#allocation8 + $0x3c] sm:$0xf]
        %v416 = vld [vmem:[#allocation3 + $0x14] sm:$0xf]
        %s417 = scalar_lea.vmem [#allocation8], 64
        %v418 = vld [vmem:[%s417] sm:$0xf]
        %v419 = vld [vmem:[%s417 + $0x4] sm:$0xf]
        %v420 = vld [vmem:[%s417 + $0x8] sm:$0xf]
        %v421 = vld [vmem:[%s417 + $0xc] sm:$0xf]
        %v422 = vld [vmem:[%s417 + $0x10] sm:$0xf]
        %v423 = vld [vmem:[%s417 + $0x14] sm:$0xf]
        %v424 = vld [vmem:[%s417 + $0x18] sm:$0xf]
        %v425 = vld [vmem:[%s417 + $0x1c] sm:$0xf]
        %v426 = vld [vmem:[%s417 + $0x20] sm:$0xf]
        %v427 = vld [vmem:[%s417 + $0x24] sm:$0xf]
        %v428 = vld [vmem:[%s417 + $0x28] sm:$0xf]
        %v429 = vld [vmem:[%s417 + $0x2c] sm:$0xf]
        %v430 = vld [vmem:[%s417 + $0x30] sm:$0xf]
        %v431 = vld [vmem:[%s417 + $0x34] sm:$0xf]
        %v432 = vld [vmem:[%s417 + $0x38] sm:$0xf]
        %v433 = vld [vmem:[%s417 + $0x3c] sm:$0xf]
        %v440 = vunpack.c.l.b16 %v394
        %v441 = vunpack.c.l.b16 %v395
        %v442 = vunpack.c.l.b16 %v396
        %v443 = vunpack.c.l.b16 %v397
        %v444 = vunpack.c.l.b16 %v398
        %v445 = vunpack.c.l.b16 %v416
        %v446 = vpack.c.b16 %v441, %v440
        %v447 = vpack.c.b16 %v443, %v442
        %v448 = vpack.c.b16 %v445, %v444
        %vm449 = vsmask.f32 4352
        %v451 = vshrl.u32 %v446, 16
        %v453 = vrot.slane %v451, 3
        %v454 = vshll.u32 %v446, 16
        %v456 = vrot.slane %v454, 4
        %v457 = vor.u32 %v453, %v456
        %v459 = vshrl.u32 %v447, 16
        %v461 = vrot.slane %v459, 3
        %v462 = vshll.u32 %v447, 16
        %v464 = vrot.slane %v462, 4
        %v465 = vor.u32 %v461, %v464
        %v466 = vsel %vm449, %v457, %v465
        %v468 = vshrl.u32 %v448, 16
        %v470 = vrot.slane %v468, 3
        %v471 = vshll.u32 %v448, 16
        %v473 = vrot.slane %v471, 4
        %v474 = vor.u32 %v470, %v473
        %v475 = vsel %vm449, %v465, %v474
        %v495 = vunpack.c.l.b16 %v418
        %v496 = vunpack.c.l.b16 %v419
        %v497 = vunpack.c.l.b16 %v420
        %v498 = vunpack.c.l.b16 %v421
        %v499 = vunpack.c.l.b16 %v422
        %v500 = vunpack.c.l.b16 %v423
        %v501 = vunpack.c.l.b16 %v424
        %v502 = vunpack.c.l.b16 %v425
        %v503 = vunpack.c.l.b16 %v426
        %v504 = vunpack.c.l.b16 %v427
        %v505 = vunpack.c.l.b16 %v428
        %v506 = vunpack.c.l.b16 %v429
        %v507 = vunpack.c.l.b16 %v430
        %v508 = vunpack.c.l.b16 %v431
        %v509 = vunpack.c.l.b16 %v432
        %v510 = vunpack.c.l.b16 %v433
        %v511 = vpack.c.b16 %v496, %v495
        %v512 = vpack.c.b16 %v498, %v497
        %v513 = vpack.c.b16 %v500, %v499
        %v514 = vpack.c.b16 %v502, %v501
        %v515 = vpack.c.b16 %v504, %v503
        %v516 = vpack.c.b16 %v506, %v505
        %v517 = vpack.c.b16 %v508, %v507
        %v518 = vpack.c.b16 %v510, %v509
        %527 = vmatpush.bf16.msra.mxu0 %v518
        %528 = vmatpush.bf16.msra.mxu0 %v517
        %529 = vmatpush.bf16.msra.mxu0 %v516
        %530 = vmatpush.bf16.msra.mxu0 %v515
        %531 = vmatpush.bf16.msra.mxu0 %v514
        %532 = vmatpush.bf16.msra.mxu0 %v513
        %533 = vmatpush.bf16.msra.mxu0 %v512
        %534 = vmatpush.bf16.msra.mxu0 %v511
        %535 = vmatmul.bf16.gmra.mxu0 %v466
        %v536 = vpop.f32.mrf.mxu0
        %v537 = vadd.f32 0.0, %v536
        %v538 = vpop.f32.mrf.mxu0
        %v539 = vadd.f32 0.0, %v538
        %540 = vmatmul.bf16.gmra.mxu0 %v475
        %v541 = vpop.f32.mrf.mxu0
        %v542 = vadd.f32 0.0, %v541
        %v543 = vpop.f32.mrf.mxu0
        %v544 = vadd.f32 0.0, %v543
        %545 = vmatmul.bf16.gmra.mxu0 %v474
        %v546 = vpop.f32.mrf.mxu0
        %v547 = vadd.f32 0.0, %v546
        %v548 = vpop.f32.mrf.mxu0
        %549 = vdwg.mxu0
        %v551 = vunpack.c.l.b16 %v399
        %v552 = vpack.c.b16 %v551, %v444
        %vm553 = vcmask 1044480
        %v554 = vrot.slane %v446, 3
        %v555 = vrot.slane %v447, 3
        %v556 = vsel %vm553, %v554, %v555
        %v557 = vrot.slane %v552, 3
        %v558 = vsel %vm553, %v555, %v557
        %v578 = vunpack.c.l.b16 %v400
        %v579 = vunpack.c.l.b16 %v401
        %v580 = vunpack.c.l.b16 %v402
        %v581 = vunpack.c.l.b16 %v403
        %v582 = vunpack.c.l.b16 %v404
        %v583 = vunpack.c.l.b16 %v405
        %v584 = vunpack.c.l.b16 %v406
        %v585 = vunpack.c.l.b16 %v407
        %v586 = vunpack.c.l.b16 %v408
        %v587 = vunpack.c.l.b16 %v409
        %v588 = vunpack.c.l.b16 %v410
        %v589 = vunpack.c.l.b16 %v411
        %v590 = vunpack.c.l.b16 %v412
        %v591 = vunpack.c.l.b16 %v413
        %v592 = vunpack.c.l.b16 %v414
        %v593 = vunpack.c.l.b16 %v415
        %v594 = vpack.c.b16 %v579, %v578
        %v595 = vpack.c.b16 %v581, %v580
        %v596 = vpack.c.b16 %v583, %v582
        %v597 = vpack.c.b16 %v585, %v584
        %v598 = vpack.c.b16 %v587, %v586
        %v599 = vpack.c.b16 %v589, %v588
        %v600 = vpack.c.b16 %v591, %v590
        %v601 = vpack.c.b16 %v593, %v592
        %610 = vmatpush.bf16.msra.mxu0 %v601
        %611 = vmatpush.bf16.msra.mxu0 %v600
        %612 = vmatpush.bf16.msra.mxu0 %v599
        %613 = vmatpush.bf16.msra.mxu0 %v598
        %614 = vmatpush.bf16.msra.mxu0 %v597
        %615 = vmatpush.bf16.msra.mxu0 %v596
        %616 = vmatpush.bf16.msra.mxu0 %v595
        %617 = vmatpush.bf16.msra.mxu0 %v594
        %618 = vmatmul.bf16.gmra.mxu0 %v556
        %v619 = vpop.f32.mrf.mxu0
        %v620 = vadd.f32 %v537, %v619
        %v621 = vpop.f32.mrf.mxu0
        %v622 = vadd.f32 %v539, %v621
        %623 = vmatmul.bf16.gmra.mxu0 %v558
        %v624 = vpop.f32.mrf.mxu0
        %v625 = vadd.f32 %v542, %v624
        %v626 = vpop.f32.mrf.mxu0
        %v627 = vadd.f32 %v544, %v626
        %628 = vmatmul.bf16.gmra.mxu0 %v557
        %v629 = vpop.f32.mrf.mxu0
        %v630 = vadd.f32 %v547, %v629
        %v631 = vpop.f32.mrf.mxu0
        %632 = vdwg.mxu0
        %s633 = scalar_lea.vmem [#allocation8], 128
        %v634 = vld [vmem:[%s633] sm:$0xf]
        %v635 = vld [vmem:[%s633 + $0x4] sm:$0xf]
        %v636 = vld [vmem:[%s633 + $0x8] sm:$0xf]
        %v637 = vld [vmem:[%s633 + $0xc] sm:$0xf]
        %v638 = vld [vmem:[%s633 + $0x10] sm:$0xf]
        %v639 = vld [vmem:[%s633 + $0x14] sm:$0xf]
        %v640 = vld [vmem:[%s633 + $0x18] sm:$0xf]
        %v641 = vld [vmem:[%s633 + $0x1c] sm:$0xf]
        %v642 = vld [vmem:[%s633 + $0x20] sm:$0xf]
        %v643 = vld [vmem:[%s633 + $0x24] sm:$0xf]
        %v644 = vld [vmem:[%s633 + $0x28] sm:$0xf]
        %v645 = vld [vmem:[%s633 + $0x2c] sm:$0xf]
        %v646 = vld [vmem:[%s633 + $0x30] sm:$0xf]
        %v647 = vld [vmem:[%s633 + $0x34] sm:$0xf]
        %v648 = vld [vmem:[%s633 + $0x38] sm:$0xf]
        %v649 = vld [vmem:[%s633 + $0x3c] sm:$0xf]
        %v650 = vpack.c.b16 %v442, %v441
        %v651 = vpack.c.b16 %v444, %v443
        %v652 = vpack.c.b16 %v445, %v445
        %v672 = vunpack.c.l.b16 %v634
        %v673 = vunpack.c.l.b16 %v635
        %v674 = vunpack.c.l.b16 %v636
        %v675 = vunpack.c.l.b16 %v637
        %v676 = vunpack.c.l.b16 %v638
        %v677 = vunpack.c.l.b16 %v639
        %v678 = vunpack.c.l.b16 %v640
        %v679 = vunpack.c.l.b16 %v641
        %v680 = vunpack.c.l.b16 %v642
        %v681 = vunpack.c.l.b16 %v643
        %v682 = vunpack.c.l.b16 %v644
        %v683 = vunpack.c.l.b16 %v645
        %v684 = vunpack.c.l.b16 %v646
        %v685 = vunpack.c.l.b16 %v647
        %v686 = vunpack.c.l.b16 %v648
        %v687 = vunpack.c.l.b16 %v649
        %v688 = vpack.c.b16 %v673, %v672
        %v689 = vpack.c.b16 %v675, %v674
        %v690 = vpack.c.b16 %v677, %v676
        %v691 = vpack.c.b16 %v679, %v678
        %v692 = vpack.c.b16 %v681, %v680
        %v693 = vpack.c.b16 %v683, %v682
        %v694 = vpack.c.b16 %v685, %v684
        %v695 = vpack.c.b16 %v687, %v686
        %704 = vmatpush.bf16.msra.mxu0 %v695
        %705 = vmatpush.bf16.msra.mxu0 %v694
        %706 = vmatpush.bf16.msra.mxu0 %v693
        %707 = vmatpush.bf16.msra.mxu0 %v692
        %708 = vmatpush.bf16.msra.mxu0 %v691
        %709 = vmatpush.bf16.msra.mxu0 %v690
        %710 = vmatpush.bf16.msra.mxu0 %v689
        %711 = vmatpush.bf16.msra.mxu0 %v688
        %712 = vmatmul.bf16.gmra.mxu0 %v650
        %v713 = vpop.f32.mrf.mxu0
        %v714 = vadd.f32 0.0, %v713
        %v715 = vpop.f32.mrf.mxu0
        %v716 = vadd.f32 0.0, %v715
        %717 = vmatmul.bf16.gmra.mxu0 %v651
        %v718 = vpop.f32.mrf.mxu0
        %v719 = vadd.f32 0.0, %v718
        %v720 = vpop.f32.mrf.mxu0
        %v721 = vadd.f32 0.0, %v720
        %722 = vmatmul.bf16.gmra.mxu0 %v652
        %v723 = vpop.f32.mrf.mxu0
        %v724 = vadd.f32 0.0, %v723
        %v725 = vpop.f32.mrf.mxu0
        %726 = vdwg.mxu0
        %v727 = vadd.f32 %v620, %v714
        %v728 = vadd.f32 %v622, %v716
        %v729 = vadd.f32 %v625, %v719
        %v730 = vadd.f32 %v627, %v721
        %v731 = vadd.f32 %v630, %v724
        %v732 = vld [vmem:[#allocation3 + $0x4] sm:$0xf]
        %v733 = vld [vmem:[#allocation3 + $0x8] sm:$0xf]
        %v734 = vld [vmem:[#allocation3 + $0xc] sm:$0xf]
        %v735 = vld [vmem:[#allocation3 + $0x10] sm:$0xf]
        %v736 = vld [vmem:[#allocation3 + $0x14] sm:$0xf]
        %v737 = vld [vmem:[#allocation3 + $0x18] sm:$0x1]
        %s738 = scalar_lea.vmem [#allocation8], 192
        %v739 = vld [vmem:[%s738] sm:$0xf]
        %v740 = vld [vmem:[%s738 + $0x4] sm:$0xf]
        %v741 = vld [vmem:[%s738 + $0x8] sm:$0xf]
        %v742 = vld [vmem:[%s738 + $0xc] sm:$0xf]
        %v743 = vld [vmem:[%s738 + $0x10] sm:$0xf]
        %v744 = vld [vmem:[%s738 + $0x14] sm:$0xf]
        %v745 = vld [vmem:[%s738 + $0x18] sm:$0xf]
        %v746 = vld [vmem:[%s738 + $0x1c] sm:$0xf]
        %v747 = vld [vmem:[%s738 + $0x20] sm:$0xf]
        %v748 = vld [vmem:[%s738 + $0x24] sm:$0xf]
        %v749 = vld [vmem:[%s738 + $0x28] sm:$0xf]
        %v750 = vld [vmem:[%s738 + $0x2c] sm:$0xf]
        %v751 = vld [vmem:[%s738 + $0x30] sm:$0xf]
        %v752 = vld [vmem:[%s738 + $0x34] sm:$0xf]
        %v753 = vld [vmem:[%s738 + $0x38] sm:$0xf]
        %v754 = vld [vmem:[%s738 + $0x3c] sm:$0xf]
        %v761 = vunpack.c.l.b16 %v732
        %v762 = vunpack.c.l.b16 %v733
        %v763 = vunpack.c.l.b16 %v734
        %v764 = vunpack.c.l.b16 %v735
        %v765 = vunpack.c.l.b16 %v736
        %v766 = vunpack.c.l.b16 %v737
        %v767 = vpack.c.b16 %v762, %v761
        %v768 = vpack.c.b16 %v764, %v763
        %v769 = vpack.c.b16 %v766, %v765
        %vm770 = vsmask.f32 7424
        %v772 = vshrl.u32 %v767, 16
        %v774 = vshll.u32 %v767, 16
        %v776 = vrot.slane %v774, 1
        %v777 = vor.u32 %v772, %v776
        %v779 = vshll.u32 %v768, 16
        %v781 = vrot.slane %v779, 1
        %v782 = vsel %vm770, %v777, %v781
        %v783 = vshrl.u32 %v768, 16
        %v785 = vor.u32 %v783, %v781
        %v787 = vshll.u32 %v769, 16
        %v789 = vrot.slane %v787, 1
        %v790 = vsel %vm770, %v785, %v789
        %v791 = vshrl.u32 %v769, 16
        %v793 = vor.u32 %v791, %v789
        %v813 = vunpack.c.l.b16 %v739
        %v814 = vunpack.c.l.b16 %v740
        %v815 = vunpack.c.l.b16 %v741
        %v816 = vunpack.c.l.b16 %v742
        %v817 = vunpack.c.l.b16 %v743
        %v818 = vunpack.c.l.b16 %v744
        %v819 = vunpack.c.l.b16 %v745
        %v820 = vunpack.c.l.b16 %v746
        %v821 = vunpack.c.l.b16 %v747
        %v822 = vunpack.c.l.b16 %v748
        %v823 = vunpack.c.l.b16 %v749
        %v824 = vunpack.c.l.b16 %v750
        %v825 = vunpack.c.l.b16 %v751
        %v826 = vunpack.c.l.b16 %v752
        %v827 = vunpack.c.l.b16 %v753
        %v828 = vunpack.c.l.b16 %v754
        %v829 = vpack.c.b16 %v814, %v813
        %v830 = vpack.c.b16 %v816, %v815
        %v831 = vpack.c.b16 %v818, %v817
        %v832 = vpack.c.b16 %v820, %v819
        %v833 = vpack.c.b16 %v822, %v821
        %v834 = vpack.c.b16 %v824, %v823
        %v835 = vpack.c.b16 %v826, %v825
        %v836 = vpack.c.b16 %v828, %v827
        %845 = vmatpush.bf16.msra.mxu0 %v836
        %846 = vmatpush.bf16.msra.mxu0 %v835
        %847 = vmatpush.bf16.msra.mxu0 %v834
        %848 = vmatpush.bf16.msra.mxu0 %v833
        %849 = vmatpush.bf16.msra.mxu0 %v832
        %850 = vmatpush.bf16.msra.mxu0 %v831
        %851 = vmatpush.bf16.msra.mxu0 %v830
        %852 = vmatpush.bf16.msra.mxu0 %v829
        %853 = vmatmul.bf16.gmra.mxu0 %v782
        %v854 = vpop.f32.mrf.mxu0
        %v855 = vadd.f32 0.0, %v854
        %v856 = vpop.f32.mrf.mxu0
        %v857 = vadd.f32 0.0, %v856
        %858 = vmatmul.bf16.gmra.mxu0 %v790
        %v859 = vpop.f32.mrf.mxu0
        %v860 = vadd.f32 0.0, %v859
        %v861 = vpop.f32.mrf.mxu0
        %v862 = vadd.f32 0.0, %v861
        %863 = vmatmul.bf16.gmra.mxu0 %v793
        %v864 = vpop.f32.mrf.mxu0
        %v865 = vadd.f32 0.0, %v864
        %v866 = vpop.f32.mrf.mxu0
        %867 = vdwg.mxu0
        %v868 = vadd.f32 %v727, %v855
        %v869 = vadd.f32 %v728, %v857
        %v870 = vadd.f32 %v729, %v860
        %v871 = vadd.f32 %v730, %v862
        %v872 = vadd.f32 %v731, %v865
        %v873 = vld [vmem:[#allocation3 + $0x4] sm:$0xe]
        %s874 = scalar_lea.vmem [#allocation8], 256
        %v875 = vld [vmem:[%s874] sm:$0xf]
        %v876 = vld [vmem:[%s874 + $0x4] sm:$0xf]
        %v877 = vld [vmem:[%s874 + $0x8] sm:$0xf]
        %v878 = vld [vmem:[%s874 + $0xc] sm:$0xf]
        %v879 = vld [vmem:[%s874 + $0x10] sm:$0xf]
        %v880 = vld [vmem:[%s874 + $0x14] sm:$0xf]
        %v881 = vld [vmem:[%s874 + $0x18] sm:$0xf]
        %v882 = vld [vmem:[%s874 + $0x1c] sm:$0xf]
        %v883 = vld [vmem:[%s874 + $0x20] sm:$0xf]
        %v884 = vld [vmem:[%s874 + $0x24] sm:$0xf]
        %v885 = vld [vmem:[%s874 + $0x28] sm:$0xf]
        %v886 = vld [vmem:[%s874 + $0x2c] sm:$0xf]
        %v887 = vld [vmem:[%s874 + $0x30] sm:$0xf]
        %v888 = vld [vmem:[%s874 + $0x34] sm:$0xf]
        %v889 = vld [vmem:[%s874 + $0x38] sm:$0xf]
        %v890 = vld [vmem:[%s874 + $0x3c] sm:$0xf]
        %v892 = vunpack.c.l.b16 %v873
        %v893 = vpack.c.b16 %v762, %v892
        %vm894 = vcmask 1046528
        %v895 = vrot.slane %v893, 1
        %v896 = vrot.slane %v768, 1
        %v897 = vsel %vm894, %v895, %v896
        %v898 = vrot.slane %v769, 1
        %v899 = vsel %vm894, %v896, %v898
        %v919 = vunpack.c.l.b16 %v875
        %v920 = vunpack.c.l.b16 %v876
        %v921 = vunpack.c.l.b16 %v877
        %v922 = vunpack.c.l.b16 %v878
        %v923 = vunpack.c.l.b16 %v879
        %v924 = vunpack.c.l.b16 %v880
        %v925 = vunpack.c.l.b16 %v881
        %v926 = vunpack.c.l.b16 %v882
        %v927 = vunpack.c.l.b16 %v883
        %v928 = vunpack.c.l.b16 %v884
        %v929 = vunpack.c.l.b16 %v885
        %v930 = vunpack.c.l.b16 %v886
        %v931 = vunpack.c.l.b16 %v887
        %v932 = vunpack.c.l.b16 %v888
        %v933 = vunpack.c.l.b16 %v889
        %v934 = vunpack.c.l.b16 %v890
        %v935 = vpack.c.b16 %v920, %v919
        %v936 = vpack.c.b16 %v922, %v921
        %v937 = vpack.c.b16 %v924, %v923
        %v938 = vpack.c.b16 %v926, %v925
        %v939 = vpack.c.b16 %v928, %v927
        %v940 = vpack.c.b16 %v930, %v929
        %v941 = vpack.c.b16 %v932, %v931
        %v942 = vpack.c.b16 %v934, %v933
        %951 = vmatpush.bf16.msra.mxu0 %v942
        %952 = vmatpush.bf16.msra.mxu0 %v941
        %953 = vmatpush.bf16.msra.mxu0 %v940
        %954 = vmatpush.bf16.msra.mxu0 %v939
        %955 = vmatpush.bf16.msra.mxu0 %v938
        %956 = vmatpush.bf16.msra.mxu0 %v937
        %957 = vmatpush.bf16.msra.mxu0 %v936
        %958 = vmatpush.bf16.msra.mxu0 %v935
        %959 = vmatmul.bf16.gmra.mxu0 %v897
        %v960 = vpop.f32.mrf.mxu0
        %v961 = vadd.f32 0.0, %v960
        %v962 = vpop.f32.mrf.mxu0
        %v963 = vadd.f32 0.0, %v962
        %964 = vmatmul.bf16.gmra.mxu0 %v899
        %v965 = vpop.f32.mrf.mxu0
        %v966 = vadd.f32 0.0, %v965
        %v967 = vpop.f32.mrf.mxu0
        %v968 = vadd.f32 0.0, %v967
        %969 = vmatmul.bf16.gmra.mxu0 %v898
        %v970 = vpop.f32.mrf.mxu0
        %v971 = vadd.f32 0.0, %v970
        %v972 = vpop.f32.mrf.mxu0
        %973 = vdwg.mxu0
        %v974 = vadd.f32 %v868, %v961
        %v975 = vadd.f32 %v869, %v963
        %v976 = vadd.f32 %v870, %v966
        %v977 = vadd.f32 %v871, %v968
        %v978 = vadd.f32 %v872, %v971
        %v979 = vld [vmem:[#allocation11] sm:$0x1]
        %v981 = vperm.slane %v979, 0
        %v983 = vadd.f32 %v974, %v981
        %v984 = vadd.f32 %v975, %v981
        %v985 = vadd.f32 %v976, %v981
        %v986 = vadd.f32 %v977, %v981
        %v987 = vadd.f32 %v978, %v981
        %v988 = vmul.f32 %v983, %v333
        %v989 = vmul.f32 %v984, %v334
        %v990 = vmul.f32 %v985, %v335
        %v991 = vmul.f32 %v986, %v336
        %v992 = vmul.f32 %v987, %v337
        %993 = vst [vmem:[#allocation4] sm:$0xff] %v988
        %994 = vst [vmem:[#allocation4 + $0x8] sm:$0xff] %v989
        %995 = vst [vmem:[#allocation4 + $0x10] sm:$0xff] %v990
        %996 = vst [vmem:[#allocation4 + $0x18] sm:$0xff] %v991
        %997 = vst [vmem:[#allocation4 + $0x20] sm:$0xff] %v992
        %v998 = vld [vmem:[#allocation4] sm:$0xff]
        %v999 = vld [vmem:[#allocation4 + $0x8] sm:$0xff]
        %v1000 = vld [vmem:[#allocation4 + $0x10] sm:$0xff]
        %v1001 = vld [vmem:[#allocation4 + $0x18] sm:$0xff]
        %v1002 = vld [vmem:[#allocation4 + $0x20] sm:$0xff]
        %s1003 = scalar_lea.vmem [#allocation13], 1
        %v1004 = vld [vmem:[%s1003] sm:$0x1]
        %v1006 = vperm.slane %v1004, 0
        %v1008 = vmul.f32 %v998, %v1006
        %v1009 = vmul.f32 %v999, %v1006
        %v1010 = vmul.f32 %v1000, %v1006
        %v1011 = vmul.f32 %v1001, %v1006
        %v1012 = vmul.f32 %v1002, %v1006
        %s1013 = scalar_lea.vmem [#allocation14], 1
        %v1014 = vld [vmem:[%s1013] sm:$0x1]
        %v1016 = vperm.slane %v1014, 0
        %v1018 = vadd.f32 %v1008, %v1016
        %v1019 = vadd.f32 %v1009, %v1016
        %v1020 = vadd.f32 %v1010, %v1016
        %v1021 = vadd.f32 %v1011, %v1016
        %v1022 = vadd.f32 %v1012, %v1016
        %v1023 = vtanh.pop %v1018
        %v1024 = vtanh.pop %v1019
        %v1025 = vtanh.pop %v1020
        %v1026 = vtanh.pop %v1021
        %v1027 = vtanh.pop %v1022
        %v1028 = vmul.f32 %v1023, %v343
        %v1029 = vmul.f32 %v1024, %v344
        %v1030 = vmul.f32 %v1025, %v345
        %v1031 = vmul.f32 %v1026, %v346
        %v1032 = vmul.f32 %v1027, %v347
        %v1033 = vpack.c.bf16 %v1028, %v1028
        %v1034 = vpack.c.bf16 %v1029, %v1029
        %v1035 = vpack.c.bf16 %v1030, %v1030
        %v1036 = vpack.c.bf16 %v1031, %v1031
        %v1037 = vpack.c.bf16 %v1032, %v1032
        %1038 = vst [vmem:[#allocation3 + $0x4] sm:$0xf] %v1033
        %1039 = vst [vmem:[#allocation3 + $0x8] sm:$0xf] %v1034
        %1040 = vst [vmem:[#allocation3 + $0xc] sm:$0xf] %v1035
        %1041 = vst [vmem:[#allocation3 + $0x10] sm:$0xf] %v1036
        %1042 = vst [vmem:[#allocation3 + $0x14] sm:$0xf] %v1037
        %v1043 = vld [vmem:[#allocation3] sm:$0x8]
        %v1044 = vld [vmem:[#allocation3 + $0x4] sm:$0xf]
        %v1045 = vld [vmem:[#allocation3 + $0x8] sm:$0xf]
        %v1046 = vld [vmem:[#allocation3 + $0xc] sm:$0xf]
        %v1047 = vld [vmem:[#allocation3 + $0x10] sm:$0xf]
        %v1048 = vld [vmem:[#allocation3 + $0x14] sm:$0x7]
        %s1049 = scalar_lea.vmem [#allocation8], 320
        %v1050 = vld [vmem:[%s1049] sm:$0xf]
        %v1051 = vld [vmem:[%s1049 + $0x4] sm:$0xf]
        %v1052 = vld [vmem:[%s1049 + $0x8] sm:$0xf]
        %v1053 = vld [vmem:[%s1049 + $0xc] sm:$0xf]
        %v1054 = vld [vmem:[%s1049 + $0x10] sm:$0xf]
        %v1055 = vld [vmem:[%s1049 + $0x14] sm:$0xf]
        %v1056 = vld [vmem:[%s1049 + $0x18] sm:$0xf]
        %v1057 = vld [vmem:[%s1049 + $0x1c] sm:$0xf]
        %v1058 = vld [vmem:[%s1049 + $0x20] sm:$0xf]
        %v1059 = vld [vmem:[%s1049 + $0x24] sm:$0xf]
        %v1060 = vld [vmem:[%s1049 + $0x28] sm:$0xf]
        %v1061 = vld [vmem:[%s1049 + $0x2c] sm:$0xf]
        %v1062 = vld [vmem:[%s1049 + $0x30] sm:$0xf]
        %v1063 = vld [vmem:[%s1049 + $0x34] sm:$0xf]
        %v1064 = vld [vmem:[%s1049 + $0x38] sm:$0xf]
        %v1065 = vld [vmem:[%s1049 + $0x3c] sm:$0xf]
        %v1066 = vld [vmem:[#allocation3 + $0x14] sm:$0xf]
        %s1067 = scalar_lea.vmem [#allocation8], 384
        %v1068 = vld [vmem:[%s1067] sm:$0xf]
        %v1069 = vld [vmem:[%s1067 + $0x4] sm:$0xf]
        %v1070 = vld [vmem:[%s1067 + $0x8] sm:$0xf]
        %v1071 = vld [vmem:[%s1067 + $0xc] sm:$0xf]
        %v1072 = vld [vmem:[%s1067 + $0x10] sm:$0xf]
        %v1073 = vld [vmem:[%s1067 + $0x14] sm:$0xf]
        %v1074 = vld [vmem:[%s1067 + $0x18] sm:$0xf]
        %v1075 = vld [vmem:[%s1067 + $0x1c] sm:$0xf]
        %v1076 = vld [vmem:[%s1067 + $0x20] sm:$0xf]
        %v1077 = vld [vmem:[%s1067 + $0x24] sm:$0xf]
        %v1078 = vld [vmem:[%s1067 + $0x28] sm:$0xf]
        %v1079 = vld [vmem:[%s1067 + $0x2c] sm:$0xf]
        %v1080 = vld [vmem:[%s1067 + $0x30] sm:$0xf]
        %v1081 = vld [vmem:[%s1067 + $0x34] sm:$0xf]
        %v1082 = vld [vmem:[%s1067 + $0x38] sm:$0xf]
        %v1083 = vld [vmem:[%s1067 + $0x3c] sm:$0xf]
        %v1090 = vunpack.c.l.b16 %v1043
        %v1091 = vunpack.c.l.b16 %v1044
        %v1092 = vunpack.c.l.b16 %v1045
        %v1093 = vunpack.c.l.b16 %v1046
        %v1094 = vunpack.c.l.b16 %v1047
        %v1095 = vunpack.c.l.b16 %v1066
        %v1096 = vpack.c.b16 %v1091, %v1090
        %v1097 = vpack.c.b16 %v1093, %v1092
        %v1098 = vpack.c.b16 %v1095, %v1094
        %v1100 = vshrl.u32 %v1096, 16
        %v1102 = vrot.slane %v1100, 3
        %v1103 = vshll.u32 %v1096, 16
        %v1105 = vrot.slane %v1103, 4
        %v1106 = vor.u32 %v1102, %v1105
        %v1108 = vshrl.u32 %v1097, 16
        %v1110 = vrot.slane %v1108, 3
        %v1111 = vshll.u32 %v1097, 16
        %v1113 = vrot.slane %v1111, 4
        %v1114 = vor.u32 %v1110, %v1113
        %v1115 = vsel %vm449, %v1106, %v1114
        %v1117 = vshrl.u32 %v1098, 16
        %v1119 = vrot.slane %v1117, 3
        %v1120 = vshll.u32 %v1098, 16
        %v1122 = vrot.slane %v1120, 4
        %v1123 = vor.u32 %v1119, %v1122
        %v1124 = vsel %vm449, %v1114, %v1123
        %v1144 = vunpack.c.l.b16 %v1068
        %v1145 = vunpack.c.l.b16 %v1069
        %v1146 = vunpack.c.l.b16 %v1070
        %v1147 = vunpack.c.l.b16 %v1071
        %v1148 = vunpack.c.l.b16 %v1072
        %v1149 = vunpack.c.l.b16 %v1073
        %v1150 = vunpack.c.l.b16 %v1074
        %v1151 = vunpack.c.l.b16 %v1075
        %v1152 = vunpack.c.l.b16 %v1076
        %v1153 = vunpack.c.l.b16 %v1077
        %v1154 = vunpack.c.l.b16 %v1078
        %v1155 = vunpack.c.l.b16 %v1079
        %v1156 = vunpack.c.l.b16 %v1080
        %v1157 = vunpack.c.l.b16 %v1081
        %v1158 = vunpack.c.l.b16 %v1082
        %v1159 = vunpack.c.l.b16 %v1083
        %v1160 = vpack.c.b16 %v1145, %v1144
        %v1161 = vpack.c.b16 %v1147, %v1146
        %v1162 = vpack.c.b16 %v1149, %v1148
        %v1163 = vpack.c.b16 %v1151, %v1150
        %v1164 = vpack.c.b16 %v1153, %v1152
        %v1165 = vpack.c.b16 %v1155, %v1154
        %v1166 = vpack.c.b16 %v1157, %v1156
        %v1167 = vpack.c.b16 %v1159, %v1158
        %1176 = vmatpush.bf16.msra.mxu0 %v1167
        %1177 = vmatpush.bf16.msra.mxu0 %v1166
        %1178 = vmatpush.bf16.msra.mxu0 %v1165
        %1179 = vmatpush.bf16.msra.mxu0 %v1164
        %1180 = vmatpush.bf16.msra.mxu0 %v1163
        %1181 = vmatpush.bf16.msra.mxu0 %v1162
        %1182 = vmatpush.bf16.msra.mxu0 %v1161
        %1183 = vmatpush.bf16.msra.mxu0 %v1160
        %1184 = vmatmul.bf16.gmra.mxu0 %v1115
        %v1185 = vpop.f32.mrf.mxu0
        %v1186 = vadd.f32 0.0, %v1185
        %v1187 = vpop.f32.mrf.mxu0
        %v1188 = vadd.f32 0.0, %v1187
        %1189 = vmatmul.bf16.gmra.mxu0 %v1124
        %v1190 = vpop.f32.mrf.mxu0
        %v1191 = vadd.f32 0.0, %v1190
        %v1192 = vpop.f32.mrf.mxu0
        %v1193 = vadd.f32 0.0, %v1192
        %1194 = vmatmul.bf16.gmra.mxu0 %v1123
        %v1195 = vpop.f32.mrf.mxu0
        %v1196 = vadd.f32 0.0, %v1195
        %v1197 = vpop.f32.mrf.mxu0
        %1198 = vdwg.mxu0
        %v1200 = vunpack.c.l.b16 %v1048
        %v1201 = vpack.c.b16 %v1200, %v1094
        %v1202 = vrot.slane %v1096, 3
        %v1203 = vrot.slane %v1097, 3
        %v1204 = vsel %vm553, %v1202, %v1203
        %v1205 = vrot.slane %v1201, 3
        %v1206 = vsel %vm553, %v1203, %v1205
        %v1226 = vunpack.c.l.b16 %v1050
        %v1227 = vunpack.c.l.b16 %v1051
        %v1228 = vunpack.c.l.b16 %v1052
        %v1229 = vunpack.c.l.b16 %v1053
        %v1230 = vunpack.c.l.b16 %v1054
        %v1231 = vunpack.c.l.b16 %v1055
        %v1232 = vunpack.c.l.b16 %v1056
        %v1233 = vunpack.c.l.b16 %v1057
        %v1234 = vunpack.c.l.b16 %v1058
        %v1235 = vunpack.c.l.b16 %v1059
        %v1236 = vunpack.c.l.b16 %v1060
        %v1237 = vunpack.c.l.b16 %v1061
        %v1238 = vunpack.c.l.b16 %v1062
        %v1239 = vunpack.c.l.b16 %v1063
        %v1240 = vunpack.c.l.b16 %v1064
        %v1241 = vunpack.c.l.b16 %v1065
        %v1242 = vpack.c.b16 %v1227, %v1226
        %v1243 = vpack.c.b16 %v1229, %v1228
        %v1244 = vpack.c.b16 %v1231, %v1230
        %v1245 = vpack.c.b16 %v1233, %v1232
        %v1246 = vpack.c.b16 %v1235, %v1234
        %v1247 = vpack.c.b16 %v1237, %v1236
        %v1248 = vpack.c.b16 %v1239, %v1238
        %v1249 = vpack.c.b16 %v1241, %v1240
        %1258 = vmatpush.bf16.msra.mxu0 %v1249
        %1259 = vmatpush.bf16.msra.mxu0 %v1248
        %1260 = vmatpush.bf16.msra.mxu0 %v1247
        %1261 = vmatpush.bf16.msra.mxu0 %v1246
        %1262 = vmatpush.bf16.msra.mxu0 %v1245
        %1263 = vmatpush.bf16.msra.mxu0 %v1244
        %1264 = vmatpush.bf16.msra.mxu0 %v1243
        %1265 = vmatpush.bf16.msra.mxu0 %v1242
        %1266 = vmatmul.bf16.gmra.mxu0 %v1204
        %v1267 = vpop.f32.mrf.mxu0
        %v1268 = vadd.f32 %v1186, %v1267
        %v1269 = vpop.f32.mrf.mxu0
        %v1270 = vadd.f32 %v1188, %v1269
        %1271 = vmatmul.bf16.gmra.mxu0 %v1206
        %v1272 = vpop.f32.mrf.mxu0
        %v1273 = vadd.f32 %v1191, %v1272
        %v1274 = vpop.f32.mrf.mxu0
        %v1275 = vadd.f32 %v1193, %v1274
        %1276 = vmatmul.bf16.gmra.mxu0 %v1205
        %v1277 = vpop.f32.mrf.mxu0
        %v1278 = vadd.f32 %v1196, %v1277
        %v1279 = vpop.f32.mrf.mxu0
        %1280 = vdwg.mxu0
        %s1281 = scalar_lea.vmem [#allocation8], 448
        %v1282 = vld [vmem:[%s1281] sm:$0xf]
        %v1283 = vld [vmem:[%s1281 + $0x4] sm:$0xf]
        %v1284 = vld [vmem:[%s1281 + $0x8] sm:$0xf]
        %v1285 = vld [vmem:[%s1281 + $0xc] sm:$0xf]
        %v1286 = vld [vmem:[%s1281 + $0x10] sm:$0xf]
        %v1287 = vld [vmem:[%s1281 + $0x14] sm:$0xf]
        %v1288 = vld [vmem:[%s1281 + $0x18] sm:$0xf]
        %v1289 = vld [vmem:[%s1281 + $0x1c] sm:$0xf]
        %v1290 = vld [vmem:[%s1281 + $0x20] sm:$0xf]
        %v1291 = vld [vmem:[%s1281 + $0x24] sm:$0xf]
        %v1292 = vld [vmem:[%s1281 + $0x28] sm:$0xf]
        %v1293 = vld [vmem:[%s1281 + $0x2c] sm:$0xf]
        %v1294 = vld [vmem:[%s1281 + $0x30] sm:$0xf]
        %v1295 = vld [vmem:[%s1281 + $0x34] sm:$0xf]
        %v1296 = vld [vmem:[%s1281 + $0x38] sm:$0xf]
        %v1297 = vld [vmem:[%s1281 + $0x3c] sm:$0xf]
        %v1298 = vpack.c.b16 %v1092, %v1091
        %v1299 = vpack.c.b16 %v1094, %v1093
        %v1300 = vpack.c.b16 %v1095, %v1095
        %v1320 = vunpack.c.l.b16 %v1282
        %v1321 = vunpack.c.l.b16 %v1283
        %v1322 = vunpack.c.l.b16 %v1284
        %v1323 = vunpack.c.l.b16 %v1285
        %v1324 = vunpack.c.l.b16 %v1286
        %v1325 = vunpack.c.l.b16 %v1287
        %v1326 = vunpack.c.l.b16 %v1288
        %v1327 = vunpack.c.l.b16 %v1289
        %v1328 = vunpack.c.l.b16 %v1290
        %v1329 = vunpack.c.l.b16 %v1291
        %v1330 = vunpack.c.l.b16 %v1292
        %v1331 = vunpack.c.l.b16 %v1293
        %v1332 = vunpack.c.l.b16 %v1294
        %v1333 = vunpack.c.l.b16 %v1295
        %v1334 = vunpack.c.l.b16 %v1296
        %v1335 = vunpack.c.l.b16 %v1297
        %v1336 = vpack.c.b16 %v1321, %v1320
        %v1337 = vpack.c.b16 %v1323, %v1322
        %v1338 = vpack.c.b16 %v1325, %v1324
        %v1339 = vpack.c.b16 %v1327, %v1326
        %v1340 = vpack.c.b16 %v1329, %v1328
        %v1341 = vpack.c.b16 %v1331, %v1330
        %v1342 = vpack.c.b16 %v1333, %v1332
        %v1343 = vpack.c.b16 %v1335, %v1334
        %1352 = vmatpush.bf16.msra.mxu0 %v1343
        %1353 = vmatpush.bf16.msra.mxu0 %v1342
        %1354 = vmatpush.bf16.msra.mxu0 %v1341
        %1355 = vmatpush.bf16.msra.mxu0 %v1340
        %1356 = vmatpush.bf16.msra.mxu0 %v1339
        %1357 = vmatpush.bf16.msra.mxu0 %v1338
        %1358 = vmatpush.bf16.msra.mxu0 %v1337
        %1359 = vmatpush.bf16.msra.mxu0 %v1336
        %1360 = vmatmul.bf16.gmra.mxu0 %v1298
        %v1361 = vpop.f32.mrf.mxu0
        %v1362 = vadd.f32 0.0, %v1361
        %v1363 = vpop.f32.mrf.mxu0
        %v1364 = vadd.f32 0.0, %v1363
        %1365 = vmatmul.bf16.gmra.mxu0 %v1299
        %v1366 = vpop.f32.mrf.mxu0
        %v1367 = vadd.f32 0.0, %v1366
        %v1368 = vpop.f32.mrf.mxu0
        %v1369 = vadd.f32 0.0, %v1368
        %1370 = vmatmul.bf16.gmra.mxu0 %v1300
        %v1371 = vpop.f32.mrf.mxu0
        %v1372 = vadd.f32 0.0, %v1371
        %v1373 = vpop.f32.mrf.mxu0
        %1374 = vdwg.mxu0
        %v1375 = vadd.f32 %v1268, %v1362
        %v1376 = vadd.f32 %v1270, %v1364
        %v1377 = vadd.f32 %v1273, %v1367
        %v1378 = vadd.f32 %v1275, %v1369
        %v1379 = vadd.f32 %v1278, %v1372
        %v1380 = vld [vmem:[#allocation3 + $0x4] sm:$0xf]
        %v1381 = vld [vmem:[#allocation3 + $0x8] sm:$0xf]
        %v1382 = vld [vmem:[#allocation3 + $0xc] sm:$0xf]
        %v1383 = vld [vmem:[#allocation3 + $0x10] sm:$0xf]
        %v1384 = vld [vmem:[#allocation3 + $0x14] sm:$0xf]
        %v1385 = vld [vmem:[#allocation3 + $0x18] sm:$0x1]
        %s1386 = scalar_lea.vmem [#allocation8], 512
        %v1387 = vld [vmem:[%s1386] sm:$0xf]
        %v1388 = vld [vmem:[%s1386 + $0x4] sm:$0xf]
        %v1389 = vld [vmem:[%s1386 + $0x8] sm:$0xf]
        %v1390 = vld [vmem:[%s1386 + $0xc] sm:$0xf]
        %v1391 = vld [vmem:[%s1386 + $0x10] sm:$0xf]
        %v1392 = vld [vmem:[%s1386 + $0x14] sm:$0xf]
        %v1393 = vld [vmem:[%s1386 + $0x18] sm:$0xf]
        %v1394 = vld [vmem:[%s1386 + $0x1c] sm:$0xf]
        %v1395 = vld [vmem:[%s1386 + $0x20] sm:$0xf]
        %v1396 = vld [vmem:[%s1386 + $0x24] sm:$0xf]
        %v1397 = vld [vmem:[%s1386 + $0x28] sm:$0xf]
        %v1398 = vld [vmem:[%s1386 + $0x2c] sm:$0xf]
        %v1399 = vld [vmem:[%s1386 + $0x30] sm:$0xf]
        %v1400 = vld [vmem:[%s1386 + $0x34] sm:$0xf]
        %v1401 = vld [vmem:[%s1386 + $0x38] sm:$0xf]
        %v1402 = vld [vmem:[%s1386 + $0x3c] sm:$0xf]
        %v1409 = vunpack.c.l.b16 %v1380
        %v1410 = vunpack.c.l.b16 %v1381
        %v1411 = vunpack.c.l.b16 %v1382
        %v1412 = vunpack.c.l.b16 %v1383
        %v1413 = vunpack.c.l.b16 %v1384
        %v1414 = vunpack.c.l.b16 %v1385
        %v1415 = vpack.c.b16 %v1410, %v1409
        %v1416 = vpack.c.b16 %v1412, %v1411
        %v1417 = vpack.c.b16 %v1414, %v1413
        %v1419 = vshrl.u32 %v1415, 16
        %v1421 = vshll.u32 %v1415, 16
        %v1423 = vrot.slane %v1421, 1
        %v1424 = vor.u32 %v1419, %v1423
        %v1426 = vshll.u32 %v1416, 16
        %v1428 = vrot.slane %v1426, 1
        %v1429 = vsel %vm770, %v1424, %v1428
        %v1430 = vshrl.u32 %v1416, 16
        %v1432 = vor.u32 %v1430, %v1428
        %v1434 = vshll.u32 %v1417, 16
        %v1436 = vrot.slane %v1434, 1
        %v1437 = vsel %vm770, %v1432, %v1436
        %v1438 = vshrl.u32 %v1417, 16
        %v1440 = vor.u32 %v1438, %v1436
        %v1460 = vunpack.c.l.b16 %v1387
        %v1461 = vunpack.c.l.b16 %v1388
        %v1462 = vunpack.c.l.b16 %v1389
        %v1463 = vunpack.c.l.b16 %v1390
        %v1464 = vunpack.c.l.b16 %v1391
        %v1465 = vunpack.c.l.b16 %v1392
        %v1466 = vunpack.c.l.b16 %v1393
        %v1467 = vunpack.c.l.b16 %v1394
        %v1468 = vunpack.c.l.b16 %v1395
        %v1469 = vunpack.c.l.b16 %v1396
        %v1470 = vunpack.c.l.b16 %v1397
        %v1471 = vunpack.c.l.b16 %v1398
        %v1472 = vunpack.c.l.b16 %v1399
        %v1473 = vunpack.c.l.b16 %v1400
        %v1474 = vunpack.c.l.b16 %v1401
        %v1475 = vunpack.c.l.b16 %v1402
        %v1476 = vpack.c.b16 %v1461, %v1460
        %v1477 = vpack.c.b16 %v1463, %v1462
        %v1478 = vpack.c.b16 %v1465, %v1464
        %v1479 = vpack.c.b16 %v1467, %v1466
        %v1480 = vpack.c.b16 %v1469, %v1468
        %v1481 = vpack.c.b16 %v1471, %v1470
        %v1482 = vpack.c.b16 %v1473, %v1472
        %v1483 = vpack.c.b16 %v1475, %v1474
        %1492 = vmatpush.bf16.msra.mxu0 %v1483
        %1493 = vmatpush.bf16.msra.mxu0 %v1482
        %1494 = vmatpush.bf16.msra.mxu0 %v1481
        %1495 = vmatpush.bf16.msra.mxu0 %v1480
        %1496 = vmatpush.bf16.msra.mxu0 %v1479
        %1497 = vmatpush.bf16.msra.mxu0 %v1478
        %1498 = vmatpush.bf16.msra.mxu0 %v1477
        %1499 = vmatpush.bf16.msra.mxu0 %v1476
        %1500 = vmatmul.bf16.gmra.mxu0 %v1429
        %v1501 = vpop.f32.mrf.mxu0
        %v1502 = vadd.f32 0.0, %v1501
        %v1503 = vpop.f32.mrf.mxu0
        %v1504 = vadd.f32 0.0, %v1503
        %1505 = vmatmul.bf16.gmra.mxu0 %v1437
        %v1506 = vpop.f32.mrf.mxu0
        %v1507 = vadd.f32 0.0, %v1506
        %v1508 = vpop.f32.mrf.mxu0
        %v1509 = vadd.f32 0.0, %v1508
        %1510 = vmatmul.bf16.gmra.mxu0 %v1440
        %v1511 = vpop.f32.mrf.mxu0
        %v1512 = vadd.f32 0.0, %v1511
        %v1513 = vpop.f32.mrf.mxu0
        %1514 = vdwg.mxu0
        %v1515 = vadd.f32 %v1375, %v1502
        %v1516 = vadd.f32 %v1376, %v1504
        %v1517 = vadd.f32 %v1377, %v1507
        %v1518 = vadd.f32 %v1378, %v1509
        %v1519 = vadd.f32 %v1379, %v1512
        %v1520 = vld [vmem:[#allocation3 + $0x4] sm:$0xe]
        %s1521 = scalar_lea.vmem [#allocation8], 576
        %v1522 = vld [vmem:[%s1521] sm:$0xf]
        %v1523 = vld [vmem:[%s1521 + $0x4] sm:$0xf]
        %v1524 = vld [vmem:[%s1521 + $0x8] sm:$0xf]
        %v1525 = vld [vmem:[%s1521 + $0xc] sm:$0xf]
        %v1526 = vld [vmem:[%s1521 + $0x10] sm:$0xf]
        %v1527 = vld [vmem:[%s1521 + $0x14] sm:$0xf]
        %v1528 = vld [vmem:[%s1521 + $0x18] sm:$0xf]
        %v1529 = vld [vmem:[%s1521 + $0x1c] sm:$0xf]
        %v1530 = vld [vmem:[%s1521 + $0x20] sm:$0xf]
        %v1531 = vld [vmem:[%s1521 + $0x24] sm:$0xf]
        %v1532 = vld [vmem:[%s1521 + $0x28] sm:$0xf]
        %v1533 = vld [vmem:[%s1521 + $0x2c] sm:$0xf]
        %v1534 = vld [vmem:[%s1521 + $0x30] sm:$0xf]
        %v1535 = vld [vmem:[%s1521 + $0x34] sm:$0xf]
        %v1536 = vld [vmem:[%s1521 + $0x38] sm:$0xf]
        %v1537 = vld [vmem:[%s1521 + $0x3c] sm:$0xf]
        %v1539 = vunpack.c.l.b16 %v1520
        %v1540 = vpack.c.b16 %v1410, %v1539
        %v1541 = vrot.slane %v1540, 1
        %v1542 = vrot.slane %v1416, 1
        %v1543 = vsel %vm894, %v1541, %v1542
        %v1544 = vrot.slane %v1417, 1
        %v1545 = vsel %vm894, %v1542, %v1544
        %v1565 = vunpack.c.l.b16 %v1522
        %v1566 = vunpack.c.l.b16 %v1523
        %v1567 = vunpack.c.l.b16 %v1524
        %v1568 = vunpack.c.l.b16 %v1525
        %v1569 = vunpack.c.l.b16 %v1526
        %v1570 = vunpack.c.l.b16 %v1527
        %v1571 = vunpack.c.l.b16 %v1528
        %v1572 = vunpack.c.l.b16 %v1529
        %v1573 = vunpack.c.l.b16 %v1530
        %v1574 = vunpack.c.l.b16 %v1531
        %v1575 = vunpack.c.l.b16 %v1532
        %v1576 = vunpack.c.l.b16 %v1533
        %v1577 = vunpack.c.l.b16 %v1534
        %v1578 = vunpack.c.l.b16 %v1535
        %v1579 = vunpack.c.l.b16 %v1536
        %v1580 = vunpack.c.l.b16 %v1537
        %v1581 = vpack.c.b16 %v1566, %v1565
        %v1582 = vpack.c.b16 %v1568, %v1567
        %v1583 = vpack.c.b16 %v1570, %v1569
        %v1584 = vpack.c.b16 %v1572, %v1571
        %v1585 = vpack.c.b16 %v1574, %v1573
        %v1586 = vpack.c.b16 %v1576, %v1575
        %v1587 = vpack.c.b16 %v1578, %v1577
        %v1588 = vpack.c.b16 %v1580, %v1579
        %1597 = vmatpush.bf16.msra.mxu0 %v1588
        %1598 = vmatpush.bf16.msra.mxu0 %v1587
        %1599 = vmatpush.bf16.msra.mxu0 %v1586
        %1600 = vmatpush.bf16.msra.mxu0 %v1585
        %1601 = vmatpush.bf16.msra.mxu0 %v1584
        %1602 = vmatpush.bf16.msra.mxu0 %v1583
        %1603 = vmatpush.bf16.msra.mxu0 %v1582
        %1604 = vmatpush.bf16.msra.mxu0 %v1581
        %1605 = vmatmul.bf16.gmra.mxu0 %v1543
        %v1606 = vpop.f32.mrf.mxu0
        %v1607 = vadd.f32 0.0, %v1606
        %v1608 = vpop.f32.mrf.mxu0
        %v1609 = vadd.f32 0.0, %v1608
        %1610 = vmatmul.bf16.gmra.mxu0 %v1545
        %v1611 = vpop.f32.mrf.mxu0
        %v1612 = vadd.f32 0.0, %v1611
        %v1613 = vpop.f32.mrf.mxu0
        %v1614 = vadd.f32 0.0, %v1613
        %1615 = vmatmul.bf16.gmra.mxu0 %v1544
        %v1616 = vpop.f32.mrf.mxu0
        %v1617 = vadd.f32 0.0, %v1616
        %v1618 = vpop.f32.mrf.mxu0
        %1619 = vdwg.mxu0
        %v1620 = vadd.f32 %v1515, %v1607
        %v1621 = vadd.f32 %v1516, %v1609
        %v1622 = vadd.f32 %v1517, %v1612
        %v1623 = vadd.f32 %v1518, %v1614
        %v1624 = vadd.f32 %v1519, %v1617
        %s1625 = scalar_lea.vmem [#allocation11], 1
        %v1626 = vld [vmem:[%s1625] sm:$0x1]
        %v1628 = vperm.slane %v1626, 0
        %v1630 = vadd.f32 %v1620, %v1628
        %v1631 = vadd.f32 %v1621, %v1628
        %v1632 = vadd.f32 %v1622, %v1628
        %v1633 = vadd.f32 %v1623, %v1628
        %v1634 = vadd.f32 %v1624, %v1628
        %v1635 = vadd.f32 %v1630, %v998
        %v1636 = vadd.f32 %v1631, %v999
        %v1637 = vadd.f32 %v1632, %v1000
        %v1638 = vadd.f32 %v1633, %v1001
        %v1639 = vadd.f32 %v1634, %v1002
        %v1640 = vmul.f32 %v1635, %v333
        %v1641 = vmul.f32 %v1636, %v334
        %v1642 = vmul.f32 %v1637, %v335
        %v1643 = vmul.f32 %v1638, %v336
        %v1644 = vmul.f32 %v1639, %v337
        %1645 = vst [vmem:[#allocation4] sm:$0xff] %v1640
        %1646 = vst [vmem:[#allocation4 + $0x8] sm:$0xff] %v1641
        %1647 = vst [vmem:[#allocation4 + $0x10] sm:$0xff] %v1642
        %1648 = vst [vmem:[#allocation4 + $0x18] sm:$0xff] %v1643
        %1649 = vst [vmem:[#allocation4 + $0x20] sm:$0xff] %v1644
        %v1650 = vld [vmem:[#allocation4] sm:$0xff]
        %v1651 = vld [vmem:[#allocation4 + $0x8] sm:$0xff]
        %v1652 = vld [vmem:[#allocation4 + $0x10] sm:$0xff]
        %v1653 = vld [vmem:[#allocation4 + $0x18] sm:$0xff]
        %v1654 = vld [vmem:[#allocation4 + $0x20] sm:$0xff]
        %s1655 = scalar_lea.vmem [#allocation13], 2
        %v1656 = vld [vmem:[%s1655] sm:$0x1]
        %v1658 = vperm.slane %v1656, 0
        %v1660 = vmul.f32 %v1650, %v1658
        %v1661 = vmul.f32 %v1651, %v1658
        %v1662 = vmul.f32 %v1652, %v1658
        %v1663 = vmul.f32 %v1653, %v1658
        %v1664 = vmul.f32 %v1654, %v1658
        %s1665 = scalar_lea.vmem [#allocation14], 2
        %v1666 = vld [vmem:[%s1665] sm:$0x1]
        %v1668 = vperm.slane %v1666, 0
        %v1670 = vadd.f32 %v1660, %v1668
        %v1671 = vadd.f32 %v1661, %v1668
        %v1672 = vadd.f32 %v1662, %v1668
        %v1673 = vadd.f32 %v1663, %v1668
        %v1674 = vadd.f32 %v1664, %v1668
        %v1675 = vtanh.pop %v1670
        %v1676 = vtanh.pop %v1671
        %v1677 = vtanh.pop %v1672
        %v1678 = vtanh.pop %v1673
        %v1679 = vtanh.pop %v1674
        %v1680 = vmul.f32 %v1675, %v343
        %v1681 = vmul.f32 %v1676, %v344
        %v1682 = vmul.f32 %v1677, %v345
        %v1683 = vmul.f32 %v1678, %v346
        %v1684 = vmul.f32 %v1679, %v347
        %v1685 = vpack.c.bf16 %v1680, %v1680
        %v1686 = vpack.c.bf16 %v1681, %v1681
        %v1687 = vpack.c.bf16 %v1682, %v1682
        %v1688 = vpack.c.bf16 %v1683, %v1683
        %v1689 = vpack.c.bf16 %v1684, %v1684
        %1690 = vst [vmem:[#allocation3 + $0x4] sm:$0xf] %v1685
        %1691 = vst [vmem:[#allocation3 + $0x8] sm:$0xf] %v1686
        %1692 = vst [vmem:[#allocation3 + $0xc] sm:$0xf] %v1687
        %1693 = vst [vmem:[#allocation3 + $0x10] sm:$0xf] %v1688
        %1694 = vst [vmem:[#allocation3 + $0x14] sm:$0xf] %v1689
        %v1695 = vld [vmem:[#allocation3] sm:$0x8]
        %v1696 = vld [vmem:[#allocation3 + $0x4] sm:$0xf]
        %v1697 = vld [vmem:[#allocation3 + $0x8] sm:$0xf]
        %v1698 = vld [vmem:[#allocation3 + $0xc] sm:$0xf]
        %v1699 = vld [vmem:[#allocation3 + $0x10] sm:$0xf]
        %v1700 = vld [vmem:[#allocation3 + $0x14] sm:$0x7]
        %s1701 = scalar_lea.vmem [#allocation8], 640
        %v1702 = vld [vmem:[%s1701] sm:$0xf]
        %v1703 = vld [vmem:[%s1701 + $0x4] sm:$0xf]
        %v1704 = vld [vmem:[%s1701 + $0x8] sm:$0xf]
        %v1705 = vld [vmem:[%s1701 + $0xc] sm:$0xf]
        %v1706 = vld [vmem:[%s1701 + $0x10] sm:$0xf]
        %v1707 = vld [vmem:[%s1701 + $0x14] sm:$0xf]
        %v1708 = vld [vmem:[%s1701 + $0x18] sm:$0xf]
        %v1709 = vld [vmem:[%s1701 + $0x1c] sm:$0xf]
        %v1710 = vld [vmem:[%s1701 + $0x20] sm:$0xf]
        %v1711 = vld [vmem:[%s1701 + $0x24] sm:$0xf]
        %v1712 = vld [vmem:[%s1701 + $0x28] sm:$0xf]
        %v1713 = vld [vmem:[%s1701 + $0x2c] sm:$0xf]
        %v1714 = vld [vmem:[%s1701 + $0x30] sm:$0xf]
        %v1715 = vld [vmem:[%s1701 + $0x34] sm:$0xf]
        %v1716 = vld [vmem:[%s1701 + $0x38] sm:$0xf]
        %v1717 = vld [vmem:[%s1701 + $0x3c] sm:$0xf]
        %v1718 = vld [vmem:[#allocation3 + $0x14] sm:$0xf]
        %s1719 = scalar_lea.vmem [#allocation8], 704
        %v1720 = vld [vmem:[%s1719] sm:$0xf]
        %v1721 = vld [vmem:[%s1719 + $0x4] sm:$0xf]
        %v1722 = vld [vmem:[%s1719 + $0x8] sm:$0xf]
        %v1723 = vld [vmem:[%s1719 + $0xc] sm:$0xf]
        %v1724 = vld [vmem:[%s1719 + $0x10] sm:$0xf]
        %v1725 = vld [vmem:[%s1719 + $0x14] sm:$0xf]
        %v1726 = vld [vmem:[%s1719 + $0x18] sm:$0xf]
        %v1727 = vld [vmem:[%s1719 + $0x1c] sm:$0xf]
        %v1728 = vld [vmem:[%s1719 + $0x20] sm:$0xf]
        %v1729 = vld [vmem:[%s1719 + $0x24] sm:$0xf]
        %v1730 = vld [vmem:[%s1719 + $0x28] sm:$0xf]
        %v1731 = vld [vmem:[%s1719 + $0x2c] sm:$0xf]
        %v1732 = vld [vmem:[%s1719 + $0x30] sm:$0xf]
        %v1733 = vld [vmem:[%s1719 + $0x34] sm:$0xf]
        %v1734 = vld [vmem:[%s1719 + $0x38] sm:$0xf]
        %v1735 = vld [vmem:[%s1719 + $0x3c] sm:$0xf]
        %v1742 = vunpack.c.l.b16 %v1695
        %v1743 = vunpack.c.l.b16 %v1696
        %v1744 = vunpack.c.l.b16 %v1697
        %v1745 = vunpack.c.l.b16 %v1698
        %v1746 = vunpack.c.l.b16 %v1699
        %v1747 = vunpack.c.l.b16 %v1718
        %v1748 = vpack.c.b16 %v1743, %v1742
        %v1749 = vpack.c.b16 %v1745, %v1744
        %v1750 = vpack.c.b16 %v1747, %v1746
        %v1752 = vshrl.u32 %v1748, 16
        %v1754 = vrot.slane %v1752, 3
        %v1755 = vshll.u32 %v1748, 16
        %v1757 = vrot.slane %v1755, 4
        %v1758 = vor.u32 %v1754, %v1757
        %v1760 = vshrl.u32 %v1749, 16
        %v1762 = vrot.slane %v1760, 3
        %v1763 = vshll.u32 %v1749, 16
        %v1765 = vrot.slane %v1763, 4
        %v1766 = vor.u32 %v1762, %v1765
        %v1767 = vsel %vm449, %v1758, %v1766
        %v1769 = vshrl.u32 %v1750, 16
        %v1771 = vrot.slane %v1769, 3
        %v1772 = vshll.u32 %v1750, 16
        %v1774 = vrot.slane %v1772, 4
        %v1775 = vor.u32 %v1771, %v1774
        %v1776 = vsel %vm449, %v1766, %v1775
        %v1796 = vunpack.c.l.b16 %v1720
        %v1797 = vunpack.c.l.b16 %v1721
        %v1798 = vunpack.c.l.b16 %v1722
        %v1799 = vunpack.c.l.b16 %v1723
        %v1800 = vunpack.c.l.b16 %v1724
        %v1801 = vunpack.c.l.b16 %v1725
        %v1802 = vunpack.c.l.b16 %v1726
        %v1803 = vunpack.c.l.b16 %v1727
        %v1804 = vunpack.c.l.b16 %v1728
        %v1805 = vunpack.c.l.b16 %v1729
        %v1806 = vunpack.c.l.b16 %v1730
        %v1807 = vunpack.c.l.b16 %v1731
        %v1808 = vunpack.c.l.b16 %v1732
        %v1809 = vunpack.c.l.b16 %v1733
        %v1810 = vunpack.c.l.b16 %v1734
        %v1811 = vunpack.c.l.b16 %v1735
        %v1812 = vpack.c.b16 %v1797, %v1796
        %v1813 = vpack.c.b16 %v1799, %v1798
        %v1814 = vpack.c.b16 %v1801, %v1800
        %v1815 = vpack.c.b16 %v1803, %v1802
        %v1816 = vpack.c.b16 %v1805, %v1804
        %v1817 = vpack.c.b16 %v1807, %v1806
        %v1818 = vpack.c.b16 %v1809, %v1808
        %v1819 = vpack.c.b16 %v1811, %v1810
        %1828 = vmatpush.bf16.msra.mxu0 %v1819
        %1829 = vmatpush.bf16.msra.mxu0 %v1818
        %1830 = vmatpush.bf16.msra.mxu0 %v1817
        %1831 = vmatpush.bf16.msra.mxu0 %v1816
        %1832 = vmatpush.bf16.msra.mxu0 %v1815
        %1833 = vmatpush.bf16.msra.mxu0 %v1814
        %1834 = vmatpush.bf16.msra.mxu0 %v1813
        %1835 = vmatpush.bf16.msra.mxu0 %v1812
        %1836 = vmatmul.bf16.gmra.mxu0 %v1767
        %v1837 = vpop.f32.mrf.mxu0
        %v1838 = vadd.f32 0.0, %v1837
        %v1839 = vpop.f32.mrf.mxu0
        %v1840 = vadd.f32 0.0, %v1839
        %1841 = vmatmul.bf16.gmra.mxu0 %v1776
        %v1842 = vpop.f32.mrf.mxu0
        %v1843 = vadd.f32 0.0, %v1842
        %v1844 = vpop.f32.mrf.mxu0
        %v1845 = vadd.f32 0.0, %v1844
        %1846 = vmatmul.bf16.gmra.mxu0 %v1775
        %v1847 = vpop.f32.mrf.mxu0
        %v1848 = vadd.f32 0.0, %v1847
        %v1849 = vpop.f32.mrf.mxu0
        %1850 = vdwg.mxu0
        %v1852 = vunpack.c.l.b16 %v1700
        %v1853 = vpack.c.b16 %v1852, %v1746
        %v1854 = vrot.slane %v1748, 3
        %v1855 = vrot.slane %v1749, 3
        %v1856 = vsel %vm553, %v1854, %v1855
        %v1857 = vrot.slane %v1853, 3
        %v1858 = vsel %vm553, %v1855, %v1857
        %v1878 = vunpack.c.l.b16 %v1702
        %v1879 = vunpack.c.l.b16 %v1703
        %v1880 = vunpack.c.l.b16 %v1704
        %v1881 = vunpack.c.l.b16 %v1705
        %v1882 = vunpack.c.l.b16 %v1706
        %v1883 = vunpack.c.l.b16 %v1707
        %v1884 = vunpack.c.l.b16 %v1708
        %v1885 = vunpack.c.l.b16 %v1709
        %v1886 = vunpack.c.l.b16 %v1710
        %v1887 = vunpack.c.l.b16 %v1711
        %v1888 = vunpack.c.l.b16 %v1712
        %v1889 = vunpack.c.l.b16 %v1713
        %v1890 = vunpack.c.l.b16 %v1714
        %v1891 = vunpack.c.l.b16 %v1715
        %v1892 = vunpack.c.l.b16 %v1716
        %v1893 = vunpack.c.l.b16 %v1717
        %v1894 = vpack.c.b16 %v1879, %v1878
        %v1895 = vpack.c.b16 %v1881, %v1880
        %v1896 = vpack.c.b16 %v1883, %v1882
        %v1897 = vpack.c.b16 %v1885, %v1884
        %v1898 = vpack.c.b16 %v1887, %v1886
        %v1899 = vpack.c.b16 %v1889, %v1888
        %v1900 = vpack.c.b16 %v1891, %v1890
        %v1901 = vpack.c.b16 %v1893, %v1892
        %1910 = vmatpush.bf16.msra.mxu0 %v1901
        %1911 = vmatpush.bf16.msra.mxu0 %v1900
        %1912 = vmatpush.bf16.msra.mxu0 %v1899
        %1913 = vmatpush.bf16.msra.mxu0 %v1898
        %1914 = vmatpush.bf16.msra.mxu0 %v1897
        %1915 = vmatpush.bf16.msra.mxu0 %v1896
        %1916 = vmatpush.bf16.msra.mxu0 %v1895
        %1917 = vmatpush.bf16.msra.mxu0 %v1894
        %1918 = vmatmul.bf16.gmra.mxu0 %v1856
        %v1919 = vpop.f32.mrf.mxu0
        %v1920 = vadd.f32 %v1838, %v1919
        %v1921 = vpop.f32.mrf.mxu0
        %v1922 = vadd.f32 %v1840, %v1921
        %1923 = vmatmul.bf16.gmra.mxu0 %v1858
        %v1924 = vpop.f32.mrf.mxu0
        %v1925 = vadd.f32 %v1843, %v1924
        %v1926 = vpop.f32.mrf.mxu0
        %v1927 = vadd.f32 %v1845, %v1926
        %1928 = vmatmul.bf16.gmra.mxu0 %v1857
        %v1929 = vpop.f32.mrf.mxu0
        %v1930 = vadd.f32 %v1848, %v1929
        %v1931 = vpop.f32.mrf.mxu0
        %1932 = vdwg.mxu0
        %s1933 = scalar_lea.vmem [#allocation8], 768
        %v1934 = vld [vmem:[%s1933] sm:$0xf]
        %v1935 = vld [vmem:[%s1933 + $0x4] sm:$0xf]
        %v1936 = vld [vmem:[%s1933 + $0x8] sm:$0xf]
        %v1937 = vld [vmem:[%s1933 + $0xc] sm:$0xf]
        %v1938 = vld [vmem:[%s1933 + $0x10] sm:$0xf]
        %v1939 = vld [vmem:[%s1933 + $0x14] sm:$0xf]
        %v1940 = vld [vmem:[%s1933 + $0x18] sm:$0xf]
        %v1941 = vld [vmem:[%s1933 + $0x1c] sm:$0xf]
        %v1942 = vld [vmem:[%s1933 + $0x20] sm:$0xf]
        %v1943 = vld [vmem:[%s1933 + $0x24] sm:$0xf]
        %v1944 = vld [vmem:[%s1933 + $0x28] sm:$0xf]
        %v1945 = vld [vmem:[%s1933 + $0x2c] sm:$0xf]
        %v1946 = vld [vmem:[%s1933 + $0x30] sm:$0xf]
        %v1947 = vld [vmem:[%s1933 + $0x34] sm:$0xf]
        %v1948 = vld [vmem:[%s1933 + $0x38] sm:$0xf]
        %v1949 = vld [vmem:[%s1933 + $0x3c] sm:$0xf]
        %v1950 = vpack.c.b16 %v1744, %v1743
        %v1951 = vpack.c.b16 %v1746, %v1745
        %v1952 = vpack.c.b16 %v1747, %v1747
        %v1972 = vunpack.c.l.b16 %v1934
        %v1973 = vunpack.c.l.b16 %v1935
        %v1974 = vunpack.c.l.b16 %v1936
        %v1975 = vunpack.c.l.b16 %v1937
        %v1976 = vunpack.c.l.b16 %v1938
        %v1977 = vunpack.c.l.b16 %v1939
        %v1978 = vunpack.c.l.b16 %v1940
        %v1979 = vunpack.c.l.b16 %v1941
        %v1980 = vunpack.c.l.b16 %v1942
        %v1981 = vunpack.c.l.b16 %v1943
        %v1982 = vunpack.c.l.b16 %v1944
        %v1983 = vunpack.c.l.b16 %v1945
        %v1984 = vunpack.c.l.b16 %v1946
        %v1985 = vunpack.c.l.b16 %v1947
        %v1986 = vunpack.c.l.b16 %v1948
        %v1987 = vunpack.c.l.b16 %v1949
        %v1988 = vpack.c.b16 %v1973, %v1972
        %v1989 = vpack.c.b16 %v1975, %v1974
        %v1990 = vpack.c.b16 %v1977, %v1976
        %v1991 = vpack.c.b16 %v1979, %v1978
        %v1992 = vpack.c.b16 %v1981, %v1980
        %v1993 = vpack.c.b16 %v1983, %v1982
        %v1994 = vpack.c.b16 %v1985, %v1984
        %v1995 = vpack.c.b16 %v1987, %v1986
        %2004 = vmatpush.bf16.msra.mxu0 %v1995
        %2005 = vmatpush.bf16.msra.mxu0 %v1994
        %2006 = vmatpush.bf16.msra.mxu0 %v1993
        %2007 = vmatpush.bf16.msra.mxu0 %v1992
        %2008 = vmatpush.bf16.msra.mxu0 %v1991
        %2009 = vmatpush.bf16.msra.mxu0 %v1990
        %2010 = vmatpush.bf16.msra.mxu0 %v1989
        %2011 = vmatpush.bf16.msra.mxu0 %v1988
        %2012 = vmatmul.bf16.gmra.mxu0 %v1950
        %v2013 = vpop.f32.mrf.mxu0
        %v2014 = vadd.f32 0.0, %v2013
        %v2015 = vpop.f32.mrf.mxu0
        %v2016 = vadd.f32 0.0, %v2015
        %2017 = vmatmul.bf16.gmra.mxu0 %v1951
        %v2018 = vpop.f32.mrf.mxu0
        %v2019 = vadd.f32 0.0, %v2018
        %v2020 = vpop.f32.mrf.mxu0
        %v2021 = vadd.f32 0.0, %v2020
        %2022 = vmatmul.bf16.gmra.mxu0 %v1952
        %v2023 = vpop.f32.mrf.mxu0
        %v2024 = vadd.f32 0.0, %v2023
        %v2025 = vpop.f32.mrf.mxu0
        %2026 = vdwg.mxu0
        %v2027 = vadd.f32 %v1920, %v2014
        %v2028 = vadd.f32 %v1922, %v2016
        %v2029 = vadd.f32 %v1925, %v2019
        %v2030 = vadd.f32 %v1927, %v2021
        %v2031 = vadd.f32 %v1930, %v2024
        %v2032 = vld [vmem:[#allocation3 + $0x4] sm:$0xf]
        %v2033 = vld [vmem:[#allocation3 + $0x8] sm:$0xf]
        %v2034 = vld [vmem:[#allocation3 + $0xc] sm:$0xf]
        %v2035 = vld [vmem:[#allocation3 + $0x10] sm:$0xf]
        %v2036 = vld [vmem:[#allocation3 + $0x14] sm:$0xf]
        %v2037 = vld [vmem:[#allocation3 + $0x18] sm:$0x1]
        %s2038 = scalar_lea.vmem [#allocation8], 832
        %v2039 = vld [vmem:[%s2038] sm:$0xf]
        %v2040 = vld [vmem:[%s2038 + $0x4] sm:$0xf]
        %v2041 = vld [vmem:[%s2038 + $0x8] sm:$0xf]
        %v2042 = vld [vmem:[%s2038 + $0xc] sm:$0xf]
        %v2043 = vld [vmem:[%s2038 + $0x10] sm:$0xf]
        %v2044 = vld [vmem:[%s2038 + $0x14] sm:$0xf]
        %v2045 = vld [vmem:[%s2038 + $0x18] sm:$0xf]
        %v2046 = vld [vmem:[%s2038 + $0x1c] sm:$0xf]
        %v2047 = vld [vmem:[%s2038 + $0x20] sm:$0xf]
        %v2048 = vld [vmem:[%s2038 + $0x24] sm:$0xf]
        %v2049 = vld [vmem:[%s2038 + $0x28] sm:$0xf]
        %v2050 = vld [vmem:[%s2038 + $0x2c] sm:$0xf]
        %v2051 = vld [vmem:[%s2038 + $0x30] sm:$0xf]
        %v2052 = vld [vmem:[%s2038 + $0x34] sm:$0xf]
        %v2053 = vld [vmem:[%s2038 + $0x38] sm:$0xf]
        %v2054 = vld [vmem:[%s2038 + $0x3c] sm:$0xf]
        %v2061 = vunpack.c.l.b16 %v2032
        %v2062 = vunpack.c.l.b16 %v2033
        %v2063 = vunpack.c.l.b16 %v2034
        %v2064 = vunpack.c.l.b16 %v2035
        %v2065 = vunpack.c.l.b16 %v2036
        %v2066 = vunpack.c.l.b16 %v2037
        %v2067 = vpack.c.b16 %v2062, %v2061
        %v2068 = vpack.c.b16 %v2064, %v2063
        %v2069 = vpack.c.b16 %v2066, %v2065
        %v2071 = vshrl.u32 %v2067, 16
        %v2073 = vshll.u32 %v2067, 16
        %v2075 = vrot.slane %v2073, 1
        %v2076 = vor.u32 %v2071, %v2075
        %v2078 = vshll.u32 %v2068, 16
        %v2080 = vrot.slane %v2078, 1
        %v2081 = vsel %vm770, %v2076, %v2080
        %v2082 = vshrl.u32 %v2068, 16
        %v2084 = vor.u32 %v2082, %v2080
        %v2086 = vshll.u32 %v2069, 16
        %v2088 = vrot.slane %v2086, 1
        %v2089 = vsel %vm770, %v2084, %v2088
        %v2090 = vshrl.u32 %v2069, 16
        %v2092 = vor.u32 %v2090, %v2088
        %v2112 = vunpack.c.l.b16 %v2039
        %v2113 = vunpack.c.l.b16 %v2040
        %v2114 = vunpack.c.l.b16 %v2041
        %v2115 = vunpack.c.l.b16 %v2042
        %v2116 = vunpack.c.l.b16 %v2043
        %v2117 = vunpack.c.l.b16 %v2044
        %v2118 = vunpack.c.l.b16 %v2045
        %v2119 = vunpack.c.l.b16 %v2046
        %v2120 = vunpack.c.l.b16 %v2047
        %v2121 = vunpack.c.l.b16 %v2048
        %v2122 = vunpack.c.l.b16 %v2049
        %v2123 = vunpack.c.l.b16 %v2050
        %v2124 = vunpack.c.l.b16 %v2051
        %v2125 = vunpack.c.l.b16 %v2052
        %v2126 = vunpack.c.l.b16 %v2053
        %v2127 = vunpack.c.l.b16 %v2054
        %v2128 = vpack.c.b16 %v2113, %v2112
        %v2129 = vpack.c.b16 %v2115, %v2114
        %v2130 = vpack.c.b16 %v2117, %v2116
        %v2131 = vpack.c.b16 %v2119, %v2118
        %v2132 = vpack.c.b16 %v2121, %v2120
        %v2133 = vpack.c.b16 %v2123, %v2122
        %v2134 = vpack.c.b16 %v2125, %v2124
        %v2135 = vpack.c.b16 %v2127, %v2126
        %2144 = vmatpush.bf16.msra.mxu0 %v2135
        %2145 = vmatpush.bf16.msra.mxu0 %v2134
        %2146 = vmatpush.bf16.msra.mxu0 %v2133
        %2147 = vmatpush.bf16.msra.mxu0 %v2132
        %2148 = vmatpush.bf16.msra.mxu0 %v2131
        %2149 = vmatpush.bf16.msra.mxu0 %v2130
        %2150 = vmatpush.bf16.msra.mxu0 %v2129
        %2151 = vmatpush.bf16.msra.mxu0 %v2128
        %2152 = vmatmul.bf16.gmra.mxu0 %v2081
        %v2153 = vpop.f32.mrf.mxu0
        %v2154 = vadd.f32 0.0, %v2153
        %v2155 = vpop.f32.mrf.mxu0
        %v2156 = vadd.f32 0.0, %v2155
        %2157 = vmatmul.bf16.gmra.mxu0 %v2089
        %v2158 = vpop.f32.mrf.mxu0
        %v2159 = vadd.f32 0.0, %v2158
        %v2160 = vpop.f32.mrf.mxu0
        %v2161 = vadd.f32 0.0, %v2160
        %2162 = vmatmul.bf16.gmra.mxu0 %v2092
        %v2163 = vpop.f32.mrf.mxu0
        %v2164 = vadd.f32 0.0, %v2163
        %v2165 = vpop.f32.mrf.mxu0
        %2166 = vdwg.mxu0
        %v2167 = vadd.f32 %v2027, %v2154
        %v2168 = vadd.f32 %v2028, %v2156
        %v2169 = vadd.f32 %v2029, %v2159
        %v2170 = vadd.f32 %v2030, %v2161
        %v2171 = vadd.f32 %v2031, %v2164
        %v2172 = vld [vmem:[#allocation3 + $0x4] sm:$0xe]
        %s2173 = scalar_lea.vmem [#allocation8], 896
        %v2174 = vld [vmem:[%s2173] sm:$0xf]
        %v2175 = vld [vmem:[%s2173 + $0x4] sm:$0xf]
        %v2176 = vld [vmem:[%s2173 + $0x8] sm:$0xf]
        %v2177 = vld [vmem:[%s2173 + $0xc] sm:$0xf]
        %v2178 = vld [vmem:[%s2173 + $0x10] sm:$0xf]
        %v2179 = vld [vmem:[%s2173 + $0x14] sm:$0xf]
        %v2180 = vld [vmem:[%s2173 + $0x18] sm:$0xf]
        %v2181 = vld [vmem:[%s2173 + $0x1c] sm:$0xf]
        %v2182 = vld [vmem:[%s2173 + $0x20] sm:$0xf]
        %v2183 = vld [vmem:[%s2173 + $0x24] sm:$0xf]
        %v2184 = vld [vmem:[%s2173 + $0x28] sm:$0xf]
        %v2185 = vld [vmem:[%s2173 + $0x2c] sm:$0xf]
        %v2186 = vld [vmem:[%s2173 + $0x30] sm:$0xf]
        %v2187 = vld [vmem:[%s2173 + $0x34] sm:$0xf]
        %v2188 = vld [vmem:[%s2173 + $0x38] sm:$0xf]
        %v2189 = vld [vmem:[%s2173 + $0x3c] sm:$0xf]
        %v2191 = vunpack.c.l.b16 %v2172
        %v2192 = vpack.c.b16 %v2062, %v2191
        %v2193 = vrot.slane %v2192, 1
        %v2194 = vrot.slane %v2068, 1
        %v2195 = vsel %vm894, %v2193, %v2194
        %v2196 = vrot.slane %v2069, 1
        %v2197 = vsel %vm894, %v2194, %v2196
        %v2217 = vunpack.c.l.b16 %v2174
        %v2218 = vunpack.c.l.b16 %v2175
        %v2219 = vunpack.c.l.b16 %v2176
        %v2220 = vunpack.c.l.b16 %v2177
        %v2221 = vunpack.c.l.b16 %v2178
        %v2222 = vunpack.c.l.b16 %v2179
        %v2223 = vunpack.c.l.b16 %v2180
        %v2224 = vunpack.c.l.b16 %v2181
        %v2225 = vunpack.c.l.b16 %v2182
        %v2226 = vunpack.c.l.b16 %v2183
        %v2227 = vunpack.c.l.b16 %v2184
        %v2228 = vunpack.c.l.b16 %v2185
        %v2229 = vunpack.c.l.b16 %v2186
        %v2230 = vunpack.c.l.b16 %v2187
        %v2231 = vunpack.c.l.b16 %v2188
        %v2232 = vunpack.c.l.b16 %v2189
        %v2233 = vpack.c.b16 %v2218, %v2217
        %v2234 = vpack.c.b16 %v2220, %v2219
        %v2235 = vpack.c.b16 %v2222, %v2221
        %v2236 = vpack.c.b16 %v2224, %v2223
        %v2237 = vpack.c.b16 %v2226, %v2225
        %v2238 = vpack.c.b16 %v2228, %v2227
        %v2239 = vpack.c.b16 %v2230, %v2229
        %v2240 = vpack.c.b16 %v2232, %v2231
        %2249 = vmatpush.bf16.msra.mxu0 %v2240
        %2250 = vmatpush.bf16.msra.mxu0 %v2239
        %2251 = vmatpush.bf16.msra.mxu0 %v2238
        %2252 = vmatpush.bf16.msra.mxu0 %v2237
        %2253 = vmatpush.bf16.msra.mxu0 %v2236
        %2254 = vmatpush.bf16.msra.mxu0 %v2235
        %2255 = vmatpush.bf16.msra.mxu0 %v2234
        %2256 = vmatpush.bf16.msra.mxu0 %v2233
        %2257 = vmatmul.bf16.gmra.mxu0 %v2195
        %v2258 = vpop.f32.mrf.mxu0
        %v2259 = vadd.f32 0.0, %v2258
        %v2260 = vpop.f32.mrf.mxu0
        %v2261 = vadd.f32 0.0, %v2260
        %2262 = vmatmul.bf16.gmra.mxu0 %v2197
        %v2263 = vpop.f32.mrf.mxu0
        %v2264 = vadd.f32 0.0, %v2263
        %v2265 = vpop.f32.mrf.mxu0
        %v2266 = vadd.f32 0.0, %v2265
        %2267 = vmatmul.bf16.gmra.mxu0 %v2196
        %v2268 = vpop.f32.mrf.mxu0
        %v2269 = vadd.f32 0.0, %v2268
        %v2270 = vpop.f32.mrf.mxu0
        %2271 = vdwg.mxu0
        %v2272 = vadd.f32 %v2167, %v2259
        %v2273 = vadd.f32 %v2168, %v2261
        %v2274 = vadd.f32 %v2169, %v2264
        %v2275 = vadd.f32 %v2170, %v2266
        %v2276 = vadd.f32 %v2171, %v2269
        %s2277 = scalar_lea.vmem [#allocation11], 2
        %v2278 = vld [vmem:[%s2277] sm:$0x1]
        %v2280 = vperm.slane %v2278, 0
        %v2282 = vadd.f32 %v2272, %v2280
        %v2283 = vadd.f32 %v2273, %v2280
        %v2284 = vadd.f32 %v2274, %v2280
        %v2285 = vadd.f32 %v2275, %v2280
        %v2286 = vadd.f32 %v2276, %v2280
        %v2287 = vadd.f32 %v2282, %v1650
        %v2288 = vadd.f32 %v2283, %v1651
        %v2289 = vadd.f32 %v2284, %v1652
        %v2290 = vadd.f32 %v2285, %v1653
        %v2291 = vadd.f32 %v2286, %v1654
        %v2292 = vmul.f32 %v2287, %v333
        %v2293 = vmul.f32 %v2288, %v334
        %v2294 = vmul.f32 %v2289, %v335
        %v2295 = vmul.f32 %v2290, %v336
        %v2296 = vmul.f32 %v2291, %v337
        %2297 = vst [vmem:[#allocation4] sm:$0xff] %v2292
        %2298 = vst [vmem:[#allocation4 + $0x8] sm:$0xff] %v2293
        %2299 = vst [vmem:[#allocation4 + $0x10] sm:$0xff] %v2294
        %2300 = vst [vmem:[#allocation4 + $0x18] sm:$0xff] %v2295
        %2301 = vst [vmem:[#allocation4 + $0x20] sm:$0xff] %v2296
        %v2302 = vld [vmem:[#allocation4] sm:$0xff]
        %v2303 = vld [vmem:[#allocation4 + $0x8] sm:$0xff]
        %v2304 = vld [vmem:[#allocation4 + $0x10] sm:$0xff]
        %v2305 = vld [vmem:[#allocation4 + $0x18] sm:$0xff]
        %v2306 = vld [vmem:[#allocation4 + $0x20] sm:$0xff]
        %s2307 = scalar_lea.vmem [#allocation13], 3
        %v2308 = vld [vmem:[%s2307] sm:$0x1]
        %v2310 = vperm.slane %v2308, 0
        %v2312 = vmul.f32 %v2302, %v2310
        %v2313 = vmul.f32 %v2303, %v2310
        %v2314 = vmul.f32 %v2304, %v2310
        %v2315 = vmul.f32 %v2305, %v2310
        %v2316 = vmul.f32 %v2306, %v2310
        %s2317 = scalar_lea.vmem [#allocation14], 3
        %v2318 = vld [vmem:[%s2317] sm:$0x1]
        %v2320 = vperm.slane %v2318, 0
        %v2322 = vadd.f32 %v2312, %v2320
        %v2323 = vadd.f32 %v2313, %v2320
        %v2324 = vadd.f32 %v2314, %v2320
        %v2325 = vadd.f32 %v2315, %v2320
        %v2326 = vadd.f32 %v2316, %v2320
        %v2327 = vtanh.pop %v2322
        %v2328 = vtanh.pop %v2323
        %v2329 = vtanh.pop %v2324
        %v2330 = vtanh.pop %v2325
        %v2331 = vtanh.pop %v2326
        %v2332 = vmul.f32 %v2327, %v343
        %v2333 = vmul.f32 %v2328, %v344
        %v2334 = vmul.f32 %v2329, %v345
        %v2335 = vmul.f32 %v2330, %v346
        %v2336 = vmul.f32 %v2331, %v347
        %v2337 = vpack.c.bf16 %v2332, %v2332
        %v2338 = vpack.c.bf16 %v2333, %v2333
        %v2339 = vpack.c.bf16 %v2334, %v2334
        %v2340 = vpack.c.bf16 %v2335, %v2335
        %v2341 = vpack.c.bf16 %v2336, %v2336
        %2342 = vst [vmem:[#allocation3 + $0x4] sm:$0xf] %v2337
        %2343 = vst [vmem:[#allocation3 + $0x8] sm:$0xf] %v2338
        %2344 = vst [vmem:[#allocation3 + $0xc] sm:$0xf] %v2339
        %2345 = vst [vmem:[#allocation3 + $0x10] sm:$0xf] %v2340
        %2346 = vst [vmem:[#allocation3 + $0x14] sm:$0xf] %v2341
        %v2347 = vld [vmem:[#allocation3] sm:$0x8]
        %v2348 = vld [vmem:[#allocation3 + $0x4] sm:$0xf]
        %v2349 = vld [vmem:[#allocation3 + $0x8] sm:$0xf]
        %v2350 = vld [vmem:[#allocation3 + $0xc] sm:$0xf]
        %v2351 = vld [vmem:[#allocation3 + $0x10] sm:$0xf]
        %v2352 = vld [vmem:[#allocation3 + $0x14] sm:$0x7]
        %s2353 = scalar_lea.vmem [#allocation8], 960
        %v2354 = vld [vmem:[%s2353] sm:$0xf]
        %v2355 = vld [vmem:[%s2353 + $0x4] sm:$0xf]
        %v2356 = vld [vmem:[%s2353 + $0x8] sm:$0xf]
        %v2357 = vld [vmem:[%s2353 + $0xc] sm:$0xf]
        %v2358 = vld [vmem:[%s2353 + $0x10] sm:$0xf]
        %v2359 = vld [vmem:[%s2353 + $0x14] sm:$0xf]
        %v2360 = vld [vmem:[%s2353 + $0x18] sm:$0xf]
        %v2361 = vld [vmem:[%s2353 + $0x1c] sm:$0xf]
        %v2362 = vld [vmem:[%s2353 + $0x20] sm:$0xf]
        %v2363 = vld [vmem:[%s2353 + $0x24] sm:$0xf]
        %v2364 = vld [vmem:[%s2353 + $0x28] sm:$0xf]
        %v2365 = vld [vmem:[%s2353 + $0x2c] sm:$0xf]
        %v2366 = vld [vmem:[%s2353 + $0x30] sm:$0xf]
        %v2367 = vld [vmem:[%s2353 + $0x34] sm:$0xf]
        %v2368 = vld [vmem:[%s2353 + $0x38] sm:$0xf]
        %v2369 = vld [vmem:[%s2353 + $0x3c] sm:$0xf]
        %v2370 = vld [vmem:[#allocation3 + $0x14] sm:$0xf]
        %s2371 = scalar_lea.vmem [#allocation8], 1024
        %v2372 = vld [vmem:[%s2371] sm:$0xf]
        %v2373 = vld [vmem:[%s2371 + $0x4] sm:$0xf]
        %v2374 = vld [vmem:[%s2371 + $0x8] sm:$0xf]
        %v2375 = vld [vmem:[%s2371 + $0xc] sm:$0xf]
        %v2376 = vld [vmem:[%s2371 + $0x10] sm:$0xf]
        %v2377 = vld [vmem:[%s2371 + $0x14] sm:$0xf]
        %v2378 = vld [vmem:[%s2371 + $0x18] sm:$0xf]
        %v2379 = vld [vmem:[%s2371 + $0x1c] sm:$0xf]
        %v2380 = vld [vmem:[%s2371 + $0x20] sm:$0xf]
        %v2381 = vld [vmem:[%s2371 + $0x24] sm:$0xf]
        %v2382 = vld [vmem:[%s2371 + $0x28] sm:$0xf]
        %v2383 = vld [vmem:[%s2371 + $0x2c] sm:$0xf]
        %v2384 = vld [vmem:[%s2371 + $0x30] sm:$0xf]
        %v2385 = vld [vmem:[%s2371 + $0x34] sm:$0xf]
        %v2386 = vld [vmem:[%s2371 + $0x38] sm:$0xf]
        %v2387 = vld [vmem:[%s2371 + $0x3c] sm:$0xf]
        %v2394 = vunpack.c.l.b16 %v2347
        %v2395 = vunpack.c.l.b16 %v2348
        %v2396 = vunpack.c.l.b16 %v2349
        %v2397 = vunpack.c.l.b16 %v2350
        %v2398 = vunpack.c.l.b16 %v2351
        %v2399 = vunpack.c.l.b16 %v2370
        %v2400 = vpack.c.b16 %v2395, %v2394
        %v2401 = vpack.c.b16 %v2397, %v2396
        %v2402 = vpack.c.b16 %v2399, %v2398
        %v2404 = vshrl.u32 %v2400, 16
        %v2406 = vrot.slane %v2404, 3
        %v2407 = vshll.u32 %v2400, 16
        %v2409 = vrot.slane %v2407, 4
        %v2410 = vor.u32 %v2406, %v2409
        %v2412 = vshrl.u32 %v2401, 16
        %v2414 = vrot.slane %v2412, 3
        %v2415 = vshll.u32 %v2401, 16
        %v2417 = vrot.slane %v2415, 4
        %v2418 = vor.u32 %v2414, %v2417
        %v2419 = vsel %vm449, %v2410, %v2418
        %v2421 = vshrl.u32 %v2402, 16
        %v2423 = vrot.slane %v2421, 3
        %v2424 = vshll.u32 %v2402, 16
        %v2426 = vrot.slane %v2424, 4
        %v2427 = vor.u32 %v2423, %v2426
        %v2428 = vsel %vm449, %v2418, %v2427
        %v2448 = vunpack.c.l.b16 %v2372
        %v2449 = vunpack.c.l.b16 %v2373
        %v2450 = vunpack.c.l.b16 %v2374
        %v2451 = vunpack.c.l.b16 %v2375
        %v2452 = vunpack.c.l.b16 %v2376
        %v2453 = vunpack.c.l.b16 %v2377
        %v2454 = vunpack.c.l.b16 %v2378
        %v2455 = vunpack.c.l.b16 %v2379
        %v2456 = vunpack.c.l.b16 %v2380
        %v2457 = vunpack.c.l.b16 %v2381
        %v2458 = vunpack.c.l.b16 %v2382
        %v2459 = vunpack.c.l.b16 %v2383
        %v2460 = vunpack.c.l.b16 %v2384
        %v2461 = vunpack.c.l.b16 %v2385
        %v2462 = vunpack.c.l.b16 %v2386
        %v2463 = vunpack.c.l.b16 %v2387
        %v2464 = vpack.c.b16 %v2449, %v2448
        %v2465 = vpack.c.b16 %v2451, %v2450
        %v2466 = vpack.c.b16 %v2453, %v2452
        %v2467 = vpack.c.b16 %v2455, %v2454
        %v2468 = vpack.c.b16 %v2457, %v2456
        %v2469 = vpack.c.b16 %v2459, %v2458
        %v2470 = vpack.c.b16 %v2461, %v2460
        %v2471 = vpack.c.b16 %v2463, %v2462
        %2480 = vmatpush.bf16.msra.mxu0 %v2471
        %2481 = vmatpush.bf16.msra.mxu0 %v2470
        %2482 = vmatpush.bf16.msra.mxu0 %v2469
        %2483 = vmatpush.bf16.msra.mxu0 %v2468
        %2484 = vmatpush.bf16.msra.mxu0 %v2467
        %2485 = vmatpush.bf16.msra.mxu0 %v2466
        %2486 = vmatpush.bf16.msra.mxu0 %v2465
        %2487 = vmatpush.bf16.msra.mxu0 %v2464
        %2488 = vmatmul.bf16.gmra.mxu0 %v2419
        %v2489 = vpop.f32.mrf.mxu0
        %v2490 = vadd.f32 0.0, %v2489
        %v2491 = vpop.f32.mrf.mxu0
        %v2492 = vadd.f32 0.0, %v2491
        %2493 = vmatmul.bf16.gmra.mxu0 %v2428
        %v2494 = vpop.f32.mrf.mxu0
        %v2495 = vadd.f32 0.0, %v2494
        %v2496 = vpop.f32.mrf.mxu0
        %v2497 = vadd.f32 0.0, %v2496
        %2498 = vmatmul.bf16.gmra.mxu0 %v2427
        %v2499 = vpop.f32.mrf.mxu0
        %v2500 = vadd.f32 0.0, %v2499
        %v2501 = vpop.f32.mrf.mxu0
        %2502 = vdwg.mxu0
        %v2504 = vunpack.c.l.b16 %v2352
        %v2505 = vpack.c.b16 %v2504, %v2398
        %v2506 = vrot.slane %v2400, 3
        %v2507 = vrot.slane %v2401, 3
        %v2508 = vsel %vm553, %v2506, %v2507
        %v2509 = vrot.slane %v2505, 3
        %v2510 = vsel %vm553, %v2507, %v2509
        %v2530 = vunpack.c.l.b16 %v2354
        %v2531 = vunpack.c.l.b16 %v2355
        %v2532 = vunpack.c.l.b16 %v2356
        %v2533 = vunpack.c.l.b16 %v2357
        %v2534 = vunpack.c.l.b16 %v2358
        %v2535 = vunpack.c.l.b16 %v2359
        %v2536 = vunpack.c.l.b16 %v2360
        %v2537 = vunpack.c.l.b16 %v2361
        %v2538 = vunpack.c.l.b16 %v2362
        %v2539 = vunpack.c.l.b16 %v2363
        %v2540 = vunpack.c.l.b16 %v2364
        %v2541 = vunpack.c.l.b16 %v2365
        %v2542 = vunpack.c.l.b16 %v2366
        %v2543 = vunpack.c.l.b16 %v2367
        %v2544 = vunpack.c.l.b16 %v2368
        %v2545 = vunpack.c.l.b16 %v2369
        %v2546 = vpack.c.b16 %v2531, %v2530
        %v2547 = vpack.c.b16 %v2533, %v2532
        %v2548 = vpack.c.b16 %v2535, %v2534
        %v2549 = vpack.c.b16 %v2537, %v2536
        %v2550 = vpack.c.b16 %v2539, %v2538
        %v2551 = vpack.c.b16 %v2541, %v2540
        %v2552 = vpack.c.b16 %v2543, %v2542
        %v2553 = vpack.c.b16 %v2545, %v2544
        %2562 = vmatpush.bf16.msra.mxu0 %v2553
        %2563 = vmatpush.bf16.msra.mxu0 %v2552
        %2564 = vmatpush.bf16.msra.mxu0 %v2551
        %2565 = vmatpush.bf16.msra.mxu0 %v2550
        %2566 = vmatpush.bf16.msra.mxu0 %v2549
        %2567 = vmatpush.bf16.msra.mxu0 %v2548
        %2568 = vmatpush.bf16.msra.mxu0 %v2547
        %2569 = vmatpush.bf16.msra.mxu0 %v2546
        %2570 = vmatmul.bf16.gmra.mxu0 %v2508
        %v2571 = vpop.f32.mrf.mxu0
        %v2572 = vadd.f32 %v2490, %v2571
        %v2573 = vpop.f32.mrf.mxu0
        %v2574 = vadd.f32 %v2492, %v2573
        %2575 = vmatmul.bf16.gmra.mxu0 %v2510
        %v2576 = vpop.f32.mrf.mxu0
        %v2577 = vadd.f32 %v2495, %v2576
        %v2578 = vpop.f32.mrf.mxu0
        %v2579 = vadd.f32 %v2497, %v2578
        %2580 = vmatmul.bf16.gmra.mxu0 %v2509
        %v2581 = vpop.f32.mrf.mxu0
        %v2582 = vadd.f32 %v2500, %v2581
        %v2583 = vpop.f32.mrf.mxu0
        %2584 = vdwg.mxu0
        %s2585 = scalar_lea.vmem [#allocation8], 1088
        %v2586 = vld [vmem:[%s2585] sm:$0xf]
        %v2587 = vld [vmem:[%s2585 + $0x4] sm:$0xf]
        %v2588 = vld [vmem:[%s2585 + $0x8] sm:$0xf]
        %v2589 = vld [vmem:[%s2585 + $0xc] sm:$0xf]
        %v2590 = vld [vmem:[%s2585 + $0x10] sm:$0xf]
        %v2591 = vld [vmem:[%s2585 + $0x14] sm:$0xf]
        %v2592 = vld [vmem:[%s2585 + $0x18] sm:$0xf]
        %v2593 = vld [vmem:[%s2585 + $0x1c] sm:$0xf]
        %v2594 = vld [vmem:[%s2585 + $0x20] sm:$0xf]
        %v2595 = vld [vmem:[%s2585 + $0x24] sm:$0xf]
        %v2596 = vld [vmem:[%s2585 + $0x28] sm:$0xf]
        %v2597 = vld [vmem:[%s2585 + $0x2c] sm:$0xf]
        %v2598 = vld [vmem:[%s2585 + $0x30] sm:$0xf]
        %v2599 = vld [vmem:[%s2585 + $0x34] sm:$0xf]
        %v2600 = vld [vmem:[%s2585 + $0x38] sm:$0xf]
        %v2601 = vld [vmem:[%s2585 + $0x3c] sm:$0xf]
        %v2602 = vpack.c.b16 %v2396, %v2395
        %v2603 = vpack.c.b16 %v2398, %v2397
        %v2604 = vpack.c.b16 %v2399, %v2399
        %v2624 = vunpack.c.l.b16 %v2586
        %v2625 = vunpack.c.l.b16 %v2587
        %v2626 = vunpack.c.l.b16 %v2588
        %v2627 = vunpack.c.l.b16 %v2589
        %v2628 = vunpack.c.l.b16 %v2590
        %v2629 = vunpack.c.l.b16 %v2591
        %v2630 = vunpack.c.l.b16 %v2592
        %v2631 = vunpack.c.l.b16 %v2593
        %v2632 = vunpack.c.l.b16 %v2594
        %v2633 = vunpack.c.l.b16 %v2595
        %v2634 = vunpack.c.l.b16 %v2596
        %v2635 = vunpack.c.l.b16 %v2597
        %v2636 = vunpack.c.l.b16 %v2598
        %v2637 = vunpack.c.l.b16 %v2599
        %v2638 = vunpack.c.l.b16 %v2600
        %v2639 = vunpack.c.l.b16 %v2601
        %v2640 = vpack.c.b16 %v2625, %v2624
        %v2641 = vpack.c.b16 %v2627, %v2626
        %v2642 = vpack.c.b16 %v2629, %v2628
        %v2643 = vpack.c.b16 %v2631, %v2630
        %v2644 = vpack.c.b16 %v2633, %v2632
        %v2645 = vpack.c.b16 %v2635, %v2634
        %v2646 = vpack.c.b16 %v2637, %v2636
        %v2647 = vpack.c.b16 %v2639, %v2638
        %2656 = vmatpush.bf16.msra.mxu0 %v2647
        %2657 = vmatpush.bf16.msra.mxu0 %v2646
        %2658 = vmatpush.bf16.msra.mxu0 %v2645
        %2659 = vmatpush.bf16.msra.mxu0 %v2644
        %2660 = vmatpush.bf16.msra.mxu0 %v2643
        %2661 = vmatpush.bf16.msra.mxu0 %v2642
        %2662 = vmatpush.bf16.msra.mxu0 %v2641
        %2663 = vmatpush.bf16.msra.mxu0 %v2640
        %2664 = vmatmul.bf16.gmra.mxu0 %v2602
        %v2665 = vpop.f32.mrf.mxu0
        %v2666 = vadd.f32 0.0, %v2665
        %v2667 = vpop.f32.mrf.mxu0
        %v2668 = vadd.f32 0.0, %v2667
        %2669 = vmatmul.bf16.gmra.mxu0 %v2603
        %v2670 = vpop.f32.mrf.mxu0
        %v2671 = vadd.f32 0.0, %v2670
        %v2672 = vpop.f32.mrf.mxu0
        %v2673 = vadd.f32 0.0, %v2672
        %2674 = vmatmul.bf16.gmra.mxu0 %v2604
        %v2675 = vpop.f32.mrf.mxu0
        %v2676 = vadd.f32 0.0, %v2675
        %v2677 = vpop.f32.mrf.mxu0
        %2678 = vdwg.mxu0
        %v2679 = vadd.f32 %v2572, %v2666
        %v2680 = vadd.f32 %v2574, %v2668
        %v2681 = vadd.f32 %v2577, %v2671
        %v2682 = vadd.f32 %v2579, %v2673
        %v2683 = vadd.f32 %v2582, %v2676
        %v2684 = vld [vmem:[#allocation3 + $0x4] sm:$0xf]
        %v2685 = vld [vmem:[#allocation3 + $0x8] sm:$0xf]
        %v2686 = vld [vmem:[#allocation3 + $0xc] sm:$0xf]
        %v2687 = vld [vmem:[#allocation3 + $0x10] sm:$0xf]
        %v2688 = vld [vmem:[#allocation3 + $0x14] sm:$0xf]
        %v2689 = vld [vmem:[#allocation3 + $0x18] sm:$0x1]
        %s2690 = scalar_lea.vmem [#allocation8], 1152
        %v2691 = vld [vmem:[%s2690] sm:$0xf]
        %v2692 = vld [vmem:[%s2690 + $0x4] sm:$0xf]
        %v2693 = vld [vmem:[%s2690 + $0x8] sm:$0xf]
        %v2694 = vld [vmem:[%s2690 + $0xc] sm:$0xf]
        %v2695 = vld [vmem:[%s2690 + $0x10] sm:$0xf]
        %v2696 = vld [vmem:[%s2690 + $0x14] sm:$0xf]
        %v2697 = vld [vmem:[%s2690 + $0x18] sm:$0xf]
        %v2698 = vld [vmem:[%s2690 + $0x1c] sm:$0xf]
        %v2699 = vld [vmem:[%s2690 + $0x20] sm:$0xf]
        %v2700 = vld [vmem:[%s2690 + $0x24] sm:$0xf]
        %v2701 = vld [vmem:[%s2690 + $0x28] sm:$0xf]
        %v2702 = vld [vmem:[%s2690 + $0x2c] sm:$0xf]
        %v2703 = vld [vmem:[%s2690 + $0x30] sm:$0xf]
        %v2704 = vld [vmem:[%s2690 + $0x34] sm:$0xf]
        %v2705 = vld [vmem:[%s2690 + $0x38] sm:$0xf]
        %v2706 = vld [vmem:[%s2690 + $0x3c] sm:$0xf]
        %v2713 = vunpack.c.l.b16 %v2684
        %v2714 = vunpack.c.l.b16 %v2685
        %v2715 = vunpack.c.l.b16 %v2686
        %v2716 = vunpack.c.l.b16 %v2687
        %v2717 = vunpack.c.l.b16 %v2688
        %v2718 = vunpack.c.l.b16 %v2689
        %v2719 = vpack.c.b16 %v2714, %v2713
        %v2720 = vpack.c.b16 %v2716, %v2715
        %v2721 = vpack.c.b16 %v2718, %v2717
        %v2723 = vshrl.u32 %v2719, 16
        %v2725 = vshll.u32 %v2719, 16
        %v2727 = vrot.slane %v2725, 1
        %v2728 = vor.u32 %v2723, %v2727
        %v2730 = vshll.u32 %v2720, 16
        %v2732 = vrot.slane %v2730, 1
        %v2733 = vsel %vm770, %v2728, %v2732
        %v2734 = vshrl.u32 %v2720, 16
        %v2736 = vor.u32 %v2734, %v2732
        %v2738 = vshll.u32 %v2721, 16
        %v2740 = vrot.slane %v2738, 1
        %v2741 = vsel %vm770, %v2736, %v2740
        %v2742 = vshrl.u32 %v2721, 16
        %v2744 = vor.u32 %v2742, %v2740
        %v2764 = vunpack.c.l.b16 %v2691
        %v2765 = vunpack.c.l.b16 %v2692
        %v2766 = vunpack.c.l.b16 %v2693
        %v2767 = vunpack.c.l.b16 %v2694
        %v2768 = vunpack.c.l.b16 %v2695
        %v2769 = vunpack.c.l.b16 %v2696
        %v2770 = vunpack.c.l.b16 %v2697
        %v2771 = vunpack.c.l.b16 %v2698
        %v2772 = vunpack.c.l.b16 %v2699
        %v2773 = vunpack.c.l.b16 %v2700
        %v2774 = vunpack.c.l.b16 %v2701
        %v2775 = vunpack.c.l.b16 %v2702
        %v2776 = vunpack.c.l.b16 %v2703
        %v2777 = vunpack.c.l.b16 %v2704
        %v2778 = vunpack.c.l.b16 %v2705
        %v2779 = vunpack.c.l.b16 %v2706
        %v2780 = vpack.c.b16 %v2765, %v2764
        %v2781 = vpack.c.b16 %v2767, %v2766
        %v2782 = vpack.c.b16 %v2769, %v2768
        %v2783 = vpack.c.b16 %v2771, %v2770
        %v2784 = vpack.c.b16 %v2773, %v2772
        %v2785 = vpack.c.b16 %v2775, %v2774
        %v2786 = vpack.c.b16 %v2777, %v2776
        %v2787 = vpack.c.b16 %v2779, %v2778
        %2796 = vmatpush.bf16.msra.mxu0 %v2787
        %2797 = vmatpush.bf16.msra.mxu0 %v2786
        %2798 = vmatpush.bf16.msra.mxu0 %v2785
        %2799 = vmatpush.bf16.msra.mxu0 %v2784
        %2800 = vmatpush.bf16.msra.mxu0 %v2783
        %2801 = vmatpush.bf16.msra.mxu0 %v2782
        %2802 = vmatpush.bf16.msra.mxu0 %v2781
        %2803 = vmatpush.bf16.msra.mxu0 %v2780
        %2804 = vmatmul.bf16.gmra.mxu0 %v2733
        %v2805 = vpop.f32.mrf.mxu0
        %v2806 = vadd.f32 0.0, %v2805
        %v2807 = vpop.f32.mrf.mxu0
        %v2808 = vadd.f32 0.0, %v2807
        %2809 = vmatmul.bf16.gmra.mxu0 %v2741
        %v2810 = vpop.f32.mrf.mxu0
        %v2811 = vadd.f32 0.0, %v2810
        %v2812 = vpop.f32.mrf.mxu0
        %v2813 = vadd.f32 0.0, %v2812
        %2814 = vmatmul.bf16.gmra.mxu0 %v2744
        %v2815 = vpop.f32.mrf.mxu0
        %v2816 = vadd.f32 0.0, %v2815
        %v2817 = vpop.f32.mrf.mxu0
        %2818 = vdwg.mxu0
        %v2819 = vadd.f32 %v2679, %v2806
        %v2820 = vadd.f32 %v2680, %v2808
        %v2821 = vadd.f32 %v2681, %v2811
        %v2822 = vadd.f32 %v2682, %v2813
        %v2823 = vadd.f32 %v2683, %v2816
        %v2824 = vld [vmem:[#allocation3 + $0x4] sm:$0xe]
        %s2825 = scalar_lea.vmem [#allocation8], 1216
        %v2826 = vld [vmem:[%s2825] sm:$0xf]
        %v2827 = vld [vmem:[%s2825 + $0x4] sm:$0xf]
        %v2828 = vld [vmem:[%s2825 + $0x8] sm:$0xf]
        %v2829 = vld [vmem:[%s2825 + $0xc] sm:$0xf]
        %v2830 = vld [vmem:[%s2825 + $0x10] sm:$0xf]
        %v2831 = vld [vmem:[%s2825 + $0x14] sm:$0xf]
        %v2832 = vld [vmem:[%s2825 + $0x18] sm:$0xf]
        %v2833 = vld [vmem:[%s2825 + $0x1c] sm:$0xf]
        %v2834 = vld [vmem:[%s2825 + $0x20] sm:$0xf]
        %v2835 = vld [vmem:[%s2825 + $0x24] sm:$0xf]
        %v2836 = vld [vmem:[%s2825 + $0x28] sm:$0xf]
        %v2837 = vld [vmem:[%s2825 + $0x2c] sm:$0xf]
        %v2838 = vld [vmem:[%s2825 + $0x30] sm:$0xf]
        %v2839 = vld [vmem:[%s2825 + $0x34] sm:$0xf]
        %v2840 = vld [vmem:[%s2825 + $0x38] sm:$0xf]
        %v2841 = vld [vmem:[%s2825 + $0x3c] sm:$0xf]
        %v2843 = vunpack.c.l.b16 %v2824
        %v2844 = vpack.c.b16 %v2714, %v2843
        %v2845 = vrot.slane %v2844, 1
        %v2846 = vrot.slane %v2720, 1
        %v2847 = vsel %vm894, %v2845, %v2846
        %v2848 = vrot.slane %v2721, 1
        %v2849 = vsel %vm894, %v2846, %v2848
        %v2869 = vunpack.c.l.b16 %v2826
        %v2870 = vunpack.c.l.b16 %v2827
        %v2871 = vunpack.c.l.b16 %v2828
        %v2872 = vunpack.c.l.b16 %v2829
        %v2873 = vunpack.c.l.b16 %v2830
        %v2874 = vunpack.c.l.b16 %v2831
        %v2875 = vunpack.c.l.b16 %v2832
        %v2876 = vunpack.c.l.b16 %v2833
        %v2877 = vunpack.c.l.b16 %v2834
        %v2878 = vunpack.c.l.b16 %v2835
        %v2879 = vunpack.c.l.b16 %v2836
        %v2880 = vunpack.c.l.b16 %v2837
        %v2881 = vunpack.c.l.b16 %v2838
        %v2882 = vunpack.c.l.b16 %v2839
        %v2883 = vunpack.c.l.b16 %v2840
        %v2884 = vunpack.c.l.b16 %v2841
        %v2885 = vpack.c.b16 %v2870, %v2869
        %v2886 = vpack.c.b16 %v2872, %v2871
        %v2887 = vpack.c.b16 %v2874, %v2873
        %v2888 = vpack.c.b16 %v2876, %v2875
        %v2889 = vpack.c.b16 %v2878, %v2877
        %v2890 = vpack.c.b16 %v2880, %v2879
        %v2891 = vpack.c.b16 %v2882, %v2881
        %v2892 = vpack.c.b16 %v2884, %v2883
        %2901 = vmatpush.bf16.msra.mxu0 %v2892
        %2902 = vmatpush.bf16.msra.mxu0 %v2891
        %2903 = vmatpush.bf16.msra.mxu0 %v2890
        %2904 = vmatpush.bf16.msra.mxu0 %v2889
        %2905 = vmatpush.bf16.msra.mxu0 %v2888
        %2906 = vmatpush.bf16.msra.mxu0 %v2887
        %2907 = vmatpush.bf16.msra.mxu0 %v2886
        %2908 = vmatpush.bf16.msra.mxu0 %v2885
        %2909 = vmatmul.bf16.gmra.mxu0 %v2847
        %v2910 = vpop.f32.mrf.mxu0
        %v2911 = vadd.f32 0.0, %v2910
        %v2912 = vpop.f32.mrf.mxu0
        %v2913 = vadd.f32 0.0, %v2912
        %2914 = vmatmul.bf16.gmra.mxu0 %v2849
        %v2915 = vpop.f32.mrf.mxu0
        %v2916 = vadd.f32 0.0, %v2915
        %v2917 = vpop.f32.mrf.mxu0
        %v2918 = vadd.f32 0.0, %v2917
        %2919 = vmatmul.bf16.gmra.mxu0 %v2848
        %v2920 = vpop.f32.mrf.mxu0
        %v2921 = vadd.f32 0.0, %v2920
        %v2922 = vpop.f32.mrf.mxu0
        %2923 = vdwg.mxu0
        %v2924 = vadd.f32 %v2819, %v2911
        %v2925 = vadd.f32 %v2820, %v2913
        %v2926 = vadd.f32 %v2821, %v2916
        %v2927 = vadd.f32 %v2822, %v2918
        %v2928 = vadd.f32 %v2823, %v2921
        %s2929 = scalar_lea.vmem [#allocation11], 3
        %v2930 = vld [vmem:[%s2929] sm:$0x1]
        %v2932 = vperm.slane %v2930, 0
        %v2934 = vadd.f32 %v2924, %v2932
        %v2935 = vadd.f32 %v2925, %v2932
        %v2936 = vadd.f32 %v2926, %v2932
        %v2937 = vadd.f32 %v2927, %v2932
        %v2938 = vadd.f32 %v2928, %v2932
        %v2939 = vadd.f32 %v2934, %v2302
        %v2940 = vadd.f32 %v2935, %v2303
        %v2941 = vadd.f32 %v2936, %v2304
        %v2942 = vadd.f32 %v2937, %v2305
        %v2943 = vadd.f32 %v2938, %v2306
        %v2944 = vmul.f32 %v2939, %v333
        %v2945 = vmul.f32 %v2940, %v334
        %v2946 = vmul.f32 %v2941, %v335
        %v2947 = vmul.f32 %v2942, %v336
        %v2948 = vmul.f32 %v2943, %v337
        %2949 = vst [vmem:[#allocation4] sm:$0xff] %v2944
        %2950 = vst [vmem:[#allocation4 + $0x8] sm:$0xff] %v2945
        %2951 = vst [vmem:[#allocation4 + $0x10] sm:$0xff] %v2946
        %2952 = vst [vmem:[#allocation4 + $0x18] sm:$0xff] %v2947
        %2953 = vst [vmem:[#allocation4 + $0x20] sm:$0xff] %v2948
        %v2954 = vld [vmem:[#allocation4] sm:$0xff]
        %v2955 = vld [vmem:[#allocation4 + $0x8] sm:$0xff]
        %v2956 = vld [vmem:[#allocation4 + $0x10] sm:$0xff]
        %v2957 = vld [vmem:[#allocation4 + $0x18] sm:$0xff]
        %v2958 = vld [vmem:[#allocation4 + $0x20] sm:$0xff]
        %s2959 = scalar_lea.vmem [#allocation13], 4
        %v2960 = vld [vmem:[%s2959] sm:$0x1]
        %v2962 = vperm.slane %v2960, 0
        %v2964 = vmul.f32 %v2954, %v2962
        %v2965 = vmul.f32 %v2955, %v2962
        %v2966 = vmul.f32 %v2956, %v2962
        %v2967 = vmul.f32 %v2957, %v2962
        %v2968 = vmul.f32 %v2958, %v2962
        %s2969 = scalar_lea.vmem [#allocation14], 4
        %v2970 = vld [vmem:[%s2969] sm:$0x1]
        %v2972 = vperm.slane %v2970, 0
        %v2974 = vadd.f32 %v2964, %v2972
        %v2975 = vadd.f32 %v2965, %v2972
        %v2976 = vadd.f32 %v2966, %v2972
        %v2977 = vadd.f32 %v2967, %v2972
        %v2978 = vadd.f32 %v2968, %v2972
        %v2979 = vtanh.pop %v2974
        %v2980 = vtanh.pop %v2975
        %v2981 = vtanh.pop %v2976
        %v2982 = vtanh.pop %v2977
        %v2983 = vtanh.pop %v2978
        %v2984 = vmul.f32 %v2979, %v343
        %v2985 = vmul.f32 %v2980, %v344
        %v2986 = vmul.f32 %v2981, %v345
        %v2987 = vmul.f32 %v2982, %v346
        %v2988 = vmul.f32 %v2983, %v347
        %v2989 = vpack.c.bf16 %v2984, %v2984
        %v2990 = vpack.c.bf16 %v2985, %v2985
        %v2991 = vpack.c.bf16 %v2986, %v2986
        %v2992 = vpack.c.bf16 %v2987, %v2987
        %v2993 = vpack.c.bf16 %v2988, %v2988
        %2994 = vst [vmem:[#allocation3 + $0x4] sm:$0xf] %v2989
        %2995 = vst [vmem:[#allocation3 + $0x8] sm:$0xf] %v2990
        %2996 = vst [vmem:[#allocation3 + $0xc] sm:$0xf] %v2991
        %2997 = vst [vmem:[#allocation3 + $0x10] sm:$0xf] %v2992
        %2998 = vst [vmem:[#allocation3 + $0x14] sm:$0xf] %v2993
        %v2999 = vld [vmem:[#allocation3] sm:$0x8]
        %v3000 = vld [vmem:[#allocation3 + $0x4] sm:$0xf]
        %v3001 = vld [vmem:[#allocation3 + $0x8] sm:$0xf]
        %v3002 = vld [vmem:[#allocation3 + $0xc] sm:$0xf]
        %v3003 = vld [vmem:[#allocation3 + $0x10] sm:$0xf]
        %v3004 = vld [vmem:[#allocation3 + $0x14] sm:$0x7]
        %s3005 = scalar_lea.vmem [#allocation8], 1280
        %v3006 = vld [vmem:[%s3005] sm:$0xf]
        %v3007 = vld [vmem:[%s3005 + $0x4] sm:$0xf]
        %v3008 = vld [vmem:[%s3005 + $0x8] sm:$0xf]
        %v3009 = vld [vmem:[%s3005 + $0xc] sm:$0xf]
        %v3010 = vld [vmem:[%s3005 + $0x10] sm:$0xf]
        %v3011 = vld [vmem:[%s3005 + $0x14] sm:$0xf]
        %v3012 = vld [vmem:[%s3005 + $0x18] sm:$0xf]
        %v3013 = vld [vmem:[%s3005 + $0x1c] sm:$0xf]
        %v3014 = vld [vmem:[%s3005 + $0x20] sm:$0xf]
        %v3015 = vld [vmem:[%s3005 + $0x24] sm:$0xf]
        %v3016 = vld [vmem:[%s3005 + $0x28] sm:$0xf]
        %v3017 = vld [vmem:[%s3005 + $0x2c] sm:$0xf]
        %v3018 = vld [vmem:[%s3005 + $0x30] sm:$0xf]
        %v3019 = vld [vmem:[%s3005 + $0x34] sm:$0xf]
        %v3020 = vld [vmem:[%s3005 + $0x38] sm:$0xf]
        %v3021 = vld [vmem:[%s3005 + $0x3c] sm:$0xf]
        %v3022 = vld [vmem:[#allocation3 + $0x14] sm:$0xf]
        %s3023 = scalar_lea.vmem [#allocation8], 1344
        %v3024 = vld [vmem:[%s3023] sm:$0xf]
        %v3025 = vld [vmem:[%s3023 + $0x4] sm:$0xf]
        %v3026 = vld [vmem:[%s3023 + $0x8] sm:$0xf]
        %v3027 = vld [vmem:[%s3023 + $0xc] sm:$0xf]
        %v3028 = vld [vmem:[%s3023 + $0x10] sm:$0xf]
        %v3029 = vld [vmem:[%s3023 + $0x14] sm:$0xf]
        %v3030 = vld [vmem:[%s3023 + $0x18] sm:$0xf]
        %v3031 = vld [vmem:[%s3023 + $0x1c] sm:$0xf]
        %v3032 = vld [vmem:[%s3023 + $0x20] sm:$0xf]
        %v3033 = vld [vmem:[%s3023 + $0x24] sm:$0xf]
        %v3034 = vld [vmem:[%s3023 + $0x28] sm:$0xf]
        %v3035 = vld [vmem:[%s3023 + $0x2c] sm:$0xf]
        %v3036 = vld [vmem:[%s3023 + $0x30] sm:$0xf]
        %v3037 = vld [vmem:[%s3023 + $0x34] sm:$0xf]
        %v3038 = vld [vmem:[%s3023 + $0x38] sm:$0xf]
        %v3039 = vld [vmem:[%s3023 + $0x3c] sm:$0xf]
        %v3046 = vunpack.c.l.b16 %v2999
        %v3047 = vunpack.c.l.b16 %v3000
        %v3048 = vunpack.c.l.b16 %v3001
        %v3049 = vunpack.c.l.b16 %v3002
        %v3050 = vunpack.c.l.b16 %v3003
        %v3051 = vunpack.c.l.b16 %v3022
        %v3052 = vpack.c.b16 %v3047, %v3046
        %v3053 = vpack.c.b16 %v3049, %v3048
        %v3054 = vpack.c.b16 %v3051, %v3050
        %v3056 = vshrl.u32 %v3052, 16
        %v3058 = vrot.slane %v3056, 3
        %v3059 = vshll.u32 %v3052, 16
        %v3061 = vrot.slane %v3059, 4
        %v3062 = vor.u32 %v3058, %v3061
        %v3064 = vshrl.u32 %v3053, 16
        %v3066 = vrot.slane %v3064, 3
        %v3067 = vshll.u32 %v3053, 16
        %v3069 = vrot.slane %v3067, 4
        %v3070 = vor.u32 %v3066, %v3069
        %v3071 = vsel %vm449, %v3062, %v3070
        %v3073 = vshrl.u32 %v3054, 16
        %v3075 = vrot.slane %v3073, 3
        %v3076 = vshll.u32 %v3054, 16
        %v3078 = vrot.slane %v3076, 4
        %v3079 = vor.u32 %v3075, %v3078
        %v3080 = vsel %vm449, %v3070, %v3079
        %v3100 = vunpack.c.l.b16 %v3024
        %v3101 = vunpack.c.l.b16 %v3025
        %v3102 = vunpack.c.l.b16 %v3026
        %v3103 = vunpack.c.l.b16 %v3027
        %v3104 = vunpack.c.l.b16 %v3028
        %v3105 = vunpack.c.l.b16 %v3029
        %v3106 = vunpack.c.l.b16 %v3030
        %v3107 = vunpack.c.l.b16 %v3031
        %v3108 = vunpack.c.l.b16 %v3032
        %v3109 = vunpack.c.l.b16 %v3033
        %v3110 = vunpack.c.l.b16 %v3034
        %v3111 = vunpack.c.l.b16 %v3035
        %v3112 = vunpack.c.l.b16 %v3036
        %v3113 = vunpack.c.l.b16 %v3037
        %v3114 = vunpack.c.l.b16 %v3038
        %v3115 = vunpack.c.l.b16 %v3039
        %v3116 = vpack.c.b16 %v3101, %v3100
        %v3117 = vpack.c.b16 %v3103, %v3102
        %v3118 = vpack.c.b16 %v3105, %v3104
        %v3119 = vpack.c.b16 %v3107, %v3106
        %v3120 = vpack.c.b16 %v3109, %v3108
        %v3121 = vpack.c.b16 %v3111, %v3110
        %v3122 = vpack.c.b16 %v3113, %v3112
        %v3123 = vpack.c.b16 %v3115, %v3114
        %3132 = vmatpush.bf16.msra.mxu0 %v3123
        %3133 = vmatpush.bf16.msra.mxu0 %v3122
        %3134 = vmatpush.bf16.msra.mxu0 %v3121
        %3135 = vmatpush.bf16.msra.mxu0 %v3120
        %3136 = vmatpush.bf16.msra.mxu0 %v3119
        %3137 = vmatpush.bf16.msra.mxu0 %v3118
        %3138 = vmatpush.bf16.msra.mxu0 %v3117
        %3139 = vmatpush.bf16.msra.mxu0 %v3116
        %3140 = vmatmul.bf16.gmra.mxu0 %v3071
        %v3141 = vpop.f32.mrf.mxu0
        %v3142 = vadd.f32 0.0, %v3141
        %v3143 = vpop.f32.mrf.mxu0
        %v3144 = vadd.f32 0.0, %v3143
        %3145 = vmatmul.bf16.gmra.mxu0 %v3080
        %v3146 = vpop.f32.mrf.mxu0
        %v3147 = vadd.f32 0.0, %v3146
        %v3148 = vpop.f32.mrf.mxu0
        %v3149 = vadd.f32 0.0, %v3148
        %3150 = vmatmul.bf16.gmra.mxu0 %v3079
        %v3151 = vpop.f32.mrf.mxu0
        %v3152 = vadd.f32 0.0, %v3151
        %v3153 = vpop.f32.mrf.mxu0
        %3154 = vdwg.mxu0
        %v3156 = vunpack.c.l.b16 %v3004
        %v3157 = vpack.c.b16 %v3156, %v3050
        %v3158 = vrot.slane %v3052, 3
        %v3159 = vrot.slane %v3053, 3
        %v3160 = vsel %vm553, %v3158, %v3159
        %v3161 = vrot.slane %v3157, 3
        %v3162 = vsel %vm553, %v3159, %v3161
        %v3182 = vunpack.c.l.b16 %v3006
        %v3183 = vunpack.c.l.b16 %v3007
        %v3184 = vunpack.c.l.b16 %v3008
        %v3185 = vunpack.c.l.b16 %v3009
        %v3186 = vunpack.c.l.b16 %v3010
        %v3187 = vunpack.c.l.b16 %v3011
        %v3188 = vunpack.c.l.b16 %v3012
        %v3189 = vunpack.c.l.b16 %v3013
        %v3190 = vunpack.c.l.b16 %v3014
        %v3191 = vunpack.c.l.b16 %v3015
        %v3192 = vunpack.c.l.b16 %v3016
        %v3193 = vunpack.c.l.b16 %v3017
        %v3194 = vunpack.c.l.b16 %v3018
        %v3195 = vunpack.c.l.b16 %v3019
        %v3196 = vunpack.c.l.b16 %v3020
        %v3197 = vunpack.c.l.b16 %v3021
        %v3198 = vpack.c.b16 %v3183, %v3182
        %v3199 = vpack.c.b16 %v3185, %v3184
        %v3200 = vpack.c.b16 %v3187, %v3186
        %v3201 = vpack.c.b16 %v3189, %v3188
        %v3202 = vpack.c.b16 %v3191, %v3190
        %v3203 = vpack.c.b16 %v3193, %v3192
        %v3204 = vpack.c.b16 %v3195, %v3194
        %v3205 = vpack.c.b16 %v3197, %v3196
        %3214 = vmatpush.bf16.msra.mxu0 %v3205
        %3215 = vmatpush.bf16.msra.mxu0 %v3204
        %3216 = vmatpush.bf16.msra.mxu0 %v3203
        %3217 = vmatpush.bf16.msra.mxu0 %v3202
        %3218 = vmatpush.bf16.msra.mxu0 %v3201
        %3219 = vmatpush.bf16.msra.mxu0 %v3200
        %3220 = vmatpush.bf16.msra.mxu0 %v3199
        %3221 = vmatpush.bf16.msra.mxu0 %v3198
        %3222 = vmatmul.bf16.gmra.mxu0 %v3160
        %v3223 = vpop.f32.mrf.mxu0
        %v3224 = vadd.f32 %v3142, %v3223
        %v3225 = vpop.f32.mrf.mxu0
        %v3226 = vadd.f32 %v3144, %v3225
        %3227 = vmatmul.bf16.gmra.mxu0 %v3162
        %v3228 = vpop.f32.mrf.mxu0
        %v3229 = vadd.f32 %v3147, %v3228
        %v3230 = vpop.f32.mrf.mxu0
        %v3231 = vadd.f32 %v3149, %v3230
        %3232 = vmatmul.bf16.gmra.mxu0 %v3161
        %v3233 = vpop.f32.mrf.mxu0
        %v3234 = vadd.f32 %v3152, %v3233
        %v3235 = vpop.f32.mrf.mxu0
        %3236 = vdwg.mxu0
        %s3237 = scalar_lea.vmem [#allocation8], 1408
        %v3238 = vld [vmem:[%s3237] sm:$0xf]
        %v3239 = vld [vmem:[%s3237 + $0x4] sm:$0xf]
        %v3240 = vld [vmem:[%s3237 + $0x8] sm:$0xf]
        %v3241 = vld [vmem:[%s3237 + $0xc] sm:$0xf]
        %v3242 = vld [vmem:[%s3237 + $0x10] sm:$0xf]
        %v3243 = vld [vmem:[%s3237 + $0x14] sm:$0xf]
        %v3244 = vld [vmem:[%s3237 + $0x18] sm:$0xf]
        %v3245 = vld [vmem:[%s3237 + $0x1c] sm:$0xf]
        %v3246 = vld [vmem:[%s3237 + $0x20] sm:$0xf]
        %v3247 = vld [vmem:[%s3237 + $0x24] sm:$0xf]
        %v3248 = vld [vmem:[%s3237 + $0x28] sm:$0xf]
        %v3249 = vld [vmem:[%s3237 + $0x2c] sm:$0xf]
        %v3250 = vld [vmem:[%s3237 + $0x30] sm:$0xf]
        %v3251 = vld [vmem:[%s3237 + $0x34] sm:$0xf]
        %v3252 = vld [vmem:[%s3237 + $0x38] sm:$0xf]
        %v3253 = vld [vmem:[%s3237 + $0x3c] sm:$0xf]
        %v3254 = vpack.c.b16 %v3048, %v3047
        %v3255 = vpack.c.b16 %v3050, %v3049
        %v3256 = vpack.c.b16 %v3051, %v3051
        %v3276 = vunpack.c.l.b16 %v3238
        %v3277 = vunpack.c.l.b16 %v3239
        %v3278 = vunpack.c.l.b16 %v3240
        %v3279 = vunpack.c.l.b16 %v3241
        %v3280 = vunpack.c.l.b16 %v3242
        %v3281 = vunpack.c.l.b16 %v3243
        %v3282 = vunpack.c.l.b16 %v3244
        %v3283 = vunpack.c.l.b16 %v3245
        %v3284 = vunpack.c.l.b16 %v3246
        %v3285 = vunpack.c.l.b16 %v3247
        %v3286 = vunpack.c.l.b16 %v3248
        %v3287 = vunpack.c.l.b16 %v3249
        %v3288 = vunpack.c.l.b16 %v3250
        %v3289 = vunpack.c.l.b16 %v3251
        %v3290 = vunpack.c.l.b16 %v3252
        %v3291 = vunpack.c.l.b16 %v3253
        %v3292 = vpack.c.b16 %v3277, %v3276
        %v3293 = vpack.c.b16 %v3279, %v3278
        %v3294 = vpack.c.b16 %v3281, %v3280
        %v3295 = vpack.c.b16 %v3283, %v3282
        %v3296 = vpack.c.b16 %v3285, %v3284
        %v3297 = vpack.c.b16 %v3287, %v3286
        %v3298 = vpack.c.b16 %v3289, %v3288
        %v3299 = vpack.c.b16 %v3291, %v3290
        %3308 = vmatpush.bf16.msra.mxu0 %v3299
        %3309 = vmatpush.bf16.msra.mxu0 %v3298
        %3310 = vmatpush.bf16.msra.mxu0 %v3297
        %3311 = vmatpush.bf16.msra.mxu0 %v3296
        %3312 = vmatpush.bf16.msra.mxu0 %v3295
        %3313 = vmatpush.bf16.msra.mxu0 %v3294
        %3314 = vmatpush.bf16.msra.mxu0 %v3293
        %3315 = vmatpush.bf16.msra.mxu0 %v3292
        %3316 = vmatmul.bf16.gmra.mxu0 %v3254
        %v3317 = vpop.f32.mrf.mxu0
        %v3318 = vadd.f32 0.0, %v3317
        %v3319 = vpop.f32.mrf.mxu0
        %v3320 = vadd.f32 0.0, %v3319
        %3321 = vmatmul.bf16.gmra.mxu0 %v3255
        %v3322 = vpop.f32.mrf.mxu0
        %v3323 = vadd.f32 0.0, %v3322
        %v3324 = vpop.f32.mrf.mxu0
        %v3325 = vadd.f32 0.0, %v3324
        %3326 = vmatmul.bf16.gmra.mxu0 %v3256
        %v3327 = vpop.f32.mrf.mxu0
        %v3328 = vadd.f32 0.0, %v3327
        %v3329 = vpop.f32.mrf.mxu0
        %3330 = vdwg.mxu0
        %v3331 = vadd.f32 %v3224, %v3318
        %v3332 = vadd.f32 %v3226, %v3320
        %v3333 = vadd.f32 %v3229, %v3323
        %v3334 = vadd.f32 %v3231, %v3325
        %v3335 = vadd.f32 %v3234, %v3328
        %v3336 = vld [vmem:[#allocation3 + $0x4] sm:$0xf]
        %v3337 = vld [vmem:[#allocation3 + $0x8] sm:$0xf]
        %v3338 = vld [vmem:[#allocation3 + $0xc] sm:$0xf]
        %v3339 = vld [vmem:[#allocation3 + $0x10] sm:$0xf]
        %v3340 = vld [vmem:[#allocation3 + $0x14] sm:$0xf]
        %v3341 = vld [vmem:[#allocation3 + $0x18] sm:$0x1]
        %s3342 = scalar_lea.vmem [#allocation8], 1472
        %v3343 = vld [vmem:[%s3342] sm:$0xf]
        %v3344 = vld [vmem:[%s3342 + $0x4] sm:$0xf]
        %v3345 = vld [vmem:[%s3342 + $0x8] sm:$0xf]
        %v3346 = vld [vmem:[%s3342 + $0xc] sm:$0xf]
        %v3347 = vld [vmem:[%s3342 + $0x10] sm:$0xf]
        %v3348 = vld [vmem:[%s3342 + $0x14] sm:$0xf]
        %v3349 = vld [vmem:[%s3342 + $0x18] sm:$0xf]
        %v3350 = vld [vmem:[%s3342 + $0x1c] sm:$0xf]
        %v3351 = vld [vmem:[%s3342 + $0x20] sm:$0xf]
        %v3352 = vld [vmem:[%s3342 + $0x24] sm:$0xf]
        %v3353 = vld [vmem:[%s3342 + $0x28] sm:$0xf]
        %v3354 = vld [vmem:[%s3342 + $0x2c] sm:$0xf]
        %v3355 = vld [vmem:[%s3342 + $0x30] sm:$0xf]
        %v3356 = vld [vmem:[%s3342 + $0x34] sm:$0xf]
        %v3357 = vld [vmem:[%s3342 + $0x38] sm:$0xf]
        %v3358 = vld [vmem:[%s3342 + $0x3c] sm:$0xf]
        %v3365 = vunpack.c.l.b16 %v3336
        %v3366 = vunpack.c.l.b16 %v3337
        %v3367 = vunpack.c.l.b16 %v3338
        %v3368 = vunpack.c.l.b16 %v3339
        %v3369 = vunpack.c.l.b16 %v3340
        %v3370 = vunpack.c.l.b16 %v3341
        %v3371 = vpack.c.b16 %v3366, %v3365
        %v3372 = vpack.c.b16 %v3368, %v3367
        %v3373 = vpack.c.b16 %v3370, %v3369
        %v3375 = vshrl.u32 %v3371, 16
        %v3377 = vshll.u32 %v3371, 16
        %v3379 = vrot.slane %v3377, 1
        %v3380 = vor.u32 %v3375, %v3379
        %v3382 = vshll.u32 %v3372, 16
        %v3384 = vrot.slane %v3382, 1
        %v3385 = vsel %vm770, %v3380, %v3384
        %v3386 = vshrl.u32 %v3372, 16
        %v3388 = vor.u32 %v3386, %v3384
        %v3390 = vshll.u32 %v3373, 16
        %v3392 = vrot.slane %v3390, 1
        %v3393 = vsel %vm770, %v3388, %v3392
        %v3394 = vshrl.u32 %v3373, 16
        %v3396 = vor.u32 %v3394, %v3392
        %v3416 = vunpack.c.l.b16 %v3343
        %v3417 = vunpack.c.l.b16 %v3344
        %v3418 = vunpack.c.l.b16 %v3345
        %v3419 = vunpack.c.l.b16 %v3346
        %v3420 = vunpack.c.l.b16 %v3347
        %v3421 = vunpack.c.l.b16 %v3348
        %v3422 = vunpack.c.l.b16 %v3349
        %v3423 = vunpack.c.l.b16 %v3350
        %v3424 = vunpack.c.l.b16 %v3351
        %v3425 = vunpack.c.l.b16 %v3352
        %v3426 = vunpack.c.l.b16 %v3353
        %v3427 = vunpack.c.l.b16 %v3354
        %v3428 = vunpack.c.l.b16 %v3355
        %v3429 = vunpack.c.l.b16 %v3356
        %v3430 = vunpack.c.l.b16 %v3357
        %v3431 = vunpack.c.l.b16 %v3358
        %v3432 = vpack.c.b16 %v3417, %v3416
        %v3433 = vpack.c.b16 %v3419, %v3418
        %v3434 = vpack.c.b16 %v3421, %v3420
        %v3435 = vpack.c.b16 %v3423, %v3422
        %v3436 = vpack.c.b16 %v3425, %v3424
        %v3437 = vpack.c.b16 %v3427, %v3426
        %v3438 = vpack.c.b16 %v3429, %v3428
        %v3439 = vpack.c.b16 %v3431, %v3430
        %3448 = vmatpush.bf16.msra.mxu0 %v3439
        %3449 = vmatpush.bf16.msra.mxu0 %v3438
        %3450 = vmatpush.bf16.msra.mxu0 %v3437
        %3451 = vmatpush.bf16.msra.mxu0 %v3436
        %3452 = vmatpush.bf16.msra.mxu0 %v3435
        %3453 = vmatpush.bf16.msra.mxu0 %v3434
        %3454 = vmatpush.bf16.msra.mxu0 %v3433
        %3455 = vmatpush.bf16.msra.mxu0 %v3432
        %3456 = vmatmul.bf16.gmra.mxu0 %v3385
        %v3457 = vpop.f32.mrf.mxu0
        %v3458 = vadd.f32 0.0, %v3457
        %v3459 = vpop.f32.mrf.mxu0
        %v3460 = vadd.f32 0.0, %v3459
        %3461 = vmatmul.bf16.gmra.mxu0 %v3393
        %v3462 = vpop.f32.mrf.mxu0
        %v3463 = vadd.f32 0.0, %v3462
        %v3464 = vpop.f32.mrf.mxu0
        %v3465 = vadd.f32 0.0, %v3464
        %3466 = vmatmul.bf16.gmra.mxu0 %v3396
        %v3467 = vpop.f32.mrf.mxu0
        %v3468 = vadd.f32 0.0, %v3467
        %v3469 = vpop.f32.mrf.mxu0
        %3470 = vdwg.mxu0
        %v3471 = vadd.f32 %v3331, %v3458
        %v3472 = vadd.f32 %v3332, %v3460
        %v3473 = vadd.f32 %v3333, %v3463
        %v3474 = vadd.f32 %v3334, %v3465
        %v3475 = vadd.f32 %v3335, %v3468
        %v3476 = vld [vmem:[#allocation3 + $0x4] sm:$0xe]
        %s3477 = scalar_lea.vmem [#allocation8], 1536
        %v3478 = vld [vmem:[%s3477] sm:$0xf]
        %v3479 = vld [vmem:[%s3477 + $0x4] sm:$0xf]
        %v3480 = vld [vmem:[%s3477 + $0x8] sm:$0xf]
        %v3481 = vld [vmem:[%s3477 + $0xc] sm:$0xf]
        %v3482 = vld [vmem:[%s3477 + $0x10] sm:$0xf]
        %v3483 = vld [vmem:[%s3477 + $0x14] sm:$0xf]
        %v3484 = vld [vmem:[%s3477 + $0x18] sm:$0xf]
        %v3485 = vld [vmem:[%s3477 + $0x1c] sm:$0xf]
        %v3486 = vld [vmem:[%s3477 + $0x20] sm:$0xf]
        %v3487 = vld [vmem:[%s3477 + $0x24] sm:$0xf]
        %v3488 = vld [vmem:[%s3477 + $0x28] sm:$0xf]
        %v3489 = vld [vmem:[%s3477 + $0x2c] sm:$0xf]
        %v3490 = vld [vmem:[%s3477 + $0x30] sm:$0xf]
        %v3491 = vld [vmem:[%s3477 + $0x34] sm:$0xf]
        %v3492 = vld [vmem:[%s3477 + $0x38] sm:$0xf]
        %v3493 = vld [vmem:[%s3477 + $0x3c] sm:$0xf]
        %v3495 = vunpack.c.l.b16 %v3476
        %v3496 = vpack.c.b16 %v3366, %v3495
        %v3497 = vrot.slane %v3496, 1
        %v3498 = vrot.slane %v3372, 1
        %v3499 = vsel %vm894, %v3497, %v3498
        %v3500 = vrot.slane %v3373, 1
        %v3501 = vsel %vm894, %v3498, %v3500
        %v3521 = vunpack.c.l.b16 %v3478
        %v3522 = vunpack.c.l.b16 %v3479
        %v3523 = vunpack.c.l.b16 %v3480
        %v3524 = vunpack.c.l.b16 %v3481
        %v3525 = vunpack.c.l.b16 %v3482
        %v3526 = vunpack.c.l.b16 %v3483
        %v3527 = vunpack.c.l.b16 %v3484
        %v3528 = vunpack.c.l.b16 %v3485
        %v3529 = vunpack.c.l.b16 %v3486
        %v3530 = vunpack.c.l.b16 %v3487
        %v3531 = vunpack.c.l.b16 %v3488
        %v3532 = vunpack.c.l.b16 %v3489
        %v3533 = vunpack.c.l.b16 %v3490
        %v3534 = vunpack.c.l.b16 %v3491
        %v3535 = vunpack.c.l.b16 %v3492
        %v3536 = vunpack.c.l.b16 %v3493
        %v3537 = vpack.c.b16 %v3522, %v3521
        %v3538 = vpack.c.b16 %v3524, %v3523
        %v3539 = vpack.c.b16 %v3526, %v3525
        %v3540 = vpack.c.b16 %v3528, %v3527
        %v3541 = vpack.c.b16 %v3530, %v3529
        %v3542 = vpack.c.b16 %v3532, %v3531
        %v3543 = vpack.c.b16 %v3534, %v3533
        %v3544 = vpack.c.b16 %v3536, %v3535
        %3553 = vmatpush.bf16.msra.mxu0 %v3544
        %3554 = vmatpush.bf16.msra.mxu0 %v3543
        %3555 = vmatpush.bf16.msra.mxu0 %v3542
        %3556 = vmatpush.bf16.msra.mxu0 %v3541
        %3557 = vmatpush.bf16.msra.mxu0 %v3540
        %3558 = vmatpush.bf16.msra.mxu0 %v3539
        %3559 = vmatpush.bf16.msra.mxu0 %v3538
        %3560 = vmatpush.bf16.msra.mxu0 %v3537
        %3561 = vmatmul.bf16.gmra.mxu0 %v3499
        %v3562 = vpop.f32.mrf.mxu0
        %v3563 = vadd.f32 0.0, %v3562
        %v3564 = vpop.f32.mrf.mxu0
        %v3565 = vadd.f32 0.0, %v3564
        %3566 = vmatmul.bf16.gmra.mxu0 %v3501
        %v3567 = vpop.f32.mrf.mxu0
        %v3568 = vadd.f32 0.0, %v3567
        %v3569 = vpop.f32.mrf.mxu0
        %v3570 = vadd.f32 0.0, %v3569
        %3571 = vmatmul.bf16.gmra.mxu0 %v3500
        %v3572 = vpop.f32.mrf.mxu0
        %v3573 = vadd.f32 0.0, %v3572
        %v3574 = vpop.f32.mrf.mxu0
        %3575 = vdwg.mxu0
        %v3576 = vadd.f32 %v3471, %v3563
        %v3577 = vadd.f32 %v3472, %v3565
        %v3578 = vadd.f32 %v3473, %v3568
        %v3579 = vadd.f32 %v3474, %v3570
        %v3580 = vadd.f32 %v3475, %v3573
        %s3581 = scalar_lea.vmem [#allocation11], 4
        %v3582 = vld [vmem:[%s3581] sm:$0x1]
        %v3584 = vperm.slane %v3582, 0
        %v3586 = vadd.f32 %v3576, %v3584
        %v3587 = vadd.f32 %v3577, %v3584
        %v3588 = vadd.f32 %v3578, %v3584
        %v3589 = vadd.f32 %v3579, %v3584
        %v3590 = vadd.f32 %v3580, %v3584
        %v3591 = vmul.f32 %v3586, %v333
        %v3592 = vmul.f32 %v3587, %v334
        %v3593 = vmul.f32 %v3588, %v335
        %v3594 = vmul.f32 %v3589, %v336
        %v3595 = vmul.f32 %v3590, %v337
        %3596 = vst [vmem:[#allocation4] sm:$0xff] %v3591
        %3597 = vst [vmem:[#allocation4 + $0x8] sm:$0xff] %v3592
        %3598 = vst [vmem:[#allocation4 + $0x10] sm:$0xff] %v3593
        %3599 = vst [vmem:[#allocation4 + $0x18] sm:$0xff] %v3594
        %3600 = vst [vmem:[#allocation4 + $0x20] sm:$0xff] %v3595
        %v3601 = vld [vmem:[#allocation4 + $0x10] sm:$0xff]
        %3602 = vst [vmem:[%s266] sm:$0xff] %v3601
        %s3603 = sand.u32 %s137, 1
        %s3604 = scalar_lea.sflag [#allocation10], %s3603
        %s3605 = sand.u32 %s137, 1
        %s3606 = smul.addr %s3605, 8
        %s3607 = scalar_lea.vmem [#allocation16], %s3606
        // Predicated region
        $region57: #{tpu_custom_call.1} parent=35 // pred_check
          %p3608 = pneg %p147
        $region58: #{tpu_custom_call.1} parent=35 // pred_check_branch
          %3610 = sbr.rel (%p3608) target = $region60
        $region59: #{tpu_custom_call.1} parent=35 // pred_region
          %3612 = vsyncadd %s3604, 0
          %s3613 = smul.addr %s35, 2
          %s3614 = sadd.s32 %s36, %s3613
          %s3615 = smul.addr %s3614, 8
          %s3616 = scalar_lea.hbm %s6, %s3615
          %s3618 = sshll.u32 %s3607, 4
          %s3619 = int_to_ptr.vmem [resolvable:$true] %s3618
          %s3620 = sshll.u32 %s3616, 4
          %s3621 = int_to_ptr.hbm [resolvable:$true] %s3620
          %3623 = dma.vmem_to_hbm [thread:$0]  %s3619, 128, %s3621, %s3604
        $region60: #{tpu_custom_call.1} parent=35 // pred_fallthru
          _
      $region36: #{tpu_custom_call.1} parent=5 // pred_fallthru
        _
      %p3624 = scmp.le.s32.totalorder 2, %s26
      // Predicated region
      $region61: #{tpu_custom_call.1} parent=5 // pred_check
        %p3625 = pneg %p3624
      $region62: #{tpu_custom_call.1} parent=5 // pred_check_branch
        %3627 = sbr.rel (%p3625) target = $region64
      $region63: #{tpu_custom_call.1} parent=5 // pred_region
        %s3628 = ssub.s32 %s26, 2
        // Predicated region
        $region65: #{tpu_custom_call.1} parent=63 // pred_check
          %p3629 = pneg %p153
        $region66: #{tpu_custom_call.1} parent=63 // pred_check_branch
          %3631 = sbr.rel (%p3629) target = $region68
        $region67: #{tpu_custom_call.1} parent=63 // pred_region
          %s3632 = sand.u32 %s138, 1
          %s3633 = scalar_lea.sflag [#allocation10], %s3632
          %s3634 = sand.u32 %s138, 1
          %s3635 = smul.addr %s3634, 8
          %s3636 = scalar_lea.vmem [#allocation16], %s3635
          %3638 = dma.done %s3633, 128
        $region68: #{tpu_custom_call.1} parent=63 // pred_fallthru
          _
      $region64: #{tpu_custom_call.1} parent=5 // pred_fallthru
        _
    $region6: #{tpu_custom_call.1} parent=1 // loop_footer
      %s30 = sadd.s32 1, %s26
    $region7: #{tpu_custom_call.1} parent=1 // loop_footer_branch
      %25 = sbr.rel target = $region3
    $region8: #{tpu_custom_call.1} parent=1 // loop_exit
      _
    %3639 = vsyncpa [#allocation9], 1
    %s3640 = scalar_lea.sflag [#allocation9], 1
    %3641 = vsyncpa %s3640, 1
    %3642 = vsyncpa [#allocation12], 1
    %3643 = vsyncpa [#allocation15], 1
    %3644 = vsyncpa [#allocation10], 1
    %s3645 = scalar_lea.sflag [#allocation10], 1
    %3646 = vsyncpa %s3645, 1
  %3647 = vsyncmov [#allocation5]
  %s3648 = vpop.sfrf %3647
  %p3649 = scmp.eq.s32.totalorder %s3648, 0
  %p3650 = pneg %p3649
  %3652 = shalt.err (%p3650)

</llo_original>
